<compile_context>
chip_gen: v7x
topology: tpu7x:2x2x1
jax: 0.10.0
libtpu: 0.0.40
codegen_flags: <defaults>
</compile_context>

<pallas_src>
import functools

import numpy as np
import jax
import jax.numpy as jnp
from jax.experimental import pallas as pl
from jax.experimental.pallas import tpu as pltpu


# Row taps: (da, s) = (row-pair shift, row parity).  Column shifts db are the
# column-pair shifts; column parity is folded into the lane dim by the weights.
_ROW_COMBOS = ((-1, 1), (0, 0), (0, 1), (1, 0))
_DBS = (-1, 0, 1)


def _build_tap_weights(w):
    """(C//2, C, 3, 3) conv weight -> (3, 4*C2, C2) fused per-column-shift taps.

    Group g (column shift db = _DBS[g]) is the vertical concatenation, in
    _ROW_COMBOS order, of the four (C2, C2) row-tap matrices so that a single
    (N, 4*C2) @ (4*C2, C2) matmul reproduces the four row taps at that column
    shift.  Done once on the host.
    """
    w_np = np.asarray(w, dtype=np.float32)
    c_out, c_in, _, _ = w_np.shape
    c2 = 2 * c_in
    v4 = np.zeros((2, 3, 3, c2, 4 * c_out), dtype=np.float32)
    for i in range(2):
        for dh in range(3):
            p = i + dh - 1
            s = p % 2
            da = (p - s) // 2
            for j in range(2):
                for dw in range(3):
                    q = j + dw - 1
                    t = q % 2
                    db = (q - t) // 2
                    v4[s, da + 1, db + 1,
                       t * c_in:(t + 1) * c_in, (2 * i + j)::4] += w_np[:, :, dh, dw].T
    groups = []
    for db in _DBS:
        blocks = [v4[s, da + 1, db + 1] for (da, s) in _ROW_COMBOS]
        groups.append(np.concatenate(blocks, axis=0))        # (4*c2, 4*c_out)
    return jnp.asarray(np.stack(groups, axis=0))              # (3, 4*C2, C2)


def _vmem_capacity_bytes():
    try:
        return int(pltpu.get_tpu_info().vmem_capacity_bytes)
    except Exception:
        return 64 * 1024 * 1024                                # conservative (v7x)


def _downsample_kernel(x_ref, xp_ref, xn_ref, v_ref, o_ref, slab_ref, acc_ref,
                       *, precision):
    # x_ref   : (TB, TH, 2, W2, C2)   row-pair tile, column parity in the lanes
    # xp_ref  : (TB, 1, 2, W2, C2)    row-pair just above the tile (clamped)
    # xn_ref  : (TB, 1, 2, W2, C2)    row-pair just below the tile (clamped)
    # v_ref   : (3, 4*C2, C2)         fused per-column-shift tap weights
    # o_ref   : (TB, TH*W2, C2)       final 'b (h w) c' layout
    # slab_ref: (TB, TH, W2, 4*C2)    im2col slab for one column-shift group
    # acc_ref : (TB*TH*W2, C2) f32    cross-group accumulator (VMEM, not vregs)
    TB, TH, _, W2, C2 = x_ref.shape
    dt = x_ref.dtype
    r = pl.program_id(1)

    # Halo rows: parity-1 row just above the tile and parity-0 row just below.
    # At the true image top/bottom they are the conv's zero padding; scalar
    # multiply (not persistent state) so the kernel stays correct when the grid
    # is sharded across TensorCores.
    one = jnp.ones((), dt)
    zero = jnp.zeros((), dt)
    keep_top = jnp.where(r > 0, one, zero)
    keep_bot = jnp.where(r < pl.num_programs(1) - 1, one, zero)
    top = xp_ref[:, :, 1:2, :, :].reshape(TB, 1, W2, C2) * keep_top
    bot = xn_ref[:, :, 0:1, :, :].reshape(TB, 1, W2, C2) * keep_bot

    zcol = jnp.zeros((TB, TH, 1, C2), dt)        # hoisted 'same'-padding column

    for g, db in enumerate(_DBS):
        # Column-pair window for this column shift.
        if db == -1:
            cd, cs, zc, wc = slice(1, W2), slice(0, W2 - 1), slice(0, 1), W2 - 1
        elif db == 0:
            cd, cs, zc, wc = slice(0, W2), slice(0, W2), None, W2
        else:
            cd, cs, zc, wc = slice(0, W2 - 1), slice(1, W2), slice(W2 - 1, W2), W2 - 1

        # Build the im2col slab: 4 row taps concatenated along the lanes, written
        # straight from x_ref slices (no padded intermediate, no monolithic load).
        for t, (da, s) in enumerate(_ROW_COMBOS):
            L = slice(t * C2, (t + 1) * C2)
            if zc is not None:                    # image left/right edge padding
                slab_ref[:, :, zc, L] = zcol
            if da == 0:
                slab_ref[:, :, cd, L] = (
                    x_ref[:, :, s:s + 1, cs, :].reshape(TB, TH, wc, C2))
            elif da == -1:                        # parity-1 rows, one pair above
                slab_ref[:, 1:TH, cd, L] = (
                    x_ref[:, 0:TH - 1, 1:2, cs, :].reshape(TB, TH - 1, wc, C2))
                slab_ref[:, 0:1, cd, L] = top[:, :, cs, :]
            else:                                 # da == +1: parity-0, pair below
                slab_ref[:, 0:TH - 1, cd, L] = (
                    x_ref[:, 1:TH, 0:1, cs, :].reshape(TB, TH - 1, wc, C2))
                slab_ref[:, TH - 1:TH, cd, L] = bot[:, :, cs, :]

        # One K = 4*C2 MXU matmul per column shift, accumulated in VMEM f32.
        part = jnp.dot(
            slab_ref[...].reshape(TB * TH * W2, 4 * C2), v_ref[g],
            preferred_element_type=jnp.float32, precision=precision)
        if g == 0:
            acc_ref[...] = part
        else:
            acc_ref[...] += part

    o_ref[...] = acc_ref[...].reshape(TB, TH * W2, C2).astype(o_ref.dtype)


def downsample_input(x, w, *, batch_tile=1, row_tile=None,
                     precision=jax.lax.Precision.HIGHEST,
                     vmem_budget_bytes=None):
    """x: (B, H, W, C) 'b h w c'; w: (C//2, C, 3, 3). Returns (B, H*W//4, 2*C)."""
    B, H, W, C = x.shape
    assert w.shape == (C // 2, C, 3, 3), w.shape
    assert H % 2 == 0 and W % 2 == 0 and H >= 4 and W >= 4
    H2, W2, C2 = H // 2, W // 2, 2 * C
    TB = batch_tile
    assert B % TB == 0

    v = _build_tap_weights(w)                      # (3, 4*C2, C2) f32
    if x.dtype == jnp.bfloat16:
        v = v.astype(jnp.bfloat16)                 # native bf16 MXU path

    xr = x.reshape(B, H2, 2, W2, C2)               # free, memory-order preserving

    in_isz = jnp.dtype(x.dtype).itemsize
    w_bytes = int(v.size) * jnp.dtype(v.dtype).itemsize

    def step_bytes(th):
        blk = TB * th * W2 * C2
        return (2 * blk * in_isz                   # x tile (double-buffered)
                + 8 * TB * W2 * C2 * in_isz        # prev/next halo row-pairs
                + 2 * w_bytes                      # fused tap weights
                + 4 * blk * in_isz                 # im2col slab (single buffer)
                + 4 * blk                          # f32 accumulator
                + 2 * blk * in_isz)                # output tile (double-buffered)

    cap = _vmem_capacity_bytes()
    if row_tile is None:
        budget = (vmem_budget_bytes if vmem_budget_bytes is not None
                  else max(8 << 20, int(0.35 * cap)))
        cands = [d for d in range(2, H2 + 1)
                 if H2 % d == 0 and (d == H2 or (d * W2) % 8 == 0)]
        fitting = [d for d in cands if step_bytes(d) <= budget]
        TH = max(fitting) if fitting else min(cands)
    else:
        TH = int(row_tile)
        assert 2 <= TH <= H2 and H2 % TH == 0
        assert TH == H2 or (TH * W2) % 8 == 0
    n_row_tiles = H2 // TH

    n_taps = 12
    cost = pl.CostEstimate(
        flops=2 * B * H2 * W2 * n_taps * C2 * C2,
        bytes_accessed=(x.size + B * H2 * W2 * C2) * in_isz + w_bytes,
        transcendentals=0,
    )

    kernel = functools.partial(_downsample_kernel, precision=precision)

    out = pl.pallas_call(
        kernel,
        out_shape=jax.ShapeDtypeStruct((B, H2 * W2, C2), x.dtype),
        grid_spec=pltpu.PrefetchScalarGridSpec(
            num_scalar_prefetch=0,
            grid=(B // TB, n_row_tiles),
            in_specs=[
                pl.BlockSpec((TB, TH, 2, W2, C2), lambda b, r: (b, r, 0, 0, 0)),
                pl.BlockSpec((TB, 1, 2, W2, C2),
                             lambda b, r: (b, jnp.maximum(r * TH - 1, 0), 0, 0, 0)),
                pl.BlockSpec((TB, 1, 2, W2, C2),
                             lambda b, r: (b, jnp.minimum((r + 1) * TH, H2 - 1),
                                           0, 0, 0)),
                # TODO(synk): pipeline_mode=pl.Buffered(1) (constant index map)
                # once single-buffered BlockSpecs are confirmed on the target jax.
                pl.BlockSpec((3, 4 * C2, C2), lambda b, r: (0, 0, 0)),
            ],
            out_specs=pl.BlockSpec((TB, TH * W2, C2), lambda b, r: (b, r, 0)),
            scratch_shapes=[
                pltpu.VMEM((TB, TH, W2, 4 * C2), x.dtype),      # im2col slab
                pltpu.VMEM((TB * TH * W2, C2), jnp.float32),    # accumulator
            ],
        ),
        compiler_params=pltpu.CompilerParams(
            dimension_semantics=("parallel", "parallel"),
            vmem_limit_bytes=int(min(0.9 * cap, 112 * 1024 * 1024)),
        ),
        cost_estimate=cost,
    )(xr, xr, xr, v)
    return out


def _reference(x, w):
    """Pure-JAX reference: conv3x3 ('same', no bias) -> PixelUnshuffle(2) -> (b, hw, c)."""
    xn = jnp.transpose(x, (0, 3, 1, 2))                   # NCHW
    y = jax.lax.conv_general_dilated(
        xn, w, window_strides=(1, 1), padding=((1, 1), (1, 1)),
        dimension_numbers=("NCHW", "OIHW", "NCHW"),
        precision=jax.lax.Precision.HIGHEST)              # (B, C//2, H, W)
    B, Co, H, W = y.shape
    y = y.reshape(B, Co, H // 2, 2, W // 2, 2)
    y = jnp.transpose(y, (0, 1, 3, 5, 2, 4))              # (B, Co, 2, 2, H2, W2)
    y = y.reshape(B, 4 * Co, H // 2, W // 2)              # PixelUnshuffle(2)
    return jnp.transpose(y, (0, 2, 3, 1)).reshape(B, (H // 2) * (W // 2), 4 * Co)


if __name__ == "__main__":
    B, H, W, n_feat = 2, 16, 16, 32

    key = jax.random.PRNGKey(0)
    kx, kw = jax.random.split(key)
    x = jax.random.normal(kx, (B, H, W, n_feat), dtype=jnp.float32)
    w = 0.1 * jax.random.normal(kw, (n_feat // 2, n_feat, 3, 3), dtype=jnp.float32)

    ref = _reference(x, w)

    # 1) Forced row tiling: exercises the cross-tile halo path (4 row-pair tiles).
    out_tiled = jax.block_until_ready(downsample_input(x, w, row_tile=2))
    assert out_tiled.shape == (B, (H // 2) * (W // 2), 2 * n_feat), out_tiled.shape
    err = float(jnp.max(jnp.abs(out_tiled - ref)))
    assert jnp.allclose(out_tiled, ref, atol=1e-3, rtol=1e-3), err

    # 2) Auto tile selection (single tile at this size).
    out_auto = jax.block_until_ready(downsample_input(x, w))
    err = float(jnp.max(jnp.abs(out_auto - ref)))
    assert jnp.allclose(out_auto, ref, atol=1e-3, rtol=1e-3), err

    # 3) Fast MXU path (single bf16 pass); loose tolerance by construction.
    out_fast = jax.block_until_ready(
        downsample_input(x, w, precision=jax.lax.Precision.DEFAULT))
    err = float(jnp.max(jnp.abs(out_fast - ref)))
    assert jnp.allclose(out_fast, ref, atol=5e-2, rtol=5e-2), err

    print("KERNEL_OK")
</pallas_src>

<mosaic_0001>
module attributes {stable_mosaic.version = 11 : i64} {
  func.func @_downsample_kernel(%arg0: i32, %arg1: i32, %arg2: memref<1x2x2x8x64xf32, #tpu.memory_space<vmem>>, %arg3: memref<1x1x2x8x64xf32, #tpu.memory_space<vmem>>, %arg4: memref<1x1x2x8x64xf32, #tpu.memory_space<vmem>>, %arg5: memref<3x256x64xf32, #tpu.memory_space<vmem>>, %arg6: memref<1x16x64xf32, #tpu.memory_space<vmem>>, %arg7: memref<1x2x8x256xf32, #tpu.memory_space<vmem>>, %arg8: memref<16x64xf32, #tpu.memory_space<vmem>>) attributes {dimension_semantics = [#tpu.dimension_semantics<parallel>, #tpu.dimension_semantics<parallel>], iteration_bounds = array<i64: 2, 4>, scalar_prefetch = 0 : i64, scratch_operands = 2 : i64, tpu.core_type = #tpu.core_type<tc>, window_params = [{transform_indices = @transform_0, window_bounds = array<i64: 1, 2, 2, 8, 64>}, {transform_indices = @transform_1, window_bounds = array<i64: 1, 1, 2, 8, 64>}, {transform_indices = @transform_2, window_bounds = array<i64: 1, 1, 2, 8, 64>}, {pipeline_mode = #tpu.pipeline_mode<synchronous>, transform_indices = @transform_3, window_bounds = array<i64: 3, 256, 64>}, {transform_indices = @transform_4, window_bounds = array<i64: 1, 16, 64>}]} {
    %c0_i32 = arith.constant 0 : i32
    %0 = arith.cmpi sgt, %arg1, %c0_i32 : i32
    %cst = arith.constant 1.000000e+00 : f32
    %cst_0 = arith.constant 0.000000e+00 : f32
    %1 = arith.select %0, %cst, %cst_0 : f32
    %c3_i32 = arith.constant 3 : i32
    %2 = arith.cmpi slt, %arg1, %c3_i32 : i32
    %cst_1 = arith.constant 1.000000e+00 : f32
    %cst_2 = arith.constant 0.000000e+00 : f32
    %3 = arith.select %2, %cst_1, %cst_2 : f32
    %c0 = arith.constant 0 : index
    %c0_3 = arith.constant 0 : index
    %c1 = arith.constant 1 : index
    %c0_4 = arith.constant 0 : index
    %c0_5 = arith.constant 0 : index
    %4 = vector.load %arg3[%c0, %c0_3, %c1, %c0_4, %c0_5] : memref<1x1x2x8x64xf32, #tpu.memory_space<vmem>>, vector<1x1x1x8x64xf32>
    %5 = vector.shape_cast %4 : vector<1x1x1x8x64xf32> to vector<1x1x8x64xf32>
    %6 = vector.broadcast %1 : f32 to vector<1x1x8x64xf32>
    %7 = arith.mulf %5, %6 : vector<1x1x8x64xf32>
    %c0_6 = arith.constant 0 : index
    %c0_7 = arith.constant 0 : index
    %c0_8 = arith.constant 0 : index
    %c0_9 = arith.constant 0 : index
    %c0_10 = arith.constant 0 : index
    %8 = vector.load %arg4[%c0_6, %c0_7, %c0_8, %c0_9, %c0_10] : memref<1x1x2x8x64xf32, #tpu.memory_space<vmem>>, vector<1x1x1x8x64xf32>
    %9 = vector.shape_cast %8 : vector<1x1x1x8x64xf32> to vector<1x1x8x64xf32>
    %10 = vector.broadcast %3 : f32 to vector<1x1x8x64xf32>
    %11 = arith.mulf %9, %10 : vector<1x1x8x64xf32>
    %cst_11 = arith.constant 0.000000e+00 : f32
    %12 = vector.broadcast %cst_11 : f32 to vector<1x2x1x64xf32>
    %c0_12 = arith.constant 0 : index
    %c0_13 = arith.constant 0 : index
    %c0_14 = arith.constant 0 : index
    %c0_15 = arith.constant 0 : index
    %13 = vector.load %arg7[%c0_12, %c0_13, %c0_14, %c0_15] : memref<1x2x8x256xf32, #tpu.memory_space<vmem>>, vector<1x2x1x64xf32>
    tpu.vector_store %arg7[%c0_12, %c0_13, %c0_14, %c0_15], %12 {strides = array<i32>} : memref<1x2x8x256xf32, #tpu.memory_space<vmem>>, vector<1x2x1x64xf32>,
    %c0_16 = arith.constant 0 : index
    %c0_17 = arith.constant 0 : index
    %c1_18 = arith.constant 1 : index
    %c0_19 = arith.constant 0 : index
    %c0_20 = arith.constant 0 : index
    %14 = vector.load %arg2[%c0_16, %c0_17, %c1_18, %c0_19, %c0_20] : memref<1x2x2x8x64xf32, #tpu.memory_space<vmem>>, vector<1x1x1x7x64xf32>
    %15 = vector.shape_cast %14 : vector<1x1x1x7x64xf32> to vector<1x1x7x64xf32>
    %c0_21 = arith.constant 0 : index
    %c1_22 = arith.constant 1 : index
    %c1_23 = arith.constant 1 : index
    %c0_24 = arith.constant 0 : index
    %16 = vector.load %arg7[%c0_21, %c1_22, %c1_23, %c0_24] : memref<1x2x8x256xf32, #tpu.memory_space<vmem>>, vector<1x1x7x64xf32>
    tpu.vector_store %arg7[%c0_21, %c1_22, %c1_23, %c0_24], %15 {strides = array<i32>} : memref<1x2x8x256xf32, #tpu.memory_space<vmem>>, vector<1x1x7x64xf32>,
    %17 = vector.extract_strided_slice %7 {offsets = [0, 0, 0, 0], sizes = [1, 1, 7, 64], strides = [1, 1, 1, 1]} : vector<1x1x8x64xf32> to vector<1x1x7x64xf32>
    %c0_25 = arith.constant 0 : index
    %c0_26 = arith.constant 0 : index
    %c1_27 = arith.constant 1 : index
    %c0_28 = arith.constant 0 : index
    %18 = vector.load %arg7[%c0_25, %c0_26, %c1_27, %c0_28] : memref<1x2x8x256xf32, #tpu.memory_space<vmem>>, vector<1x1x7x64xf32>
    tpu.vector_store %arg7[%c0_25, %c0_26, %c1_27, %c0_28], %17 {strides = array<i32>} : memref<1x2x8x256xf32, #tpu.memory_space<vmem>>, vector<1x1x7x64xf32>,
    %c0_29 = arith.constant 0 : index
    %c0_30 = arith.constant 0 : index
    %c0_31 = arith.constant 0 : index
    %c64 = arith.constant 64 : index
    %19 = vector.load %arg7[%c0_29, %c0_30, %c0_31, %c64] : memref<1x2x8x256xf32, #tpu.memory_space<vmem>>, vector<1x2x1x64xf32>
    tpu.vector_store %arg7[%c0_29, %c0_30, %c0_31, %c64], %12 {strides = array<i32>} : memref<1x2x8x256xf32, #tpu.memory_space<vmem>>, vector<1x2x1x64xf32>,
    %c0_32 = arith.constant 0 : index
    %c0_33 = arith.constant 0 : index
    %c0_34 = arith.constant 0 : index
    %c0_35 = arith.constant 0 : index
    %c0_36 = arith.constant 0 : index
    %20 = vector.load %arg2[%c0_32, %c0_33, %c0_34, %c0_35, %c0_36] : memref<1x2x2x8x64xf32, #tpu.memory_space<vmem>>, vector<1x2x1x7x64xf32>
    %21 = vector.shape_cast %20 : vector<1x2x1x7x64xf32> to vector<1x2x7x64xf32>
    %c0_37 = arith.constant 0 : index
    %c0_38 = arith.constant 0 : index
    %c1_39 = arith.constant 1 : index
    %c64_40 = arith.constant 64 : index
    %22 = vector.load %arg7[%c0_37, %c0_38, %c1_39, %c64_40] : memref<1x2x8x256xf32, #tpu.memory_space<vmem>>, vector<1x2x7x64xf32>
    tpu.vector_store %arg7[%c0_37, %c0_38, %c1_39, %c64_40], %21 {strides = array<i32>} : memref<1x2x8x256xf32, #tpu.memory_space<vmem>>, vector<1x2x7x64xf32>,
    %c0_41 = arith.constant 0 : index
    %c0_42 = arith.constant 0 : index
    %c0_43 = arith.constant 0 : index
    %c128 = arith.constant 128 : index
    %23 = vector.load %arg7[%c0_41, %c0_42, %c0_43, %c128] : memref<1x2x8x256xf32, #tpu.memory_space<vmem>>, vector<1x2x1x64xf32>
    tpu.vector_store %arg7[%c0_41, %c0_42, %c0_43, %c128], %12 {strides = array<i32>} : memref<1x2x8x256xf32, #tpu.memory_space<vmem>>, vector<1x2x1x64xf32>,
    %c0_44 = arith.constant 0 : index
    %c0_45 = arith.constant 0 : index
    %c1_46 = arith.constant 1 : index
    %c0_47 = arith.constant 0 : index
    %c0_48 = arith.constant 0 : index
    %24 = vector.load %arg2[%c0_44, %c0_45, %c1_46, %c0_47, %c0_48] : memref<1x2x2x8x64xf32, #tpu.memory_space<vmem>>, vector<1x2x1x7x64xf32>
    %25 = vector.shape_cast %24 : vector<1x2x1x7x64xf32> to vector<1x2x7x64xf32>
    %c0_49 = arith.constant 0 : index
    %c0_50 = arith.constant 0 : index
    %c1_51 = arith.constant 1 : index
    %c128_52 = arith.constant 128 : index
    %26 = vector.load %arg7[%c0_49, %c0_50, %c1_51, %c128_52] : memref<1x2x8x256xf32, #tpu.memory_space<vmem>>, vector<1x2x7x64xf32>
    tpu.vector_store %arg7[%c0_49, %c0_50, %c1_51, %c128_52], %25 {strides = array<i32>} : memref<1x2x8x256xf32, #tpu.memory_space<vmem>>, vector<1x2x7x64xf32>,
    %c0_53 = arith.constant 0 : index
    %c0_54 = arith.constant 0 : index
    %c0_55 = arith.constant 0 : index
    %c192 = arith.constant 192 : index
    %27 = vector.load %arg7[%c0_53, %c0_54, %c0_55, %c192] : memref<1x2x8x256xf32, #tpu.memory_space<vmem>>, vector<1x2x1x64xf32>
    tpu.vector_store %arg7[%c0_53, %c0_54, %c0_55, %c192], %12 {strides = array<i32>} : memref<1x2x8x256xf32, #tpu.memory_space<vmem>>, vector<1x2x1x64xf32>,
    %c0_56 = arith.constant 0 : index
    %c1_57 = arith.constant 1 : index
    %c0_58 = arith.constant 0 : index
    %c0_59 = arith.constant 0 : index
    %c0_60 = arith.constant 0 : index
    %28 = vector.load %arg2[%c0_56, %c1_57, %c0_58, %c0_59, %c0_60] : memref<1x2x2x8x64xf32, #tpu.memory_space<vmem>>, vector<1x1x1x7x64xf32>
    %29 = vector.shape_cast %28 : vector<1x1x1x7x64xf32> to vector<1x1x7x64xf32>
    %c0_61 = arith.constant 0 : index
    %c0_62 = arith.constant 0 : index
    %c1_63 = arith.constant 1 : index
    %c192_64 = arith.constant 192 : index
    %30 = vector.load %arg7[%c0_61, %c0_62, %c1_63, %c192_64] : memref<1x2x8x256xf32, #tpu.memory_space<vmem>>, vector<1x1x7x64xf32>
    tpu.vector_store %arg7[%c0_61, %c0_62, %c1_63, %c192_64], %29 {strides = array<i32>} : memref<1x2x8x256xf32, #tpu.memory_space<vmem>>, vector<1x1x7x64xf32>,
    %31 = vector.extract_strided_slice %11 {offsets = [0, 0, 0, 0], sizes = [1, 1, 7, 64], strides = [1, 1, 1, 1]} : vector<1x1x8x64xf32> to vector<1x1x7x64xf32>
    %c0_65 = arith.constant 0 : index
    %c1_66 = arith.constant 1 : index
    %c1_67 = arith.constant 1 : index
    %c192_68 = arith.constant 192 : index
    %32 = vector.load %arg7[%c0_65, %c1_66, %c1_67, %c192_68] : memref<1x2x8x256xf32, #tpu.memory_space<vmem>>, vector<1x1x7x64xf32>
    tpu.vector_store %arg7[%c0_65, %c1_66, %c1_67, %c192_68], %31 {strides = array<i32>} : memref<1x2x8x256xf32, #tpu.memory_space<vmem>>, vector<1x1x7x64xf32>,
    %c0_69 = arith.constant 0 : index
    %c0_70 = arith.constant 0 : index
    %c0_71 = arith.constant 0 : index
    %c0_72 = arith.constant 0 : index
    %33 = vector.load %arg7[%c0_69, %c0_70, %c0_71, %c0_72] : memref<1x2x8x256xf32, #tpu.memory_space<vmem>>, vector<1x2x8x256xf32>
    %34 = vector.shape_cast %33 : vector<1x2x8x256xf32> to vector<16x256xf32>
    %c0_73 = arith.constant 0 : index
    %c0_74 = arith.constant 0 : index
    %c0_75 = arith.constant 0 : index
    %35 = vector.load %arg5[%c0_73, %c0_74, %c0_75] : memref<3x256x64xf32, #tpu.memory_space<vmem>>, vector<1x256x64xf32>
    %36 = vector.shape_cast %35 : vector<1x256x64xf32> to vector<256x64xf32>
    %cst_76 = arith.constant dense<0.000000e+00> : vector<16x64xf32>
    %37 = tpu.matmul %34, %36, %cst_76 {dimension_numbers = #tpu.dot_dimension_numbers<[1], [0], [0], [1], [0, 0, 1, 1], [], []>, precision = #tpu.contract_precision<fp32>} : vector<16x256xf32>, vector<256x64xf32>, vector<16x64xf32> -> vector<16x64xf32>
    %c0_77 = arith.constant 0 : index
    %c0_78 = arith.constant 0 : index
    %38 = vector.load %arg8[%c0_77, %c0_78] : memref<16x64xf32, #tpu.memory_space<vmem>>, vector<16x64xf32>
    tpu.vector_store %arg8[%c0_77, %c0_78], %37 {strides = array<i32>} : memref<16x64xf32, #tpu.memory_space<vmem>>, vector<16x64xf32>,
    %c0_79 = arith.constant 0 : index
    %c0_80 = arith.constant 0 : index
    %c1_81 = arith.constant 1 : index
    %c0_82 = arith.constant 0 : index
    %c0_83 = arith.constant 0 : index
    %39 = vector.load %arg2[%c0_79, %c0_80, %c1_81, %c0_82, %c0_83] : memref<1x2x2x8x64xf32, #tpu.memory_space<vmem>>, vector<1x1x1x8x64xf32>
    %40 = vector.shape_cast %39 : vector<1x1x1x8x64xf32> to vector<1x1x8x64xf32>
    %c0_84 = arith.constant 0 : index
    %c1_85 = arith.constant 1 : index
    %c0_86 = arith.constant 0 : index
    %c0_87 = arith.constant 0 : index
    %41 = vector.load %arg7[%c0_84, %c1_85, %c0_86, %c0_87] : memref<1x2x8x256xf32, #tpu.memory_space<vmem>>, vector<1x1x8x64xf32>
    tpu.vector_store %arg7[%c0_84, %c1_85, %c0_86, %c0_87], %40 {strides = array<i32>} : memref<1x2x8x256xf32, #tpu.memory_space<vmem>>, vector<1x1x8x64xf32>,
    %c0_88 = arith.constant 0 : index
    %c0_89 = arith.constant 0 : index
    %c0_90 = arith.constant 0 : index
    %c0_91 = arith.constant 0 : index
    %42 = vector.load %arg7[%c0_88, %c0_89, %c0_90, %c0_91] : memref<1x2x8x256xf32, #tpu.memory_space<vmem>>, vector<1x1x8x64xf32>
    tpu.vector_store %arg7[%c0_88, %c0_89, %c0_90, %c0_91], %7 {strides = array<i32>} : memref<1x2x8x256xf32, #tpu.memory_space<vmem>>, vector<1x1x8x64xf32>,
    %c0_92 = arith.constant 0 : index
    %c0_93 = arith.constant 0 : index
    %c0_94 = arith.constant 0 : index
    %c0_95 = arith.constant 0 : index
    %c0_96 = arith.constant 0 : index
    %43 = vector.load %arg2[%c0_92, %c0_93, %c0_94, %c0_95, %c0_96] : memref<1x2x2x8x64xf32, #tpu.memory_space<vmem>>, vector<1x2x1x8x64xf32>
    %44 = vector.shape_cast %43 : vector<1x2x1x8x64xf32> to vector<1x2x8x64xf32>
    %c0_97 = arith.constant 0 : index
    %c0_98 = arith.constant 0 : index
    %c0_99 = arith.constant 0 : index
    %c64_100 = arith.constant 64 : index
    %45 = vector.load %arg7[%c0_97, %c0_98, %c0_99, %c64_100] : memref<1x2x8x256xf32, #tpu.memory_space<vmem>>, vector<1x2x8x64xf32>
    tpu.vector_store %arg7[%c0_97, %c0_98, %c0_99, %c64_100], %44 {strides = array<i32>} : memref<1x2x8x256xf32, #tpu.memory_space<vmem>>, vector<1x2x8x64xf32>,
    %c0_101 = arith.constant 0 : index
    %c0_102 = arith.constant 0 : index
    %c1_103 = arith.constant 1 : index
    %c0_104 = arith.constant 0 : index
    %c0_105 = arith.constant 0 : index
    %46 = vector.load %arg2[%c0_101, %c0_102, %c1_103, %c0_104, %c0_105] : memref<1x2x2x8x64xf32, #tpu.memory_space<vmem>>, vector<1x2x1x8x64xf32>
    %47 = vector.shape_cast %46 : vector<1x2x1x8x64xf32> to vector<1x2x8x64xf32>
    %c0_106 = arith.constant 0 : index
    %c0_107 = arith.constant 0 : index
    %c0_108 = arith.constant 0 : index
    %c128_109 = arith.constant 128 : index
    %48 = vector.load %arg7[%c0_106, %c0_107, %c0_108, %c128_109] : memref<1x2x8x256xf32, #tpu.memory_space<vmem>>, vector<1x2x8x64xf32>
    tpu.vector_store %arg7[%c0_106, %c0_107, %c0_108, %c128_109], %47 {strides = array<i32>} : memref<1x2x8x256xf32, #tpu.memory_space<vmem>>, vector<1x2x8x64xf32>,
    %c0_110 = arith.constant 0 : index
    %c1_111 = arith.constant 1 : index
    %c0_112 = arith.constant 0 : index
    %c0_113 = arith.constant 0 : index
    %c0_114 = arith.constant 0 : index
    %49 = vector.load %arg2[%c0_110, %c1_111, %c0_112, %c0_113, %c0_114] : memref<1x2x2x8x64xf32, #tpu.memory_space<vmem>>, vector<1x1x1x8x64xf32>
    %50 = vector.shape_cast %49 : vector<1x1x1x8x64xf32> to vector<1x1x8x64xf32>
    %c0_115 = arith.constant 0 : index
    %c0_116 = arith.constant 0 : index
    %c0_117 = arith.constant 0 : index
    %c192_118 = arith.constant 192 : index
    %51 = vector.load %arg7[%c0_115, %c0_116, %c0_117, %c192_118] : memref<1x2x8x256xf32, #tpu.memory_space<vmem>>, vector<1x1x8x64xf32>
    tpu.vector_store %arg7[%c0_115, %c0_116, %c0_117, %c192_118], %50 {strides = array<i32>} : memref<1x2x8x256xf32, #tpu.memory_space<vmem>>, vector<1x1x8x64xf32>,
    %c0_119 = arith.constant 0 : index
    %c1_120 = arith.constant 1 : index
    %c0_121 = arith.constant 0 : index
    %c192_122 = arith.constant 192 : index
    %52 = vector.load %arg7[%c0_119, %c1_120, %c0_121, %c192_122] : memref<1x2x8x256xf32, #tpu.memory_space<vmem>>, vector<1x1x8x64xf32>
    tpu.vector_store %arg7[%c0_119, %c1_120, %c0_121, %c192_122], %11 {strides = array<i32>} : memref<1x2x8x256xf32, #tpu.memory_space<vmem>>, vector<1x1x8x64xf32>,
    %c0_123 = arith.constant 0 : index
    %c0_124 = arith.constant 0 : index
    %c0_125 = arith.constant 0 : index
    %c0_126 = arith.constant 0 : index
    %53 = vector.load %arg7[%c0_123, %c0_124, %c0_125, %c0_126] : memref<1x2x8x256xf32, #tpu.memory_space<vmem>>, vector<1x2x8x256xf32>
    %54 = vector.shape_cast %53 : vector<1x2x8x256xf32> to vector<16x256xf32>
    %c1_127 = arith.constant 1 : index
    %c0_128 = arith.constant 0 : index
    %c0_129 = arith.constant 0 : index
    %55 = vector.load %arg5[%c1_127, %c0_128, %c0_129] : memref<3x256x64xf32, #tpu.memory_space<vmem>>, vector<1x256x64xf32>
    %56 = vector.shape_cast %55 : vector<1x256x64xf32> to vector<256x64xf32>
    %cst_130 = arith.constant dense<0.000000e+00> : vector<16x64xf32>
    %57 = tpu.matmul %54, %56, %cst_130 {dimension_numbers = #tpu.dot_dimension_numbers<[1], [0], [0], [1], [0, 0, 1, 1], [], []>, precision = #tpu.contract_precision<fp32>} : vector<16x256xf32>, vector<256x64xf32>, vector<16x64xf32> -> vector<16x64xf32>
    %c0_131 = arith.constant 0 : index
    %c0_132 = arith.constant 0 : index
    %58 = vector.load %arg8[%c0_131, %c0_132] : memref<16x64xf32, #tpu.memory_space<vmem>>, vector<16x64xf32>
    %59 = arith.addf %58, %57 : vector<16x64xf32>
    %c0_133 = arith.constant 0 : index
    %c0_134 = arith.constant 0 : index
    %60 = vector.load %arg8[%c0_133, %c0_134] : memref<16x64xf32, #tpu.memory_space<vmem>>, vector<16x64xf32>
    tpu.vector_store %arg8[%c0_133, %c0_134], %59 {strides = array<i32>} : memref<16x64xf32, #tpu.memory_space<vmem>>, vector<16x64xf32>,
    %c0_135 = arith.constant 0 : index
    %c0_136 = arith.constant 0 : index
    %c7 = arith.constant 7 : index
    %c0_137 = arith.constant 0 : index
    %61 = vector.load %arg7[%c0_135, %c0_136, %c7, %c0_137] : memref<1x2x8x256xf32, #tpu.memory_space<vmem>>, vector<1x2x1x64xf32>
    tpu.vector_store %arg7[%c0_135, %c0_136, %c7, %c0_137], %12 {strides = array<i32>} : memref<1x2x8x256xf32, #tpu.memory_space<vmem>>, vector<1x2x1x64xf32>,
    %c0_138 = arith.constant 0 : index
    %c0_139 = arith.constant 0 : index
    %c1_140 = arith.constant 1 : index
    %c1_141 = arith.constant 1 : index
    %c0_142 = arith.constant 0 : index
    %62 = vector.load %arg2[%c0_138, %c0_139, %c1_140, %c1_141, %c0_142] : memref<1x2x2x8x64xf32, #tpu.memory_space<vmem>>, vector<1x1x1x7x64xf32>
    %63 = vector.shape_cast %62 : vector<1x1x1x7x64xf32> to vector<1x1x7x64xf32>
    %c0_143 = arith.constant 0 : index
    %c1_144 = arith.constant 1 : index
    %c0_145 = arith.constant 0 : index
    %c0_146 = arith.constant 0 : index
    %64 = vector.load %arg7[%c0_143, %c1_144, %c0_145, %c0_146] : memref<1x2x8x256xf32, #tpu.memory_space<vmem>>, vector<1x1x7x64xf32>
    tpu.vector_store %arg7[%c0_143, %c1_144, %c0_145, %c0_146], %63 {strides = array<i32>} : memref<1x2x8x256xf32, #tpu.memory_space<vmem>>, vector<1x1x7x64xf32>,
    %65 = vector.extract_strided_slice %7 {offsets = [0, 0, 1, 0], sizes = [1, 1, 7, 64], strides = [1, 1, 1, 1]} : vector<1x1x8x64xf32> to vector<1x1x7x64xf32>
    %c0_147 = arith.constant 0 : index
    %c0_148 = arith.constant 0 : index
    %c0_149 = arith.constant 0 : index
    %c0_150 = arith.constant 0 : index
    %66 = vector.load %arg7[%c0_147, %c0_148, %c0_149, %c0_150] : memref<1x2x8x256xf32, #tpu.memory_space<vmem>>, vector<1x1x7x64xf32>
    tpu.vector_store %arg7[%c0_147, %c0_148, %c0_149, %c0_150], %65 {strides = array<i32>} : memref<1x2x8x256xf32, #tpu.memory_space<vmem>>, vector<1x1x7x64xf32>,
    %c0_151 = arith.constant 0 : index
    %c0_152 = arith.constant 0 : index
    %c7_153 = arith.constant 7 : index
    %c64_154 = arith.constant 64 : index
    %67 = vector.load %arg7[%c0_151, %c0_152, %c7_153, %c64_154] : memref<1x2x8x256xf32, #tpu.memory_space<vmem>>, vector<1x2x1x64xf32>
    tpu.vector_store %arg7[%c0_151, %c0_152, %c7_153, %c64_154], %12 {strides = array<i32>} : memref<1x2x8x256xf32, #tpu.memory_space<vmem>>, vector<1x2x1x64xf32>,
    %c0_155 = arith.constant 0 : index
    %c0_156 = arith.constant 0 : index
    %c0_157 = arith.constant 0 : index
    %c1_158 = arith.constant 1 : index
    %c0_159 = arith.constant 0 : index
    %68 = vector.load %arg2[%c0_155, %c0_156, %c0_157, %c1_158, %c0_159] : memref<1x2x2x8x64xf32, #tpu.memory_space<vmem>>, vector<1x2x1x7x64xf32>
    %69 = vector.shape_cast %68 : vector<1x2x1x7x64xf32> to vector<1x2x7x64xf32>
    %c0_160 = arith.constant 0 : index
    %c0_161 = arith.constant 0 : index
    %c0_162 = arith.constant 0 : index
    %c64_163 = arith.constant 64 : index
    %70 = vector.load %arg7[%c0_160, %c0_161, %c0_162, %c64_163] : memref<1x2x8x256xf32, #tpu.memory_space<vmem>>, vector<1x2x7x64xf32>
    tpu.vector_store %arg7[%c0_160, %c0_161, %c0_162, %c64_163], %69 {strides = array<i32>} : memref<1x2x8x256xf32, #tpu.memory_space<vmem>>, vector<1x2x7x64xf32>,
    %c0_164 = arith.constant 0 : index
    %c0_165 = arith.constant 0 : index
    %c7_166 = arith.constant 7 : index
    %c128_167 = arith.constant 128 : index
    %71 = vector.load %arg7[%c0_164, %c0_165, %c7_166, %c128_167] : memref<1x2x8x256xf32, #tpu.memory_space<vmem>>, vector<1x2x1x64xf32>
    tpu.vector_store %arg7[%c0_164, %c0_165, %c7_166, %c128_167], %12 {strides = array<i32>} : memref<1x2x8x256xf32, #tpu.memory_space<vmem>>, vector<1x2x1x64xf32>,
    %c0_168 = arith.constant 0 : index
    %c0_169 = arith.constant 0 : index
    %c1_170 = arith.constant 1 : index
    %c1_171 = arith.constant 1 : index
    %c0_172 = arith.constant 0 : index
    %72 = vector.load %arg2[%c0_168, %c0_169, %c1_170, %c1_171, %c0_172] : memref<1x2x2x8x64xf32, #tpu.memory_space<vmem>>, vector<1x2x1x7x64xf32>
    %73 = vector.shape_cast %72 : vector<1x2x1x7x64xf32> to vector<1x2x7x64xf32>
    %c0_173 = arith.constant 0 : index
    %c0_174 = arith.constant 0 : index
    %c0_175 = arith.constant 0 : index
    %c128_176 = arith.constant 128 : index
    %74 = vector.load %arg7[%c0_173, %c0_174, %c0_175, %c128_176] : memref<1x2x8x256xf32, #tpu.memory_space<vmem>>, vector<1x2x7x64xf32>
    tpu.vector_store %arg7[%c0_173, %c0_174, %c0_175, %c128_176], %73 {strides = array<i32>} : memref<1x2x8x256xf32, #tpu.memory_space<vmem>>, vector<1x2x7x64xf32>,
    %c0_177 = arith.constant 0 : index
    %c0_178 = arith.constant 0 : index
    %c7_179 = arith.constant 7 : index
    %c192_180 = arith.constant 192 : index
    %75 = vector.load %arg7[%c0_177, %c0_178, %c7_179, %c192_180] : memref<1x2x8x256xf32, #tpu.memory_space<vmem>>, vector<1x2x1x64xf32>
    tpu.vector_store %arg7[%c0_177, %c0_178, %c7_179, %c192_180], %12 {strides = array<i32>} : memref<1x2x8x256xf32, #tpu.memory_space<vmem>>, vector<1x2x1x64xf32>,
    %c0_181 = arith.constant 0 : index
    %c1_182 = arith.constant 1 : index
    %c0_183 = arith.constant 0 : index
    %c1_184 = arith.constant 1 : index
    %c0_185 = arith.constant 0 : index
    %76 = vector.load %arg2[%c0_181, %c1_182, %c0_183, %c1_184, %c0_185] : memref<1x2x2x8x64xf32, #tpu.memory_space<vmem>>, vector<1x1x1x7x64xf32>
    %77 = vector.shape_cast %76 : vector<1x1x1x7x64xf32> to vector<1x1x7x64xf32>
    %c0_186 = arith.constant 0 : index
    %c0_187 = arith.constant 0 : index
    %c0_188 = arith.constant 0 : index
    %c192_189 = arith.constant 192 : index
    %78 = vector.load %arg7[%c0_186, %c0_187, %c0_188, %c192_189] : memref<1x2x8x256xf32, #tpu.memory_space<vmem>>, vector<1x1x7x64xf32>
    tpu.vector_store %arg7[%c0_186, %c0_187, %c0_188, %c192_189], %77 {strides = array<i32>} : memref<1x2x8x256xf32, #tpu.memory_space<vmem>>, vector<1x1x7x64xf32>,
    %79 = vector.extract_strided_slice %11 {offsets = [0, 0, 1, 0], sizes = [1, 1, 7, 64], strides = [1, 1, 1, 1]} : vector<1x1x8x64xf32> to vector<1x1x7x64xf32>
    %c0_190 = arith.constant 0 : index
    %c1_191 = arith.constant 1 : index
    %c0_192 = arith.constant 0 : index
    %c192_193 = arith.constant 192 : index
    %80 = vector.load %arg7[%c0_190, %c1_191, %c0_192, %c192_193] : memref<1x2x8x256xf32, #tpu.memory_space<vmem>>, vector<1x1x7x64xf32>
    tpu.vector_store %arg7[%c0_190, %c1_191, %c0_192, %c192_193], %79 {strides = array<i32>} : memref<1x2x8x256xf32, #tpu.memory_space<vmem>>, vector<1x1x7x64xf32>,
    %c0_194 = arith.constant 0 : index
    %c0_195 = arith.constant 0 : index
    %c0_196 = arith.constant 0 : index
    %c0_197 = arith.constant 0 : index
    %81 = vector.load %arg7[%c0_194, %c0_195, %c0_196, %c0_197] : memref<1x2x8x256xf32, #tpu.memory_space<vmem>>, vector<1x2x8x256xf32>
    %82 = vector.shape_cast %81 : vector<1x2x8x256xf32> to vector<16x256xf32>
    %c2 = arith.constant 2 : index
    %c0_198 = arith.constant 0 : index
    %c0_199 = arith.constant 0 : index
    %83 = vector.load %arg5[%c2, %c0_198, %c0_199] : memref<3x256x64xf32, #tpu.memory_space<vmem>>, vector<1x256x64xf32>
    %84 = vector.shape_cast %83 : vector<1x256x64xf32> to vector<256x64xf32>
    %cst_200 = arith.constant dense<0.000000e+00> : vector<16x64xf32>
    %85 = tpu.matmul %82, %84, %cst_200 {dimension_numbers = #tpu.dot_dimension_numbers<[1], [0], [0], [1], [0, 0, 1, 1], [], []>, precision = #tpu.contract_precision<fp32>} : vector<16x256xf32>, vector<256x64xf32>, vector<16x64xf32> -> vector<16x64xf32>
    %c0_201 = arith.constant 0 : index
    %c0_202 = arith.constant 0 : index
    %86 = vector.load %arg8[%c0_201, %c0_202] : memref<16x64xf32, #tpu.memory_space<vmem>>, vector<16x64xf32>
    %87 = arith.addf %86, %85 : vector<16x64xf32>
    %c0_203 = arith.constant 0 : index
    %c0_204 = arith.constant 0 : index
    %88 = vector.load %arg8[%c0_203, %c0_204] : memref<16x64xf32, #tpu.memory_space<vmem>>, vector<16x64xf32>
    tpu.vector_store %arg8[%c0_203, %c0_204], %87 {strides = array<i32>} : memref<16x64xf32, #tpu.memory_space<vmem>>, vector<16x64xf32>,
    %c0_205 = arith.constant 0 : index
    %c0_206 = arith.constant 0 : index
    %89 = vector.load %arg8[%c0_205, %c0_206] : memref<16x64xf32, #tpu.memory_space<vmem>>, vector<16x64xf32>
    %90 = vector.shape_cast %89 : vector<16x64xf32> to vector<1x16x64xf32>
    %c0_207 = arith.constant 0 : index
    %c0_208 = arith.constant 0 : index
    %c0_209 = arith.constant 0 : index
    %91 = vector.load %arg6[%c0_207, %c0_208, %c0_209] : memref<1x16x64xf32, #tpu.memory_space<vmem>>, vector<1x16x64xf32>
    tpu.vector_store %arg6[%c0_207, %c0_208, %c0_209], %90 {strides = array<i32>} : memref<1x16x64xf32, #tpu.memory_space<vmem>>, vector<1x16x64xf32>,
    return
  }
  func.func @transform_0(%arg0: i32, %arg1: i32) -> (i32, i32, i32, i32, i32) {
    %c0_i32 = arith.constant 0 : i32
    %c0_i32_0 = arith.constant 0 : i32
    %c0_i32_1 = arith.constant 0 : i32
    %c0_i32_2 = arith.constant 0 : i32
    return %arg0, %arg1, %c0_i32, %c0_i32_0, %c0_i32_1 : i32, i32, i32, i32, i32
  }
  func.func @transform_1(%arg0: i32, %arg1: i32) -> (i32, i32, i32, i32, i32) {
    %c2_i32 = arith.constant 2 : i32
    %0 = arith.muli %arg1, %c2_i32 : i32
    %c1_i32 = arith.constant 1 : i32
    %1 = arith.subi %0, %c1_i32 : i32
    %c0_i32 = arith.constant 0 : i32
    %2 = arith.maxsi %1, %c0_i32 : i32
    %c0_i32_0 = arith.constant 0 : i32
    %c0_i32_1 = arith.constant 0 : i32
    %c0_i32_2 = arith.constant 0 : i32
    %c0_i32_3 = arith.constant 0 : i32
    return %arg0, %2, %c0_i32_0, %c0_i32_1, %c0_i32_2 : i32, i32, i32, i32, i32
  }
  func.func @transform_2(%arg0: i32, %arg1: i32) -> (i32, i32, i32, i32, i32) {
    %c1_i32 = arith.constant 1 : i32
    %0 = arith.addi %arg1, %c1_i32 : i32
    %c2_i32 = arith.constant 2 : i32
    %1 = arith.muli %0, %c2_i32 : i32
    %c7_i32 = arith.constant 7 : i32
    %2 = arith.minsi %1, %c7_i32 : i32
    %c0_i32 = arith.constant 0 : i32
    %c0_i32_0 = arith.constant 0 : i32
    %c0_i32_1 = arith.constant 0 : i32
    %c0_i32_2 = arith.constant 0 : i32
    return %arg0, %2, %c0_i32, %c0_i32_0, %c0_i32_1 : i32, i32, i32, i32, i32
  }
  func.func @transform_3(%arg0: i32, %arg1: i32) -> (i32, i32, i32) {
    %c0_i32 = arith.constant 0 : i32
    %c0_i32_0 = arith.constant 0 : i32
    %c0_i32_1 = arith.constant 0 : i32
    %c0_i32_2 = arith.constant 0 : i32
    return %c0_i32, %c0_i32_0, %c0_i32_1 : i32, i32, i32
  }
  func.func @transform_4(%arg0: i32, %arg1: i32) -> (i32, i32, i32) {
    %c0_i32 = arith.constant 0 : i32
    %c0_i32_0 = arith.constant 0 : i32
    return %arg0, %arg1, %c0_i32 : i32, i32, i32
  }
}

</mosaic_0001>

<llo_original>
// kernel: tpu_custom_call.1
$region0: #{tpu_custom_call.1}
  #allocation0 [shape = 'u32[]', space=smem, size = 0x4, offset = 0x4, fixed_abs, tag = 'smem constant byte address 0x4 - core index']
  #allocation1 [shape = 'u32[144,128]{1,0:T(1,128)}', space=vmem, size = 0x12000, scoped, tag = 'internal scratch']
  #allocation2 [shape = 'f32[1,2,8,256]{3,2,1,0:T(8,128)}', space=vmem, size = 0x4000, scoped, tag = 'scratch operand']
  #allocation3 [shape = 'f32[16,64]{1,0:T(8,128)}', space=vmem, size = 0x2000, scoped, tag = 'scratch operand']
  %s0 = inlined_call_operand.vmem [shape: f32[2,8,2,8,64], index: 0, kind: input, shape index: {}]
  %s1 = inlined_call_operand.vmem [shape: f32[2,8,2,8,64], index: 1, kind: input, shape index: {}]
  %s2 = inlined_call_operand.vmem [shape: f32[2,8,2,8,64], index: 2, kind: input, shape index: {}]
  %s3 = inlined_call_operand.vmem [shape: f32[3,256,64], index: 3, kind: input, shape index: {}]
  %s4 = inlined_call_operand.hbm [shape: f32[2,64,64], index: 4, kind: output, shape index: {}]
  %s5 = sld [smem:[#allocation0]]
  $region49: #{tpu_custom_call.1} parent=0
    _
  %s7 = ssub.s32 1, %s5
  %s8 = scalar_select 0, %s7, %s5
  $region1: #{tpu_custom_call.1} parent=0
    #allocation4 [shape = 'u8[16384]{0}', space=vmem, size = 0x4000, scoped, tag = 'output window, operand 0']
    #allocation5 [shape = 's32[2]{0}', space=sflag, size = 0x8, scoped, tag = 'scoped memory for tpu_custom_call.1']
    %9 = vsyncpa [#allocation5], 0
    %s10 = scalar_lea.sflag [#allocation5], 1
    %11 = vsyncpa %s10, 0
    loop: start=0, step=1, limit=10
    $region2: #{tpu_custom_call.1} parent=1 // loop_pre_header
      _
    $region3: #{tpu_custom_call.1} parent=1 // loop_header
      %s13 = sphi 0, %s17
      %p14 = scmp.ge.s32.totalorder %s13, 10
      %s20 = sphi 0, %s32
      %s21 = sphi 0, %s28
      %s22 = sphi 0, %s20
      %s23 = sphi 0, %s21
      %s24 = sphi 0, %s22
      %s25 = sphi 0, %s23
      %s37 = sphi 0, %s39
      %s40 = sphi 0, %s37
      %s41 = sphi 0, %s40
      %s57 = sphi 0, %s41
      %s73 = sphi 0, %s75
      %s76 = sphi 0, %s73
      %s77 = sphi 0, %s76
      %s93 = sphi 0, %s77
      %s109 = sphi 0, %s111
      %s112 = sphi 0, %s109
      %s113 = sphi 0, %s112
      %s129 = sphi 0, %s113
      %s133 = sphi 0, %s133
      %s135 = sphi 0, %s133
      %s136 = sphi 0, %s135
      %s150 = sphi 0, %s136
      %s158 = sphi 0, %s160
      %s161 = sphi 0, %s158
      %s162 = sphi 0, %s161
      %s178 = sphi 0, %s162
    $region4: #{tpu_custom_call.1} parent=1 // loop_header_branch
      %16 = sbr.rel (%p14) target = $region8
    $region5: #{tpu_custom_call.1} parent=1 // loop_body
      %s18 = ssub.s32 %s13, 1
      %s19 = ssub.s32 %s13, 2
      %s26 = sadd.s32 1, %s21
      %p27 = scmp.ge.s32.totalorder %s26, 4
      %s28 = scalar_select %p27, 0, %s26
      %s29 = sadd.s32 1, %s20
      %s30 = scalar_select %p27, %s29, %s20
      %p31 = scmp.ge.s32.totalorder %s30, 2
      %s32 = scalar_select %p31, 0, %s30
      %s33 = ssub.s32 %s20, %s32
      %s34 = ssub.s32 %s21, %s28
      %s35 = sor.u32 %s33, %s34
      %p36 = scmp.eq.s32.totalorder %s35, 0
      %s38 = sadd.s32 %s37, 1
      %s39 = scalar_select %p36, %s37, %s38
      %p42 = pneg %p36
      %p43 = scmp.eq.s32.totalorder %s13, 7
      %p44 = por %p42, %p43
      %p45 = scmp.ne.s32.totalorder %s37, %s40
      %p46 = scmp.eq.s32.totalorder %s13, 0
      %p47 = por %p45, %p46
      %p48 = scmp.ne.s32.totalorder %s37, %s40
      %p49 = scmp.eq.s32.totalorder %s18, 7
      %p50 = por %p48, %p49
      %p51 = scmp.ne.s32.totalorder %s40, %s41
      %p52 = scmp.eq.s32.totalorder %s18, 0
      %p53 = por %p51, %p52
      %p54 = scmp.ne.s32.totalorder %s40, %s41
      %p55 = scmp.eq.s32.totalorder %s19, 7
      %p56 = por %p54, %p55
      %p58 = scmp.ne.s32.totalorder %s41, %s57
      %p59 = scmp.eq.s32.totalorder %s19, 0
      %p60 = por %p58, %p59
      %s61 = smul.u32 %s21, 2
      %s62 = ssub.s32 %s61, 1
      %p63 = scmp.gt.s32.totalorder %s62, 0
      %s64 = scalar_select %p63, %s62, 0
      %s65 = smul.u32 %s28, 2
      %s66 = ssub.s32 %s65, 1
      %p67 = scmp.gt.s32.totalorder %s66, 0
      %s68 = scalar_select %p67, %s66, 0
      %s69 = ssub.s32 %s20, %s32
      %s70 = ssub.s32 %s64, %s68
      %s71 = sor.u32 %s69, %s70
      %p72 = scmp.eq.s32.totalorder %s71, 0
      %s74 = sadd.s32 %s73, 1
      %s75 = scalar_select %p72, %s73, %s74
      %p78 = pneg %p72
      %p79 = scmp.eq.s32.totalorder %s13, 7
      %p80 = por %p78, %p79
      %p81 = scmp.ne.s32.totalorder %s73, %s76
      %p82 = scmp.eq.s32.totalorder %s13, 0
      %p83 = por %p81, %p82
      %p84 = scmp.ne.s32.totalorder %s73, %s76
      %p85 = scmp.eq.s32.totalorder %s18, 7
      %p86 = por %p84, %p85
      %p87 = scmp.ne.s32.totalorder %s76, %s77
      %p88 = scmp.eq.s32.totalorder %s18, 0
      %p89 = por %p87, %p88
      %p90 = scmp.ne.s32.totalorder %s76, %s77
      %p91 = scmp.eq.s32.totalorder %s19, 7
      %p92 = por %p90, %p91
      %p94 = scmp.ne.s32.totalorder %s77, %s93
      %p95 = scmp.eq.s32.totalorder %s19, 0
      %p96 = por %p94, %p95
      %s97 = sadd.s32 %s21, 1
      %s98 = smul.u32 %s97, 2
      %p99 = scmp.lt.s32.totalorder %s98, 7
      %s100 = scalar_select %p99, %s98, 7
      %s101 = sadd.s32 %s28, 1
      %s102 = smul.u32 %s101, 2
      %p103 = scmp.lt.s32.totalorder %s102, 7
      %s104 = scalar_select %p103, %s102, 7
      %s105 = ssub.s32 %s20, %s32
      %s106 = ssub.s32 %s100, %s104
      %s107 = sor.u32 %s105, %s106
      %p108 = scmp.eq.s32.totalorder %s107, 0
      %s110 = sadd.s32 %s109, 1
      %s111 = scalar_select %p108, %s109, %s110
      %p114 = pneg %p108
      %p115 = scmp.eq.s32.totalorder %s13, 7
      %p116 = por %p114, %p115
      %p117 = scmp.ne.s32.totalorder %s109, %s112
      %p118 = scmp.eq.s32.totalorder %s13, 0
      %p119 = por %p117, %p118
      %p120 = scmp.ne.s32.totalorder %s109, %s112
      %p121 = scmp.eq.s32.totalorder %s18, 7
      %p122 = por %p120, %p121
      %p123 = scmp.ne.s32.totalorder %s112, %s113
      %p124 = scmp.eq.s32.totalorder %s18, 0
      %p125 = por %p123, %p124
      %p126 = scmp.ne.s32.totalorder %s112, %s113
      %p127 = scmp.eq.s32.totalorder %s19, 7
      %p128 = por %p126, %p127
      %p130 = scmp.ne.s32.totalorder %s113, %s129
      %p131 = scmp.eq.s32.totalorder %s19, 0
      %p132 = por %p130, %p131
      %s134 = sadd.s32 %s133, 1
      %p137 = scmp.eq.s32.totalorder %s13, 7
      %p138 = scmp.ne.s32.totalorder %s133, %s135
      %p139 = scmp.eq.s32.totalorder %s13, 0
      %p140 = por %p138, %p139
      %p141 = scmp.ne.s32.totalorder %s133, %s135
      %p142 = scmp.eq.s32.totalorder %s18, 7
      %p143 = por %p141, %p142
      %p144 = scmp.ne.s32.totalorder %s135, %s136
      %p145 = scmp.eq.s32.totalorder %s18, 0
      %p146 = por %p144, %p145
      %p147 = scmp.ne.s32.totalorder %s135, %s136
      %p148 = scmp.eq.s32.totalorder %s19, 7
      %p149 = por %p147, %p148
      %p151 = scmp.ne.s32.totalorder %s136, %s150
      %p152 = scmp.eq.s32.totalorder %s19, 0
      %p153 = por %p151, %p152
      %s154 = ssub.s32 %s20, %s32
      %s155 = ssub.s32 %s21, %s28
      %s156 = sor.u32 %s154, %s155
      %p157 = scmp.eq.s32.totalorder %s156, 0
      %s159 = sadd.s32 %s158, 1
      %s160 = scalar_select %p157, %s158, %s159
      %p163 = pneg %p157
      %p164 = scmp.eq.s32.totalorder %s13, 7
      %p165 = por %p163, %p164
      %p166 = scmp.ne.s32.totalorder %s158, %s161
      %p167 = scmp.eq.s32.totalorder %s13, 0
      %p168 = por %p166, %p167
      %p169 = scmp.ne.s32.totalorder %s158, %s161
      %p170 = scmp.eq.s32.totalorder %s18, 7
      %p171 = por %p169, %p170
      %p172 = scmp.ne.s32.totalorder %s161, %s162
      %p173 = scmp.eq.s32.totalorder %s18, 0
      %p174 = por %p172, %p173
      %p175 = scmp.ne.s32.totalorder %s161, %s162
      %p176 = scmp.eq.s32.totalorder %s19, 7
      %p177 = por %p175, %p176
      %p179 = scmp.ne.s32.totalorder %s162, %s178
      %p180 = scmp.eq.s32.totalorder %s19, 0
      %p181 = por %p179, %p180
      %p182 = scmp.le.s32.totalorder 1, %s13
      %p183 = scmp.lt.s32.totalorder %s13, 9
      %p184 = pnand %p182, %p183
      %p185 = pneg %p184
      // Predicated region
      $region9: #{tpu_custom_call.1} parent=5 // pred_check
        _
      $region10: #{tpu_custom_call.1} parent=5 // pred_check_branch
        %187 = sbr.rel (%p184) target = $region12
      $region11: #{tpu_custom_call.1} parent=5 // pred_region
        %s188 = ssub.s32 %s13, 1
        // Predicated region
        $region13: #{tpu_custom_call.1} parent=11 // pred_check
          %p189 = pneg %p146
        $region14: #{tpu_custom_call.1} parent=11 // pred_check_branch
          %191 = sbr.rel (%p189) target = $region16
        $region15: #{tpu_custom_call.1} parent=11 // pred_region
          _
        $region16: #{tpu_custom_call.1} parent=11 // pred_fallthru
          _
      $region12: #{tpu_custom_call.1} parent=5 // pred_fallthru
        _
      %p192 = scmp.lt.s32.totalorder %s13, 8
      // Predicated region
      $region17: #{tpu_custom_call.1} parent=5 // pred_check
        %p193 = pneg %p192
      $region18: #{tpu_custom_call.1} parent=5 // pred_check_branch
        %195 = sbr.rel (%p193) target = $region20
      $region19: #{tpu_custom_call.1} parent=5 // pred_region
        // Predicated region
        $region21: #{tpu_custom_call.1} parent=19 // pred_check
          %p196 = pneg %p47
        $region22: #{tpu_custom_call.1} parent=19 // pred_check_branch
          %198 = sbr.rel (%p196) target = $region24
        $region23: #{tpu_custom_call.1} parent=19 // pred_region
          %s199 = smul.u32 2, %s21
          %p200 = scmp.lt.s32.totalorder %s20, 1
          %s201 = scalar_select %p200, %s20, 1
          %p202 = scmp.lt.s32.totalorder %s199, 7
          %s203 = scalar_select %p202, %s199, 7
          %s204 = smul.addr %s203, 2
          %s205 = smul.addr %s201, 16
          %s206 = sadd.s32 %s204, %s205
          %s207 = smul.addr %s206, 8
          %s208 = scalar_lea.vmem %s0, %s207
          %s209 = smul.u32 2, %s21
        $region24: #{tpu_custom_call.1} parent=19 // pred_fallthru
          _
        // Predicated region
        $region25: #{tpu_custom_call.1} parent=19 // pred_check
          %p210 = pneg %p83
        $region26: #{tpu_custom_call.1} parent=19 // pred_check_branch
          %212 = sbr.rel (%p210) target = $region28
        $region27: #{tpu_custom_call.1} parent=19 // pred_region
          %s213 = smul.u32 %s21, 2
          %s214 = ssub.s32 %s213, 1
          %p215 = scmp.gt.s32.totalorder %s214, 0
          %s216 = scalar_select %p215, %s214, 0
          %p217 = scmp.lt.s32.totalorder %s20, 1
          %s218 = scalar_select %p217, %s20, 1
          %p219 = scmp.lt.s32.totalorder %s216, 7
          %s220 = scalar_select %p219, %s216, 7
          %s221 = smul.addr %s220, 2
          %s222 = smul.addr %s218, 16
          %s223 = sadd.s32 %s221, %s222
          %s224 = smul.addr %s223, 8
          %s225 = scalar_lea.vmem %s1, %s224
          %s226 = smul.u32 %s21, 2
          %s227 = ssub.s32 %s226, 1
          %p228 = scmp.gt.s32.totalorder %s227, 0
          %s229 = scalar_select %p228, %s227, 0
        $region28: #{tpu_custom_call.1} parent=19 // pred_fallthru
          _
        // Predicated region
        $region29: #{tpu_custom_call.1} parent=19 // pred_check
          %p230 = pneg %p119
        $region30: #{tpu_custom_call.1} parent=19 // pred_check_branch
          %232 = sbr.rel (%p230) target = $region32
        $region31: #{tpu_custom_call.1} parent=19 // pred_region
          %s233 = sadd.s32 %s21, 1
          %s234 = smul.u32 %s233, 2
          %p235 = scmp.lt.s32.totalorder %s234, 7
          %s236 = scalar_select %p235, %s234, 7
          %p237 = scmp.lt.s32.totalorder %s20, 1
          %s238 = scalar_select %p237, %s20, 1
          %p239 = scmp.lt.s32.totalorder %s236, 7
          %s240 = scalar_select %p239, %s236, 7
          %s241 = smul.addr %s240, 2
          %s242 = smul.addr %s238, 16
          %s243 = sadd.s32 %s241, %s242
          %s244 = smul.addr %s243, 8
          %s245 = scalar_lea.vmem %s2, %s244
          %s246 = sadd.s32 %s21, 1
          %s247 = smul.u32 %s246, 2
          %p248 = scmp.lt.s32.totalorder %s247, 7
          %s249 = scalar_select %p248, %s247, 7
        $region32: #{tpu_custom_call.1} parent=19 // pred_fallthru
          _
      $region20: #{tpu_custom_call.1} parent=5 // pred_fallthru
        _
      %p250 = scmp.le.s32.totalorder 1, %s13
      %p251 = scmp.lt.s32.totalorder %s13, 9
      %p252 = pnand %p250, %p251
      %p253 = pneg %p252
      // Predicated region
      $region33: #{tpu_custom_call.1} parent=5 // pred_check
        _
      $region34: #{tpu_custom_call.1} parent=5 // pred_check_branch
        %255 = sbr.rel (%p252) target = $region36
      $region35: #{tpu_custom_call.1} parent=5 // pred_region
        %s256 = ssub.s32 %s13, 1
        %s257 = smul.u32 2, %s23
        %p258 = scmp.lt.s32.totalorder %s22, 1
        %s259 = scalar_select %p258, %s22, 1
        %p260 = scmp.lt.s32.totalorder %s257, 7
        %s261 = scalar_select %p260, %s257, 7
        %s262 = smul.addr %s261, 2
        %s263 = smul.addr %s259, 16
        %s264 = sadd.s32 %s262, %s263
        %s265 = smul.addr %s264, 8
        %s266 = scalar_lea.vmem %s0, %s265
        %p267 = pneg %p53
        %p268 = pneg %p50
        %s269 = smul.u32 %s23, 2
        %s270 = ssub.s32 %s269, 1
        %p271 = scmp.gt.s32.totalorder %s270, 0
        %s272 = scalar_select %p271, %s270, 0
        %p273 = scmp.lt.s32.totalorder %s22, 1
        %s274 = scalar_select %p273, %s22, 1
        %p275 = scmp.lt.s32.totalorder %s272, 7
        %s276 = scalar_select %p275, %s272, 7
        %s277 = smul.addr %s276, 2
        %s278 = smul.addr %s274, 16
        %s279 = sadd.s32 %s277, %s278
        %s280 = smul.addr %s279, 8
        %s281 = scalar_lea.vmem %s1, %s280
        %p282 = pneg %p89
        %p283 = pneg %p86
        %s284 = sadd.s32 %s23, 1
        %s285 = smul.u32 %s284, 2
        %p286 = scmp.lt.s32.totalorder %s285, 7
        %s287 = scalar_select %p286, %s285, 7
        %p288 = scmp.lt.s32.totalorder %s22, 1
        %s289 = scalar_select %p288, %s22, 1
        %p290 = scmp.lt.s32.totalorder %s287, 7
        %s291 = scalar_select %p290, %s287, 7
        %s292 = smul.addr %s291, 2
        %s293 = smul.addr %s289, 16
        %s294 = sadd.s32 %s292, %s293
        %s295 = smul.addr %s294, 8
        %s296 = scalar_lea.vmem %s2, %s295
        %p297 = pneg %p125
        %p298 = pneg %p122
        %p299 = pneg %p146
        %p300 = pneg %p143
        %p301 = pneg %p174
        %p302 = pneg %p171
        %s303 = sand.u32 %s161, 1
        %s304 = scalar_lea.sflag [#allocation5], %s303
        %s305 = sand.u32 %s161, 1
        %s306 = smul.addr %s305, 16
        %s307 = scalar_lea.vmem [#allocation4], %s306
        %s308 = smul.u32 2, %s23
        %p309 = scmp.lt.s32.totalorder %s22, 1
        %s310 = scalar_select %p309, %s22, 1
        %p311 = scmp.lt.s32.totalorder %s308, 7
        %s312 = scalar_select %p311, %s308, 7
        %s313 = smul.addr %s312, 2
        %s314 = smul.addr %s310, 16
        %s315 = sadd.s32 %s313, %s314
        %s316 = smul.addr %s315, 8
        %s317 = scalar_lea.vmem %s0, %s316
        %s318 = smul.u32 2, %s23
        %s319 = smul.u32 %s23, 2
        %s320 = ssub.s32 %s319, 1
        %p321 = scmp.gt.s32.totalorder %s320, 0
        %s322 = scalar_select %p321, %s320, 0
        %p323 = scmp.lt.s32.totalorder %s22, 1
        %s324 = scalar_select %p323, %s22, 1
        %p325 = scmp.lt.s32.totalorder %s322, 7
        %s326 = scalar_select %p325, %s322, 7
        %s327 = smul.addr %s326, 2
        %s328 = smul.addr %s324, 16
        %s329 = sadd.s32 %s327, %s328
        %s330 = smul.addr %s329, 8
        %s331 = scalar_lea.vmem %s1, %s330
        %s332 = smul.u32 %s23, 2
        %s333 = ssub.s32 %s332, 1
        %p334 = scmp.gt.s32.totalorder %s333, 0
        %s335 = scalar_select %p334, %s333, 0
        %s336 = sadd.s32 %s23, 1
        %s337 = smul.u32 %s336, 2
        %p338 = scmp.lt.s32.totalorder %s337, 7
        %s339 = scalar_select %p338, %s337, 7
        %p340 = scmp.lt.s32.totalorder %s22, 1
        %s341 = scalar_select %p340, %s22, 1
        %p342 = scmp.lt.s32.totalorder %s339, 7
        %s343 = scalar_select %p342, %s339, 7
        %s344 = smul.addr %s343, 2
        %s345 = smul.addr %s341, 16
        %s346 = sadd.s32 %s344, %s345
        %s347 = smul.addr %s346, 8
        %s348 = scalar_lea.vmem %s2, %s347
        %s349 = sadd.s32 %s23, 1
        %s350 = smul.u32 %s349, 2
        %p351 = scmp.lt.s32.totalorder %s350, 7
        %s352 = scalar_select %p351, %s350, 7
        %s353 = smul.u32 2, %s23
        %p354 = scmp.gt.s32.totalorder %s23, 0
        %s355 = scalar_select %p354, 1.0, 0.0
        %p356 = scmp.lt.s32.totalorder %s23, 3
        %s357 = scalar_select %p356, 1.0, 0.0
        %s358 = scalar_lea.vmem %s331, 8
        %v359 = vld [vmem:[%s358] sm:$0xff]
        %v360 = vstv %s355
        %v361 = vmul.f32 %v359, %v360
        %v362 = vld [vmem:[%s348] sm:$0xff]
        %v363 = vstv %s357
        %v364 = vmul.f32 %v362, %v363
        %vm365 = vcmask 516096
        %366 = vst.msk [vmem:[#allocation2] sm:$0x1] %vm365, 0.0
        %367 = vst.msk [vmem:[#allocation2 + $0x10] sm:$0x1] %vm365, 0.0
        %s368 = scalar_lea.vmem %s317, 8
        %v369 = vld [vmem:[%s368] sm:$0x7f]
        %v371 = vrot.slane %v369, 7
        %s373 = scalar_lea.vmem [#allocation2], 16
        %vm374 = vcmask 523265
        %375 = vst.msk [vmem:[%s373] sm:$0xfe] %vm374, %v371
        %v377 = vrot.slane %v361, 7
        %379 = vst.msk [vmem:[#allocation2] sm:$0xfe] %vm374, %v377
        %vm380 = vcmask 1040896
        %381 = vst.msk [vmem:[#allocation2] sm:$0x1] %vm380, 0.0
        %382 = vst.msk [vmem:[#allocation2 + $0x10] sm:$0x1] %vm380, 0.0
        %v383 = vld [vmem:[%s317] sm:$0x7f]
        %v384 = vld [vmem:[%s317 + $0x10] sm:$0x7f]
        %v387 = vrot.slane %v383, 7
        %v388 = vrot.slane %v384, 7
        %389 = vrot.lane.b32.xlu0 %v387, 64
        %v390 = vpop.permute.xlu0 %389
        %391 = vrot.lane.b32.xlu0 %v388, 64
        %v392 = vpop.permute.xlu0 %391
        %vm395 = vcmask 1048065
        %396 = vst.msk [vmem:[#allocation2] sm:$0xfe] %vm395, %v390
        %397 = vst.msk [vmem:[#allocation2 + $0x10] sm:$0xfe] %vm395, %v392
        %398 = vst.msk [vmem:[#allocation2 + $0x8] sm:$0x1] %vm365, 0.0
        %399 = vst.msk [vmem:[#allocation2 + $0x18] sm:$0x1] %vm365, 0.0
        %v400 = vld [vmem:[%s368] sm:$0x7f]
        %v401 = vld [vmem:[%s368 + $0x10] sm:$0x7f]
        %v404 = vrot.slane %v400, 7
        %v405 = vrot.slane %v401, 7
        %408 = vst.msk [vmem:[#allocation2 + $0x8] sm:$0xfe] %vm374, %v404
        %409 = vst.msk [vmem:[#allocation2 + $0x18] sm:$0xfe] %vm374, %v405
        %410 = vst.msk [vmem:[#allocation2 + $0x8] sm:$0x1] %vm380, 0.0
        %411 = vst.msk [vmem:[#allocation2 + $0x18] sm:$0x1] %vm380, 0.0
        %s412 = scalar_lea.vmem %s317, 16
        %v413 = vld [vmem:[%s412] sm:$0x7f]
        %v415 = vrot.slane %v413, 7
        %416 = vrot.lane.b32.xlu0 %v415, 64
        %v417 = vpop.permute.xlu0 %416
        %419 = vst.msk [vmem:[#allocation2 + $0x8] sm:$0xfe] %vm395, %v417
        %v421 = vrot.slane %v364, 7
        %422 = vrot.lane.b32.xlu0 %v421, 64
        %v423 = vpop.permute.xlu0 %422
        %425 = vst.msk [vmem:[%s373 + $0x8] sm:$0xfe] %vm395, %v423
        %v426 = vld [vmem:[#allocation2] sm:$0xff]
        %v427 = vld [vmem:[#allocation2 + $0x8] sm:$0xff]
        %v428 = vld [vmem:[#allocation2 + $0x10] sm:$0xff]
        %v429 = vld [vmem:[#allocation2 + $0x18] sm:$0xff]
        %v430 = vld [vmem:[%s3] sm:$0xff]
        %v431 = vld [vmem:[%s3 + $0x8] sm:$0xff]
        %v432 = vld [vmem:[%s3 + $0x10] sm:$0xff]
        %v433 = vld [vmem:[%s3 + $0x18] sm:$0xff]
        %v434 = vld [vmem:[%s3 + $0x20] sm:$0xff]
        %v435 = vld [vmem:[%s3 + $0x28] sm:$0xff]
        %v436 = vld [vmem:[%s3 + $0x30] sm:$0xff]
        %v437 = vld [vmem:[%s3 + $0x38] sm:$0xff]
        %v438 = vld [vmem:[%s3 + $0x40] sm:$0xff]
        %v439 = vld [vmem:[%s3 + $0x48] sm:$0xff]
        %v440 = vld [vmem:[%s3 + $0x50] sm:$0xff]
        %v441 = vld [vmem:[%s3 + $0x58] sm:$0xff]
        %v442 = vld [vmem:[%s3 + $0x60] sm:$0xff]
        %v443 = vld [vmem:[%s3 + $0x68] sm:$0xff]
        %v444 = vld [vmem:[%s3 + $0x70] sm:$0xff]
        %v445 = vld [vmem:[%s3 + $0x78] sm:$0xff]
        %v446 = vld [vmem:[%s3 + $0x80] sm:$0xff]
        %v447 = vld [vmem:[%s3 + $0x88] sm:$0xff]
        %v448 = vld [vmem:[%s3 + $0x90] sm:$0xff]
        %v449 = vld [vmem:[%s3 + $0x98] sm:$0xff]
        %v450 = vld [vmem:[%s3 + $0xa0] sm:$0xff]
        %v451 = vld [vmem:[%s3 + $0xa8] sm:$0xff]
        %v452 = vld [vmem:[%s3 + $0xb0] sm:$0xff]
        %v453 = vld [vmem:[%s3 + $0xb8] sm:$0xff]
        %v454 = vld [vmem:[%s3 + $0xc0] sm:$0xff]
        %v455 = vld [vmem:[%s3 + $0xc8] sm:$0xff]
        %v456 = vld [vmem:[%s3 + $0xd0] sm:$0xff]
        %v457 = vld [vmem:[%s3 + $0xd8] sm:$0xff]
        %v458 = vld [vmem:[%s3 + $0xe0] sm:$0xff]
        %v459 = vld [vmem:[%s3 + $0xe8] sm:$0xff]
        %v460 = vld [vmem:[%s3 + $0xf0] sm:$0xff]
        %v461 = vld [vmem:[%s3 + $0xf8] sm:$0xff]
        %462 = vmatprep.subr.mxu0 0.0
        %v463 = vand.u32 %v430, 4294901760
        %464 = vmatpush1.msra.mxu0 %v463
        %465 = vmatprep.subr.mxu0 0.0
        %v466 = vand.u32 %v431, 4294901760
        %467 = vmatpush1.msra.mxu0 %v466
        %468 = vmatprep.subr.mxu0 0.0
        %v469 = vand.u32 %v432, 4294901760
        %470 = vmatpush1.msra.mxu0 %v469
        %471 = vmatprep.subr.mxu0 0.0
        %v472 = vand.u32 %v433, 4294901760
        %473 = vmatpush1.msra.mxu0 %v472
        %474 = vmatprep.subr.mxu0 0.0
        %v475 = vand.u32 %v434, 4294901760
        %476 = vmatpush1.msra.mxu0 %v475
        %477 = vmatprep.subr.mxu0 0.0
        %v478 = vand.u32 %v435, 4294901760
        %479 = vmatpush1.msra.mxu0 %v478
        %480 = vmatprep.subr.mxu0 0.0
        %v481 = vand.u32 %v436, 4294901760
        %482 = vmatpush1.msra.mxu0 %v481
        %483 = vmatprep.subr.mxu0 0.0
        %v484 = vand.u32 %v437, 4294901760
        %485 = vmatpush1.msra.mxu0 %v484
        %486 = vmatprep.subr.mxu0 0.0
        %v487 = vand.u32 %v438, 4294901760
        %488 = vmatpush1.msra.mxu0 %v487
        %489 = vmatprep.subr.mxu0 0.0
        %v490 = vand.u32 %v439, 4294901760
        %491 = vmatpush1.msra.mxu0 %v490
        %492 = vmatprep.subr.mxu0 0.0
        %v493 = vand.u32 %v440, 4294901760
        %494 = vmatpush1.msra.mxu0 %v493
        %495 = vmatprep.subr.mxu0 0.0
        %v496 = vand.u32 %v441, 4294901760
        %497 = vmatpush1.msra.mxu0 %v496
        %498 = vmatprep.subr.mxu0 0.0
        %v499 = vand.u32 %v442, 4294901760
        %500 = vmatpush1.msra.mxu0 %v499
        %501 = vmatprep.subr.mxu0 0.0
        %v502 = vand.u32 %v443, 4294901760
        %503 = vmatpush1.msra.mxu0 %v502
        %504 = vmatprep.subr.mxu0 0.0
        %v505 = vand.u32 %v444, 4294901760
        %506 = vmatpush1.msra.mxu0 %v505
        %507 = vmatprep.subr.mxu0 0.0
        %v508 = vand.u32 %v445, 4294901760
        %509 = vmatpush1.msra.mxu0 %v508
        %510 = vmatprep.subr.mxu0 0.0
        %v511 = vand.u32 %v446, 4294901760
        %512 = vmatpush1.msra.mxu0 %v511
        %513 = vmatprep.subr.mxu0 0.0
        %v514 = vand.u32 %v447, 4294901760
        %515 = vmatpush1.msra.mxu0 %v514
        %516 = vmatprep.subr.mxu0 0.0
        %v517 = vand.u32 %v448, 4294901760
        %518 = vmatpush1.msra.mxu0 %v517
        %519 = vmatprep.subr.mxu0 0.0
        %v520 = vand.u32 %v449, 4294901760
        %521 = vmatpush1.msra.mxu0 %v520
        %522 = vmatprep.subr.mxu0 0.0
        %v523 = vand.u32 %v450, 4294901760
        %524 = vmatpush1.msra.mxu0 %v523
        %525 = vmatprep.subr.mxu0 0.0
        %v526 = vand.u32 %v451, 4294901760
        %527 = vmatpush1.msra.mxu0 %v526
        %528 = vmatprep.subr.mxu0 0.0
        %v529 = vand.u32 %v452, 4294901760
        %530 = vmatpush1.msra.mxu0 %v529
        %531 = vmatprep.subr.mxu0 0.0
        %v532 = vand.u32 %v453, 4294901760
        %533 = vmatpush1.msra.mxu0 %v532
        %534 = vmatprep.subr.mxu0 0.0
        %v535 = vand.u32 %v454, 4294901760
        %536 = vmatpush1.msra.mxu0 %v535
        %537 = vmatprep.subr.mxu0 0.0
        %v538 = vand.u32 %v455, 4294901760
        %539 = vmatpush1.msra.mxu0 %v538
        %540 = vmatprep.subr.mxu0 0.0
        %v541 = vand.u32 %v456, 4294901760
        %542 = vmatpush1.msra.mxu0 %v541
        %543 = vmatprep.subr.mxu0 0.0
        %v544 = vand.u32 %v457, 4294901760
        %545 = vmatpush1.msra.mxu0 %v544
        %546 = vmatprep.subr.mxu0 0.0
        %v547 = vand.u32 %v458, 4294901760
        %548 = vmatpush1.msra.mxu0 %v547
        %549 = vmatprep.subr.mxu0 0.0
        %v550 = vand.u32 %v459, 4294901760
        %551 = vmatpush1.msra.mxu0 %v550
        %552 = vmatprep.subr.mxu0 0.0
        %v553 = vand.u32 %v460, 4294901760
        %554 = vmatpush1.msra.mxu0 %v553
        %555 = vmatprep.subr.mxu0 0.0
        %v556 = vand.u32 %v461, 4294901760
        %557 = vmatpush1.msra.mxu0 %v556
        %v558 = vand.u32 %v427, 4294901760
        %v559 = vsub.f32 %v427, %v558
        %v560 = vand.u32 %v559, 4294901760
        %v561 = vsub.f32 %v559, %v560
        %v562 = vand.u32 %v561, 4294901760
        %563 = vmatprep.mubr.f32.mxu0 %v562
        %v564 = vand.u32 %v426, 4294901760
        %v565 = vsub.f32 %v426, %v564
        %v566 = vand.u32 %v565, 4294901760
        %v567 = vsub.f32 %v565, %v566
        %v568 = vand.u32 %v567, 4294901760
        %569 = vmatmul.mubr.f32.gmra.mrb[0].mxu0 %v568
        %v570 = vpop.f32.mrb[0].mxu0
        %v571 = vadd.f32 0.0, %v570
        %v572 = vpop.f32.mrb[0].mxu0
        %v573 = vand.u32 %v429, 4294901760
        %v574 = vsub.f32 %v429, %v573
        %v575 = vand.u32 %v574, 4294901760
        %v576 = vsub.f32 %v574, %v575
        %v577 = vand.u32 %v576, 4294901760
        %578 = vmatprep.mubr.f32.mxu0 %v577
        %v579 = vand.u32 %v428, 4294901760
        %v580 = vsub.f32 %v428, %v579
        %v581 = vand.u32 %v580, 4294901760
        %v582 = vsub.f32 %v580, %v581
        %v583 = vand.u32 %v582, 4294901760
        %584 = vmatmul.mubr.f32.gmra.mrb[0].mxu0 %v583
        %v585 = vpop.f32.mrb[0].mxu0
        %v586 = vadd.f32 0.0, %v585
        %v587 = vpop.f32.mrb[0].mxu0
        %588 = vdwg.mxu0
        %589 = vmatprep.subr.mxu0 0.0
        %v590 = vand.u32 %v430, 4294901760
        %v591 = vsub.f32 %v430, %v590
        %v592 = vand.u32 %v591, 4294901760
        %v593 = vsub.f32 %v591, %v592
        %v594 = vand.u32 %v593, 4294901760
        %595 = vmatpush1.msra.mxu0 %v594
        %596 = vmatprep.subr.mxu0 0.0
        %v597 = vand.u32 %v431, 4294901760
        %v598 = vsub.f32 %v431, %v597
        %v599 = vand.u32 %v598, 4294901760
        %v600 = vsub.f32 %v598, %v599
        %v601 = vand.u32 %v600, 4294901760
        %602 = vmatpush1.msra.mxu0 %v601
        %603 = vmatprep.subr.mxu0 0.0
        %v604 = vand.u32 %v432, 4294901760
        %v605 = vsub.f32 %v432, %v604
        %v606 = vand.u32 %v605, 4294901760
        %v607 = vsub.f32 %v605, %v606
        %v608 = vand.u32 %v607, 4294901760
        %609 = vmatpush1.msra.mxu0 %v608
        %610 = vmatprep.subr.mxu0 0.0
        %v611 = vand.u32 %v433, 4294901760
        %v612 = vsub.f32 %v433, %v611
        %v613 = vand.u32 %v612, 4294901760
        %v614 = vsub.f32 %v612, %v613
        %v615 = vand.u32 %v614, 4294901760
        %616 = vmatpush1.msra.mxu0 %v615
        %617 = vmatprep.subr.mxu0 0.0
        %v618 = vand.u32 %v434, 4294901760
        %v619 = vsub.f32 %v434, %v618
        %v620 = vand.u32 %v619, 4294901760
        %v621 = vsub.f32 %v619, %v620
        %v622 = vand.u32 %v621, 4294901760
        %623 = vmatpush1.msra.mxu0 %v622
        %624 = vmatprep.subr.mxu0 0.0
        %v625 = vand.u32 %v435, 4294901760
        %v626 = vsub.f32 %v435, %v625
        %v627 = vand.u32 %v626, 4294901760
        %v628 = vsub.f32 %v626, %v627
        %v629 = vand.u32 %v628, 4294901760
        %630 = vmatpush1.msra.mxu0 %v629
        %631 = vmatprep.subr.mxu0 0.0
        %v632 = vand.u32 %v436, 4294901760
        %v633 = vsub.f32 %v436, %v632
        %v634 = vand.u32 %v633, 4294901760
        %v635 = vsub.f32 %v633, %v634
        %v636 = vand.u32 %v635, 4294901760
        %637 = vmatpush1.msra.mxu0 %v636
        %638 = vmatprep.subr.mxu0 0.0
        %v639 = vand.u32 %v437, 4294901760
        %v640 = vsub.f32 %v437, %v639
        %v641 = vand.u32 %v640, 4294901760
        %v642 = vsub.f32 %v640, %v641
        %v643 = vand.u32 %v642, 4294901760
        %644 = vmatpush1.msra.mxu0 %v643
        %645 = vmatprep.subr.mxu0 0.0
        %v646 = vand.u32 %v438, 4294901760
        %v647 = vsub.f32 %v438, %v646
        %v648 = vand.u32 %v647, 4294901760
        %v649 = vsub.f32 %v647, %v648
        %v650 = vand.u32 %v649, 4294901760
        %651 = vmatpush1.msra.mxu0 %v650
        %652 = vmatprep.subr.mxu0 0.0
        %v653 = vand.u32 %v439, 4294901760
        %v654 = vsub.f32 %v439, %v653
        %v655 = vand.u32 %v654, 4294901760
        %v656 = vsub.f32 %v654, %v655
        %v657 = vand.u32 %v656, 4294901760
        %658 = vmatpush1.msra.mxu0 %v657
        %659 = vmatprep.subr.mxu0 0.0
        %v660 = vand.u32 %v440, 4294901760
        %v661 = vsub.f32 %v440, %v660
        %v662 = vand.u32 %v661, 4294901760
        %v663 = vsub.f32 %v661, %v662
        %v664 = vand.u32 %v663, 4294901760
        %665 = vmatpush1.msra.mxu0 %v664
        %666 = vmatprep.subr.mxu0 0.0
        %v667 = vand.u32 %v441, 4294901760
        %v668 = vsub.f32 %v441, %v667
        %v669 = vand.u32 %v668, 4294901760
        %v670 = vsub.f32 %v668, %v669
        %v671 = vand.u32 %v670, 4294901760
        %672 = vmatpush1.msra.mxu0 %v671
        %673 = vmatprep.subr.mxu0 0.0
        %v674 = vand.u32 %v442, 4294901760
        %v675 = vsub.f32 %v442, %v674
        %v676 = vand.u32 %v675, 4294901760
        %v677 = vsub.f32 %v675, %v676
        %v678 = vand.u32 %v677, 4294901760
        %679 = vmatpush1.msra.mxu0 %v678
        %680 = vmatprep.subr.mxu0 0.0
        %v681 = vand.u32 %v443, 4294901760
        %v682 = vsub.f32 %v443, %v681
        %v683 = vand.u32 %v682, 4294901760
        %v684 = vsub.f32 %v682, %v683
        %v685 = vand.u32 %v684, 4294901760
        %686 = vmatpush1.msra.mxu0 %v685
        %687 = vmatprep.subr.mxu0 0.0
        %v688 = vand.u32 %v444, 4294901760
        %v689 = vsub.f32 %v444, %v688
        %v690 = vand.u32 %v689, 4294901760
        %v691 = vsub.f32 %v689, %v690
        %v692 = vand.u32 %v691, 4294901760
        %693 = vmatpush1.msra.mxu0 %v692
        %694 = vmatprep.subr.mxu0 0.0
        %v695 = vand.u32 %v445, 4294901760
        %v696 = vsub.f32 %v445, %v695
        %v697 = vand.u32 %v696, 4294901760
        %v698 = vsub.f32 %v696, %v697
        %v699 = vand.u32 %v698, 4294901760
        %700 = vmatpush1.msra.mxu0 %v699
        %701 = vmatprep.subr.mxu0 0.0
        %v702 = vand.u32 %v446, 4294901760
        %v703 = vsub.f32 %v446, %v702
        %v704 = vand.u32 %v703, 4294901760
        %v705 = vsub.f32 %v703, %v704
        %v706 = vand.u32 %v705, 4294901760
        %707 = vmatpush1.msra.mxu0 %v706
        %708 = vmatprep.subr.mxu0 0.0
        %v709 = vand.u32 %v447, 4294901760
        %v710 = vsub.f32 %v447, %v709
        %v711 = vand.u32 %v710, 4294901760
        %v712 = vsub.f32 %v710, %v711
        %v713 = vand.u32 %v712, 4294901760
        %714 = vmatpush1.msra.mxu0 %v713
        %715 = vmatprep.subr.mxu0 0.0
        %v716 = vand.u32 %v448, 4294901760
        %v717 = vsub.f32 %v448, %v716
        %v718 = vand.u32 %v717, 4294901760
        %v719 = vsub.f32 %v717, %v718
        %v720 = vand.u32 %v719, 4294901760
        %721 = vmatpush1.msra.mxu0 %v720
        %722 = vmatprep.subr.mxu0 0.0
        %v723 = vand.u32 %v449, 4294901760
        %v724 = vsub.f32 %v449, %v723
        %v725 = vand.u32 %v724, 4294901760
        %v726 = vsub.f32 %v724, %v725
        %v727 = vand.u32 %v726, 4294901760
        %728 = vmatpush1.msra.mxu0 %v727
        %729 = vmatprep.subr.mxu0 0.0
        %v730 = vand.u32 %v450, 4294901760
        %v731 = vsub.f32 %v450, %v730
        %v732 = vand.u32 %v731, 4294901760
        %v733 = vsub.f32 %v731, %v732
        %v734 = vand.u32 %v733, 4294901760
        %735 = vmatpush1.msra.mxu0 %v734
        %736 = vmatprep.subr.mxu0 0.0
        %v737 = vand.u32 %v451, 4294901760
        %v738 = vsub.f32 %v451, %v737
        %v739 = vand.u32 %v738, 4294901760
        %v740 = vsub.f32 %v738, %v739
        %v741 = vand.u32 %v740, 4294901760
        %742 = vmatpush1.msra.mxu0 %v741
        %743 = vmatprep.subr.mxu0 0.0
        %v744 = vand.u32 %v452, 4294901760
        %v745 = vsub.f32 %v452, %v744
        %v746 = vand.u32 %v745, 4294901760
        %v747 = vsub.f32 %v745, %v746
        %v748 = vand.u32 %v747, 4294901760
        %749 = vmatpush1.msra.mxu0 %v748
        %750 = vmatprep.subr.mxu0 0.0
        %v751 = vand.u32 %v453, 4294901760
        %v752 = vsub.f32 %v453, %v751
        %v753 = vand.u32 %v752, 4294901760
        %v754 = vsub.f32 %v752, %v753
        %v755 = vand.u32 %v754, 4294901760
        %756 = vmatpush1.msra.mxu0 %v755
        %757 = vmatprep.subr.mxu0 0.0
        %v758 = vand.u32 %v454, 4294901760
        %v759 = vsub.f32 %v454, %v758
        %v760 = vand.u32 %v759, 4294901760
        %v761 = vsub.f32 %v759, %v760
        %v762 = vand.u32 %v761, 4294901760
        %763 = vmatpush1.msra.mxu0 %v762
        %764 = vmatprep.subr.mxu0 0.0
        %v765 = vand.u32 %v455, 4294901760
        %v766 = vsub.f32 %v455, %v765
        %v767 = vand.u32 %v766, 4294901760
        %v768 = vsub.f32 %v766, %v767
        %v769 = vand.u32 %v768, 4294901760
        %770 = vmatpush1.msra.mxu0 %v769
        %771 = vmatprep.subr.mxu0 0.0
        %v772 = vand.u32 %v456, 4294901760
        %v773 = vsub.f32 %v456, %v772
        %v774 = vand.u32 %v773, 4294901760
        %v775 = vsub.f32 %v773, %v774
        %v776 = vand.u32 %v775, 4294901760
        %777 = vmatpush1.msra.mxu0 %v776
        %778 = vmatprep.subr.mxu0 0.0
        %v779 = vand.u32 %v457, 4294901760
        %v780 = vsub.f32 %v457, %v779
        %v781 = vand.u32 %v780, 4294901760
        %v782 = vsub.f32 %v780, %v781
        %v783 = vand.u32 %v782, 4294901760
        %784 = vmatpush1.msra.mxu0 %v783
        %785 = vmatprep.subr.mxu0 0.0
        %v786 = vand.u32 %v458, 4294901760
        %v787 = vsub.f32 %v458, %v786
        %v788 = vand.u32 %v787, 4294901760
        %v789 = vsub.f32 %v787, %v788
        %v790 = vand.u32 %v789, 4294901760
        %791 = vmatpush1.msra.mxu0 %v790
        %792 = vmatprep.subr.mxu0 0.0
        %v793 = vand.u32 %v459, 4294901760
        %v794 = vsub.f32 %v459, %v793
        %v795 = vand.u32 %v794, 4294901760
        %v796 = vsub.f32 %v794, %v795
        %v797 = vand.u32 %v796, 4294901760
        %798 = vmatpush1.msra.mxu0 %v797
        %799 = vmatprep.subr.mxu0 0.0
        %v800 = vand.u32 %v460, 4294901760
        %v801 = vsub.f32 %v460, %v800
        %v802 = vand.u32 %v801, 4294901760
        %v803 = vsub.f32 %v801, %v802
        %v804 = vand.u32 %v803, 4294901760
        %805 = vmatpush1.msra.mxu0 %v804
        %806 = vmatprep.subr.mxu0 0.0
        %v807 = vand.u32 %v461, 4294901760
        %v808 = vsub.f32 %v461, %v807
        %v809 = vand.u32 %v808, 4294901760
        %v810 = vsub.f32 %v808, %v809
        %v811 = vand.u32 %v810, 4294901760
        %812 = vmatpush1.msra.mxu0 %v811
        %v813 = vand.u32 %v427, 4294901760
        %814 = vmatprep.mubr.f32.mxu0 %v813
        %v815 = vand.u32 %v426, 4294901760
        %816 = vmatmul.mubr.f32.gmra.mrb[0].mxu0 %v815
        %v817 = vpop.f32.mrb[0].mxu0
        %v818 = vadd.f32 %v571, %v817
        %v819 = vpop.f32.mrb[0].mxu0
        %v820 = vand.u32 %v429, 4294901760
        %821 = vmatprep.mubr.f32.mxu0 %v820
        %v822 = vand.u32 %v428, 4294901760
        %823 = vmatmul.mubr.f32.gmra.mrb[0].mxu0 %v822
        %v824 = vpop.f32.mrb[0].mxu0
        %v825 = vadd.f32 %v586, %v824
        %v826 = vpop.f32.mrb[0].mxu0
        %827 = vdwg.mxu0
        %828 = vmatprep.subr.mxu0 0.0
        %v829 = vand.u32 %v430, 4294901760
        %v830 = vsub.f32 %v430, %v829
        %831 = vmatpush1.msra.mxu0 %v830
        %832 = vmatprep.subr.mxu0 0.0
        %v833 = vand.u32 %v431, 4294901760
        %v834 = vsub.f32 %v431, %v833
        %835 = vmatpush1.msra.mxu0 %v834
        %836 = vmatprep.subr.mxu0 0.0
        %v837 = vand.u32 %v432, 4294901760
        %v838 = vsub.f32 %v432, %v837
        %839 = vmatpush1.msra.mxu0 %v838
        %840 = vmatprep.subr.mxu0 0.0
        %v841 = vand.u32 %v433, 4294901760
        %v842 = vsub.f32 %v433, %v841
        %843 = vmatpush1.msra.mxu0 %v842
        %844 = vmatprep.subr.mxu0 0.0
        %v845 = vand.u32 %v434, 4294901760
        %v846 = vsub.f32 %v434, %v845
        %847 = vmatpush1.msra.mxu0 %v846
        %848 = vmatprep.subr.mxu0 0.0
        %v849 = vand.u32 %v435, 4294901760
        %v850 = vsub.f32 %v435, %v849
        %851 = vmatpush1.msra.mxu0 %v850
        %852 = vmatprep.subr.mxu0 0.0
        %v853 = vand.u32 %v436, 4294901760
        %v854 = vsub.f32 %v436, %v853
        %855 = vmatpush1.msra.mxu0 %v854
        %856 = vmatprep.subr.mxu0 0.0
        %v857 = vand.u32 %v437, 4294901760
        %v858 = vsub.f32 %v437, %v857
        %859 = vmatpush1.msra.mxu0 %v858
        %860 = vmatprep.subr.mxu0 0.0
        %v861 = vand.u32 %v438, 4294901760
        %v862 = vsub.f32 %v438, %v861
        %863 = vmatpush1.msra.mxu0 %v862
        %864 = vmatprep.subr.mxu0 0.0
        %v865 = vand.u32 %v439, 4294901760
        %v866 = vsub.f32 %v439, %v865
        %867 = vmatpush1.msra.mxu0 %v866
        %868 = vmatprep.subr.mxu0 0.0
        %v869 = vand.u32 %v440, 4294901760
        %v870 = vsub.f32 %v440, %v869
        %871 = vmatpush1.msra.mxu0 %v870
        %872 = vmatprep.subr.mxu0 0.0
        %v873 = vand.u32 %v441, 4294901760
        %v874 = vsub.f32 %v441, %v873
        %875 = vmatpush1.msra.mxu0 %v874
        %876 = vmatprep.subr.mxu0 0.0
        %v877 = vand.u32 %v442, 4294901760
        %v878 = vsub.f32 %v442, %v877
        %879 = vmatpush1.msra.mxu0 %v878
        %880 = vmatprep.subr.mxu0 0.0
        %v881 = vand.u32 %v443, 4294901760
        %v882 = vsub.f32 %v443, %v881
        %883 = vmatpush1.msra.mxu0 %v882
        %884 = vmatprep.subr.mxu0 0.0
        %v885 = vand.u32 %v444, 4294901760
        %v886 = vsub.f32 %v444, %v885
        %887 = vmatpush1.msra.mxu0 %v886
        %888 = vmatprep.subr.mxu0 0.0
        %v889 = vand.u32 %v445, 4294901760
        %v890 = vsub.f32 %v445, %v889
        %891 = vmatpush1.msra.mxu0 %v890
        %892 = vmatprep.subr.mxu0 0.0
        %v893 = vand.u32 %v446, 4294901760
        %v894 = vsub.f32 %v446, %v893
        %895 = vmatpush1.msra.mxu0 %v894
        %896 = vmatprep.subr.mxu0 0.0
        %v897 = vand.u32 %v447, 4294901760
        %v898 = vsub.f32 %v447, %v897
        %899 = vmatpush1.msra.mxu0 %v898
        %900 = vmatprep.subr.mxu0 0.0
        %v901 = vand.u32 %v448, 4294901760
        %v902 = vsub.f32 %v448, %v901
        %903 = vmatpush1.msra.mxu0 %v902
        %904 = vmatprep.subr.mxu0 0.0
        %v905 = vand.u32 %v449, 4294901760
        %v906 = vsub.f32 %v449, %v905
        %907 = vmatpush1.msra.mxu0 %v906
        %908 = vmatprep.subr.mxu0 0.0
        %v909 = vand.u32 %v450, 4294901760
        %v910 = vsub.f32 %v450, %v909
        %911 = vmatpush1.msra.mxu0 %v910
        %912 = vmatprep.subr.mxu0 0.0
        %v913 = vand.u32 %v451, 4294901760
        %v914 = vsub.f32 %v451, %v913
        %915 = vmatpush1.msra.mxu0 %v914
        %916 = vmatprep.subr.mxu0 0.0
        %v917 = vand.u32 %v452, 4294901760
        %v918 = vsub.f32 %v452, %v917
        %919 = vmatpush1.msra.mxu0 %v918
        %920 = vmatprep.subr.mxu0 0.0
        %v921 = vand.u32 %v453, 4294901760
        %v922 = vsub.f32 %v453, %v921
        %923 = vmatpush1.msra.mxu0 %v922
        %924 = vmatprep.subr.mxu0 0.0
        %v925 = vand.u32 %v454, 4294901760
        %v926 = vsub.f32 %v454, %v925
        %927 = vmatpush1.msra.mxu0 %v926
        %928 = vmatprep.subr.mxu0 0.0
        %v929 = vand.u32 %v455, 4294901760
        %v930 = vsub.f32 %v455, %v929
        %931 = vmatpush1.msra.mxu0 %v930
        %932 = vmatprep.subr.mxu0 0.0
        %v933 = vand.u32 %v456, 4294901760
        %v934 = vsub.f32 %v456, %v933
        %935 = vmatpush1.msra.mxu0 %v934
        %936 = vmatprep.subr.mxu0 0.0
        %v937 = vand.u32 %v457, 4294901760
        %v938 = vsub.f32 %v457, %v937
        %939 = vmatpush1.msra.mxu0 %v938
        %940 = vmatprep.subr.mxu0 0.0
        %v941 = vand.u32 %v458, 4294901760
        %v942 = vsub.f32 %v458, %v941
        %943 = vmatpush1.msra.mxu0 %v942
        %944 = vmatprep.subr.mxu0 0.0
        %v945 = vand.u32 %v459, 4294901760
        %v946 = vsub.f32 %v459, %v945
        %947 = vmatpush1.msra.mxu0 %v946
        %948 = vmatprep.subr.mxu0 0.0
        %v949 = vand.u32 %v460, 4294901760
        %v950 = vsub.f32 %v460, %v949
        %951 = vmatpush1.msra.mxu0 %v950
        %952 = vmatprep.subr.mxu0 0.0
        %v953 = vand.u32 %v461, 4294901760
        %v954 = vsub.f32 %v461, %v953
        %955 = vmatpush1.msra.mxu0 %v954
        %v956 = vand.u32 %v427, 4294901760
        %v957 = vsub.f32 %v427, %v956
        %958 = vmatprep.mubr.f32.mxu0 %v957
        %v959 = vand.u32 %v426, 4294901760
        %v960 = vsub.f32 %v426, %v959
        %961 = vmatmul.mubr.f32.gmra.mrb[0].mxu0 %v960
        %v962 = vpop.f32.mrb[0].mxu0
        %v963 = vadd.f32 %v818, %v962
        %v964 = vpop.f32.mrb[0].mxu0
        %v965 = vand.u32 %v429, 4294901760
        %v966 = vsub.f32 %v429, %v965
        %967 = vmatprep.mubr.f32.mxu0 %v966
        %v968 = vand.u32 %v428, 4294901760
        %v969 = vsub.f32 %v428, %v968
        %970 = vmatmul.mubr.f32.gmra.mrb[0].mxu0 %v969
        %v971 = vpop.f32.mrb[0].mxu0
        %v972 = vadd.f32 %v825, %v971
        %v973 = vpop.f32.mrb[0].mxu0
        %974 = vdwg.mxu0
        %975 = vmatprep.subr.mxu0 0.0
        %v976 = vand.u32 %v430, 4294901760
        %977 = vmatpush1.msra.mxu0 %v976
        %978 = vmatprep.subr.mxu0 0.0
        %v979 = vand.u32 %v431, 4294901760
        %980 = vmatpush1.msra.mxu0 %v979
        %981 = vmatprep.subr.mxu0 0.0
        %v982 = vand.u32 %v432, 4294901760
        %983 = vmatpush1.msra.mxu0 %v982
        %984 = vmatprep.subr.mxu0 0.0
        %v985 = vand.u32 %v433, 4294901760
        %986 = vmatpush1.msra.mxu0 %v985
        %987 = vmatprep.subr.mxu0 0.0
        %v988 = vand.u32 %v434, 4294901760
        %989 = vmatpush1.msra.mxu0 %v988
        %990 = vmatprep.subr.mxu0 0.0
        %v991 = vand.u32 %v435, 4294901760
        %992 = vmatpush1.msra.mxu0 %v991
        %993 = vmatprep.subr.mxu0 0.0
        %v994 = vand.u32 %v436, 4294901760
        %995 = vmatpush1.msra.mxu0 %v994
        %996 = vmatprep.subr.mxu0 0.0
        %v997 = vand.u32 %v437, 4294901760
        %998 = vmatpush1.msra.mxu0 %v997
        %999 = vmatprep.subr.mxu0 0.0
        %v1000 = vand.u32 %v438, 4294901760
        %1001 = vmatpush1.msra.mxu0 %v1000
        %1002 = vmatprep.subr.mxu0 0.0
        %v1003 = vand.u32 %v439, 4294901760
        %1004 = vmatpush1.msra.mxu0 %v1003
        %1005 = vmatprep.subr.mxu0 0.0
        %v1006 = vand.u32 %v440, 4294901760
        %1007 = vmatpush1.msra.mxu0 %v1006
        %1008 = vmatprep.subr.mxu0 0.0
        %v1009 = vand.u32 %v441, 4294901760
        %1010 = vmatpush1.msra.mxu0 %v1009
        %1011 = vmatprep.subr.mxu0 0.0
        %v1012 = vand.u32 %v442, 4294901760
        %1013 = vmatpush1.msra.mxu0 %v1012
        %1014 = vmatprep.subr.mxu0 0.0
        %v1015 = vand.u32 %v443, 4294901760
        %1016 = vmatpush1.msra.mxu0 %v1015
        %1017 = vmatprep.subr.mxu0 0.0
        %v1018 = vand.u32 %v444, 4294901760
        %1019 = vmatpush1.msra.mxu0 %v1018
        %1020 = vmatprep.subr.mxu0 0.0
        %v1021 = vand.u32 %v445, 4294901760
        %1022 = vmatpush1.msra.mxu0 %v1021
        %1023 = vmatprep.subr.mxu0 0.0
        %v1024 = vand.u32 %v446, 4294901760
        %1025 = vmatpush1.msra.mxu0 %v1024
        %1026 = vmatprep.subr.mxu0 0.0
        %v1027 = vand.u32 %v447, 4294901760
        %1028 = vmatpush1.msra.mxu0 %v1027
        %1029 = vmatprep.subr.mxu0 0.0
        %v1030 = vand.u32 %v448, 4294901760
        %1031 = vmatpush1.msra.mxu0 %v1030
        %1032 = vmatprep.subr.mxu0 0.0
        %v1033 = vand.u32 %v449, 4294901760
        %1034 = vmatpush1.msra.mxu0 %v1033
        %1035 = vmatprep.subr.mxu0 0.0
        %v1036 = vand.u32 %v450, 4294901760
        %1037 = vmatpush1.msra.mxu0 %v1036
        %1038 = vmatprep.subr.mxu0 0.0
        %v1039 = vand.u32 %v451, 4294901760
        %1040 = vmatpush1.msra.mxu0 %v1039
        %1041 = vmatprep.subr.mxu0 0.0
        %v1042 = vand.u32 %v452, 4294901760
        %1043 = vmatpush1.msra.mxu0 %v1042
        %1044 = vmatprep.subr.mxu0 0.0
        %v1045 = vand.u32 %v453, 4294901760
        %1046 = vmatpush1.msra.mxu0 %v1045
        %1047 = vmatprep.subr.mxu0 0.0
        %v1048 = vand.u32 %v454, 4294901760
        %1049 = vmatpush1.msra.mxu0 %v1048
        %1050 = vmatprep.subr.mxu0 0.0
        %v1051 = vand.u32 %v455, 4294901760
        %1052 = vmatpush1.msra.mxu0 %v1051
        %1053 = vmatprep.subr.mxu0 0.0
        %v1054 = vand.u32 %v456, 4294901760
        %1055 = vmatpush1.msra.mxu0 %v1054
        %1056 = vmatprep.subr.mxu0 0.0
        %v1057 = vand.u32 %v457, 4294901760
        %1058 = vmatpush1.msra.mxu0 %v1057
        %1059 = vmatprep.subr.mxu0 0.0
        %v1060 = vand.u32 %v458, 4294901760
        %1061 = vmatpush1.msra.mxu0 %v1060
        %1062 = vmatprep.subr.mxu0 0.0
        %v1063 = vand.u32 %v459, 4294901760
        %1064 = vmatpush1.msra.mxu0 %v1063
        %1065 = vmatprep.subr.mxu0 0.0
        %v1066 = vand.u32 %v460, 4294901760
        %1067 = vmatpush1.msra.mxu0 %v1066
        %1068 = vmatprep.subr.mxu0 0.0
        %v1069 = vand.u32 %v461, 4294901760
        %1070 = vmatpush1.msra.mxu0 %v1069
        %v1071 = vand.u32 %v427, 4294901760
        %v1072 = vsub.f32 %v427, %v1071
        %v1073 = vand.u32 %v1072, 4294901760
        %1074 = vmatprep.mubr.f32.mxu0 %v1073
        %v1075 = vand.u32 %v426, 4294901760
        %v1076 = vsub.f32 %v426, %v1075
        %v1077 = vand.u32 %v1076, 4294901760
        %1078 = vmatmul.mubr.f32.gmra.mrb[0].mxu0 %v1077
        %v1079 = vpop.f32.mrb[0].mxu0
        %v1080 = vadd.f32 %v963, %v1079
        %v1081 = vpop.f32.mrb[0].mxu0
        %v1082 = vand.u32 %v429, 4294901760
        %v1083 = vsub.f32 %v429, %v1082
        %v1084 = vand.u32 %v1083, 4294901760
        %1085 = vmatprep.mubr.f32.mxu0 %v1084
        %v1086 = vand.u32 %v428, 4294901760
        %v1087 = vsub.f32 %v428, %v1086
        %v1088 = vand.u32 %v1087, 4294901760
        %1089 = vmatmul.mubr.f32.gmra.mrb[0].mxu0 %v1088
        %v1090 = vpop.f32.mrb[0].mxu0
        %v1091 = vadd.f32 %v972, %v1090
        %v1092 = vpop.f32.mrb[0].mxu0
        %1093 = vdwg.mxu0
        %1094 = vmatprep.subr.mxu0 0.0
        %v1095 = vand.u32 %v430, 4294901760
        %v1096 = vsub.f32 %v430, %v1095
        %v1097 = vand.u32 %v1096, 4294901760
        %1098 = vmatpush1.msra.mxu0 %v1097
        %1099 = vmatprep.subr.mxu0 0.0
        %v1100 = vand.u32 %v431, 4294901760
        %v1101 = vsub.f32 %v431, %v1100
        %v1102 = vand.u32 %v1101, 4294901760
        %1103 = vmatpush1.msra.mxu0 %v1102
        %1104 = vmatprep.subr.mxu0 0.0
        %v1105 = vand.u32 %v432, 4294901760
        %v1106 = vsub.f32 %v432, %v1105
        %v1107 = vand.u32 %v1106, 4294901760
        %1108 = vmatpush1.msra.mxu0 %v1107
        %1109 = vmatprep.subr.mxu0 0.0
        %v1110 = vand.u32 %v433, 4294901760
        %v1111 = vsub.f32 %v433, %v1110
        %v1112 = vand.u32 %v1111, 4294901760
        %1113 = vmatpush1.msra.mxu0 %v1112
        %1114 = vmatprep.subr.mxu0 0.0
        %v1115 = vand.u32 %v434, 4294901760
        %v1116 = vsub.f32 %v434, %v1115
        %v1117 = vand.u32 %v1116, 4294901760
        %1118 = vmatpush1.msra.mxu0 %v1117
        %1119 = vmatprep.subr.mxu0 0.0
        %v1120 = vand.u32 %v435, 4294901760
        %v1121 = vsub.f32 %v435, %v1120
        %v1122 = vand.u32 %v1121, 4294901760
        %1123 = vmatpush1.msra.mxu0 %v1122
        %1124 = vmatprep.subr.mxu0 0.0
        %v1125 = vand.u32 %v436, 4294901760
        %v1126 = vsub.f32 %v436, %v1125
        %v1127 = vand.u32 %v1126, 4294901760
        %1128 = vmatpush1.msra.mxu0 %v1127
        %1129 = vmatprep.subr.mxu0 0.0
        %v1130 = vand.u32 %v437, 4294901760
        %v1131 = vsub.f32 %v437, %v1130
        %v1132 = vand.u32 %v1131, 4294901760
        %1133 = vmatpush1.msra.mxu0 %v1132
        %1134 = vmatprep.subr.mxu0 0.0
        %v1135 = vand.u32 %v438, 4294901760
        %v1136 = vsub.f32 %v438, %v1135
        %v1137 = vand.u32 %v1136, 4294901760
        %1138 = vmatpush1.msra.mxu0 %v1137
        %1139 = vmatprep.subr.mxu0 0.0
        %v1140 = vand.u32 %v439, 4294901760
        %v1141 = vsub.f32 %v439, %v1140
        %v1142 = vand.u32 %v1141, 4294901760
        %1143 = vmatpush1.msra.mxu0 %v1142
        %1144 = vmatprep.subr.mxu0 0.0
        %v1145 = vand.u32 %v440, 4294901760
        %v1146 = vsub.f32 %v440, %v1145
        %v1147 = vand.u32 %v1146, 4294901760
        %1148 = vmatpush1.msra.mxu0 %v1147
        %1149 = vmatprep.subr.mxu0 0.0
        %v1150 = vand.u32 %v441, 4294901760
        %v1151 = vsub.f32 %v441, %v1150
        %v1152 = vand.u32 %v1151, 4294901760
        %1153 = vmatpush1.msra.mxu0 %v1152
        %1154 = vmatprep.subr.mxu0 0.0
        %v1155 = vand.u32 %v442, 4294901760
        %v1156 = vsub.f32 %v442, %v1155
        %v1157 = vand.u32 %v1156, 4294901760
        %1158 = vmatpush1.msra.mxu0 %v1157
        %1159 = vmatprep.subr.mxu0 0.0
        %v1160 = vand.u32 %v443, 4294901760
        %v1161 = vsub.f32 %v443, %v1160
        %v1162 = vand.u32 %v1161, 4294901760
        %1163 = vmatpush1.msra.mxu0 %v1162
        %1164 = vmatprep.subr.mxu0 0.0
        %v1165 = vand.u32 %v444, 4294901760
        %v1166 = vsub.f32 %v444, %v1165
        %v1167 = vand.u32 %v1166, 4294901760
        %1168 = vmatpush1.msra.mxu0 %v1167
        %1169 = vmatprep.subr.mxu0 0.0
        %v1170 = vand.u32 %v445, 4294901760
        %v1171 = vsub.f32 %v445, %v1170
        %v1172 = vand.u32 %v1171, 4294901760
        %1173 = vmatpush1.msra.mxu0 %v1172
        %1174 = vmatprep.subr.mxu0 0.0
        %v1175 = vand.u32 %v446, 4294901760
        %v1176 = vsub.f32 %v446, %v1175
        %v1177 = vand.u32 %v1176, 4294901760
        %1178 = vmatpush1.msra.mxu0 %v1177
        %1179 = vmatprep.subr.mxu0 0.0
        %v1180 = vand.u32 %v447, 4294901760
        %v1181 = vsub.f32 %v447, %v1180
        %v1182 = vand.u32 %v1181, 4294901760
        %1183 = vmatpush1.msra.mxu0 %v1182
        %1184 = vmatprep.subr.mxu0 0.0
        %v1185 = vand.u32 %v448, 4294901760
        %v1186 = vsub.f32 %v448, %v1185
        %v1187 = vand.u32 %v1186, 4294901760
        %1188 = vmatpush1.msra.mxu0 %v1187
        %1189 = vmatprep.subr.mxu0 0.0
        %v1190 = vand.u32 %v449, 4294901760
        %v1191 = vsub.f32 %v449, %v1190
        %v1192 = vand.u32 %v1191, 4294901760
        %1193 = vmatpush1.msra.mxu0 %v1192
        %1194 = vmatprep.subr.mxu0 0.0
        %v1195 = vand.u32 %v450, 4294901760
        %v1196 = vsub.f32 %v450, %v1195
        %v1197 = vand.u32 %v1196, 4294901760
        %1198 = vmatpush1.msra.mxu0 %v1197
        %1199 = vmatprep.subr.mxu0 0.0
        %v1200 = vand.u32 %v451, 4294901760
        %v1201 = vsub.f32 %v451, %v1200
        %v1202 = vand.u32 %v1201, 4294901760
        %1203 = vmatpush1.msra.mxu0 %v1202
        %1204 = vmatprep.subr.mxu0 0.0
        %v1205 = vand.u32 %v452, 4294901760
        %v1206 = vsub.f32 %v452, %v1205
        %v1207 = vand.u32 %v1206, 4294901760
        %1208 = vmatpush1.msra.mxu0 %v1207
        %1209 = vmatprep.subr.mxu0 0.0
        %v1210 = vand.u32 %v453, 4294901760
        %v1211 = vsub.f32 %v453, %v1210
        %v1212 = vand.u32 %v1211, 4294901760
        %1213 = vmatpush1.msra.mxu0 %v1212
        %1214 = vmatprep.subr.mxu0 0.0
        %v1215 = vand.u32 %v454, 4294901760
        %v1216 = vsub.f32 %v454, %v1215
        %v1217 = vand.u32 %v1216, 4294901760
        %1218 = vmatpush1.msra.mxu0 %v1217
        %1219 = vmatprep.subr.mxu0 0.0
        %v1220 = vand.u32 %v455, 4294901760
        %v1221 = vsub.f32 %v455, %v1220
        %v1222 = vand.u32 %v1221, 4294901760
        %1223 = vmatpush1.msra.mxu0 %v1222
        %1224 = vmatprep.subr.mxu0 0.0
        %v1225 = vand.u32 %v456, 4294901760
        %v1226 = vsub.f32 %v456, %v1225
        %v1227 = vand.u32 %v1226, 4294901760
        %1228 = vmatpush1.msra.mxu0 %v1227
        %1229 = vmatprep.subr.mxu0 0.0
        %v1230 = vand.u32 %v457, 4294901760
        %v1231 = vsub.f32 %v457, %v1230
        %v1232 = vand.u32 %v1231, 4294901760
        %1233 = vmatpush1.msra.mxu0 %v1232
        %1234 = vmatprep.subr.mxu0 0.0
        %v1235 = vand.u32 %v458, 4294901760
        %v1236 = vsub.f32 %v458, %v1235
        %v1237 = vand.u32 %v1236, 4294901760
        %1238 = vmatpush1.msra.mxu0 %v1237
        %1239 = vmatprep.subr.mxu0 0.0
        %v1240 = vand.u32 %v459, 4294901760
        %v1241 = vsub.f32 %v459, %v1240
        %v1242 = vand.u32 %v1241, 4294901760
        %1243 = vmatpush1.msra.mxu0 %v1242
        %1244 = vmatprep.subr.mxu0 0.0
        %v1245 = vand.u32 %v460, 4294901760
        %v1246 = vsub.f32 %v460, %v1245
        %v1247 = vand.u32 %v1246, 4294901760
        %1248 = vmatpush1.msra.mxu0 %v1247
        %1249 = vmatprep.subr.mxu0 0.0
        %v1250 = vand.u32 %v461, 4294901760
        %v1251 = vsub.f32 %v461, %v1250
        %v1252 = vand.u32 %v1251, 4294901760
        %1253 = vmatpush1.msra.mxu0 %v1252
        %v1254 = vand.u32 %v427, 4294901760
        %1255 = vmatprep.mubr.f32.mxu0 %v1254
        %v1256 = vand.u32 %v426, 4294901760
        %1257 = vmatmul.mubr.f32.gmra.mrb[0].mxu0 %v1256
        %v1258 = vpop.f32.mrb[0].mxu0
        %v1259 = vadd.f32 %v1080, %v1258
        %v1260 = vpop.f32.mrb[0].mxu0
        %v1261 = vand.u32 %v429, 4294901760
        %1262 = vmatprep.mubr.f32.mxu0 %v1261
        %v1263 = vand.u32 %v428, 4294901760
        %1264 = vmatmul.mubr.f32.gmra.mrb[0].mxu0 %v1263
        %v1265 = vpop.f32.mrb[0].mxu0
        %v1266 = vadd.f32 %v1091, %v1265
        %v1267 = vpop.f32.mrb[0].mxu0
        %1268 = vdwg.mxu0
        %1269 = vmatprep.subr.mxu0 0.0
        %v1270 = vand.u32 %v430, 4294901760
        %1271 = vmatpush1.msra.mxu0 %v1270
        %1272 = vmatprep.subr.mxu0 0.0
        %v1273 = vand.u32 %v431, 4294901760
        %1274 = vmatpush1.msra.mxu0 %v1273
        %1275 = vmatprep.subr.mxu0 0.0
        %v1276 = vand.u32 %v432, 4294901760
        %1277 = vmatpush1.msra.mxu0 %v1276
        %1278 = vmatprep.subr.mxu0 0.0
        %v1279 = vand.u32 %v433, 4294901760
        %1280 = vmatpush1.msra.mxu0 %v1279
        %1281 = vmatprep.subr.mxu0 0.0
        %v1282 = vand.u32 %v434, 4294901760
        %1283 = vmatpush1.msra.mxu0 %v1282
        %1284 = vmatprep.subr.mxu0 0.0
        %v1285 = vand.u32 %v435, 4294901760
        %1286 = vmatpush1.msra.mxu0 %v1285
        %1287 = vmatprep.subr.mxu0 0.0
        %v1288 = vand.u32 %v436, 4294901760
        %1289 = vmatpush1.msra.mxu0 %v1288
        %1290 = vmatprep.subr.mxu0 0.0
        %v1291 = vand.u32 %v437, 4294901760
        %1292 = vmatpush1.msra.mxu0 %v1291
        %1293 = vmatprep.subr.mxu0 0.0
        %v1294 = vand.u32 %v438, 4294901760
        %1295 = vmatpush1.msra.mxu0 %v1294
        %1296 = vmatprep.subr.mxu0 0.0
        %v1297 = vand.u32 %v439, 4294901760
        %1298 = vmatpush1.msra.mxu0 %v1297
        %1299 = vmatprep.subr.mxu0 0.0
        %v1300 = vand.u32 %v440, 4294901760
        %1301 = vmatpush1.msra.mxu0 %v1300
        %1302 = vmatprep.subr.mxu0 0.0
        %v1303 = vand.u32 %v441, 4294901760
        %1304 = vmatpush1.msra.mxu0 %v1303
        %1305 = vmatprep.subr.mxu0 0.0
        %v1306 = vand.u32 %v442, 4294901760
        %1307 = vmatpush1.msra.mxu0 %v1306
        %1308 = vmatprep.subr.mxu0 0.0
        %v1309 = vand.u32 %v443, 4294901760
        %1310 = vmatpush1.msra.mxu0 %v1309
        %1311 = vmatprep.subr.mxu0 0.0
        %v1312 = vand.u32 %v444, 4294901760
        %1313 = vmatpush1.msra.mxu0 %v1312
        %1314 = vmatprep.subr.mxu0 0.0
        %v1315 = vand.u32 %v445, 4294901760
        %1316 = vmatpush1.msra.mxu0 %v1315
        %1317 = vmatprep.subr.mxu0 0.0
        %v1318 = vand.u32 %v446, 4294901760
        %1319 = vmatpush1.msra.mxu0 %v1318
        %1320 = vmatprep.subr.mxu0 0.0
        %v1321 = vand.u32 %v447, 4294901760
        %1322 = vmatpush1.msra.mxu0 %v1321
        %1323 = vmatprep.subr.mxu0 0.0
        %v1324 = vand.u32 %v448, 4294901760
        %1325 = vmatpush1.msra.mxu0 %v1324
        %1326 = vmatprep.subr.mxu0 0.0
        %v1327 = vand.u32 %v449, 4294901760
        %1328 = vmatpush1.msra.mxu0 %v1327
        %1329 = vmatprep.subr.mxu0 0.0
        %v1330 = vand.u32 %v450, 4294901760
        %1331 = vmatpush1.msra.mxu0 %v1330
        %1332 = vmatprep.subr.mxu0 0.0
        %v1333 = vand.u32 %v451, 4294901760
        %1334 = vmatpush1.msra.mxu0 %v1333
        %1335 = vmatprep.subr.mxu0 0.0
        %v1336 = vand.u32 %v452, 4294901760
        %1337 = vmatpush1.msra.mxu0 %v1336
        %1338 = vmatprep.subr.mxu0 0.0
        %v1339 = vand.u32 %v453, 4294901760
        %1340 = vmatpush1.msra.mxu0 %v1339
        %1341 = vmatprep.subr.mxu0 0.0
        %v1342 = vand.u32 %v454, 4294901760
        %1343 = vmatpush1.msra.mxu0 %v1342
        %1344 = vmatprep.subr.mxu0 0.0
        %v1345 = vand.u32 %v455, 4294901760
        %1346 = vmatpush1.msra.mxu0 %v1345
        %1347 = vmatprep.subr.mxu0 0.0
        %v1348 = vand.u32 %v456, 4294901760
        %1349 = vmatpush1.msra.mxu0 %v1348
        %1350 = vmatprep.subr.mxu0 0.0
        %v1351 = vand.u32 %v457, 4294901760
        %1352 = vmatpush1.msra.mxu0 %v1351
        %1353 = vmatprep.subr.mxu0 0.0
        %v1354 = vand.u32 %v458, 4294901760
        %1355 = vmatpush1.msra.mxu0 %v1354
        %1356 = vmatprep.subr.mxu0 0.0
        %v1357 = vand.u32 %v459, 4294901760
        %1358 = vmatpush1.msra.mxu0 %v1357
        %1359 = vmatprep.subr.mxu0 0.0
        %v1360 = vand.u32 %v460, 4294901760
        %1361 = vmatpush1.msra.mxu0 %v1360
        %1362 = vmatprep.subr.mxu0 0.0
        %v1363 = vand.u32 %v461, 4294901760
        %1364 = vmatpush1.msra.mxu0 %v1363
        %v1365 = vand.u32 %v427, 4294901760
        %1366 = vmatprep.mubr.f32.mxu0 %v1365
        %v1367 = vand.u32 %v426, 4294901760
        %1368 = vmatmul.mubr.f32.gmra.mrb[0].mxu0 %v1367
        %v1369 = vpop.f32.mrb[0].mxu0
        %v1370 = vadd.f32 %v1259, %v1369
        %v1371 = vpop.f32.mrb[0].mxu0
        %v1372 = vand.u32 %v429, 4294901760
        %1373 = vmatprep.mubr.f32.mxu0 %v1372
        %v1374 = vand.u32 %v428, 4294901760
        %1375 = vmatmul.mubr.f32.gmra.mrb[0].mxu0 %v1374
        %v1376 = vpop.f32.mrb[0].mxu0
        %v1377 = vadd.f32 %v1266, %v1376
        %v1378 = vpop.f32.mrb[0].mxu0
        %1379 = vdwg.mxu0
        %vm1380 = vcmask 523264
        %1381 = vst.msk [vmem:[#allocation3] sm:$0xff] %vm1380, %v1370
        %1382 = vst.msk [vmem:[#allocation3 + $0x8] sm:$0xff] %vm1380, %v1377
        %v1383 = vld [vmem:[%s368] sm:$0xff]
        %1384 = vst.msk [vmem:[%s373] sm:$0xff] %vm1380, %v1383
        %1385 = vst.msk [vmem:[#allocation2] sm:$0xff] %vm1380, %v361
        %v1386 = vld [vmem:[%s317] sm:$0xff]
        %v1387 = vld [vmem:[%s317 + $0x10] sm:$0xff]
        %1390 = vrot.lane.b32.xlu0 %v1386, 64
        %v1391 = vpop.permute.xlu0 %1390
        %1392 = vrot.lane.b32.xlu0 %v1387, 64
        %v1393 = vpop.permute.xlu0 %1392
        %vm1396 = vcmask 1048064
        %1397 = vst.msk [vmem:[#allocation2] sm:$0xff] %vm1396, %v1391
        %1398 = vst.msk [vmem:[#allocation2 + $0x10] sm:$0xff] %vm1396, %v1393
        %v1399 = vld [vmem:[%s368] sm:$0xff]
        %v1400 = vld [vmem:[%s368 + $0x10] sm:$0xff]
        %1401 = vst.msk [vmem:[#allocation2 + $0x8] sm:$0xff] %vm1380, %v1399
        %1402 = vst.msk [vmem:[#allocation2 + $0x18] sm:$0xff] %vm1380, %v1400
        %v1403 = vld [vmem:[%s412] sm:$0xff]
        %1405 = vrot.lane.b32.xlu0 %v1403, 64
        %v1406 = vpop.permute.xlu0 %1405
        %1408 = vst.msk [vmem:[#allocation2 + $0x8] sm:$0xff] %vm1396, %v1406
        %1409 = vrot.lane.b32.xlu0 %v364, 64
        %v1410 = vpop.permute.xlu0 %1409
        %1412 = vst.msk [vmem:[%s373 + $0x8] sm:$0xff] %vm1396, %v1410
        %v1413 = vld [vmem:[#allocation2] sm:$0xff]
        %v1414 = vld [vmem:[#allocation2 + $0x8] sm:$0xff]
        %v1415 = vld [vmem:[#allocation2 + $0x10] sm:$0xff]
        %v1416 = vld [vmem:[#allocation2 + $0x18] sm:$0xff]
        %s1417 = scalar_lea.vmem %s3, 256
        %v1418 = vld [vmem:[%s1417] sm:$0xff]
        %v1419 = vld [vmem:[%s1417 + $0x8] sm:$0xff]
        %v1420 = vld [vmem:[%s1417 + $0x10] sm:$0xff]
        %v1421 = vld [vmem:[%s1417 + $0x18] sm:$0xff]
        %v1422 = vld [vmem:[%s1417 + $0x20] sm:$0xff]
        %v1423 = vld [vmem:[%s1417 + $0x28] sm:$0xff]
        %v1424 = vld [vmem:[%s1417 + $0x30] sm:$0xff]
        %v1425 = vld [vmem:[%s1417 + $0x38] sm:$0xff]
        %v1426 = vld [vmem:[%s1417 + $0x40] sm:$0xff]
        %v1427 = vld [vmem:[%s1417 + $0x48] sm:$0xff]
        %v1428 = vld [vmem:[%s1417 + $0x50] sm:$0xff]
        %v1429 = vld [vmem:[%s1417 + $0x58] sm:$0xff]
        %v1430 = vld [vmem:[%s1417 + $0x60] sm:$0xff]
        %v1431 = vld [vmem:[%s1417 + $0x68] sm:$0xff]
        %v1432 = vld [vmem:[%s1417 + $0x70] sm:$0xff]
        %v1433 = vld [vmem:[%s1417 + $0x78] sm:$0xff]
        %v1434 = vld [vmem:[%s1417 + $0x80] sm:$0xff]
        %v1435 = vld [vmem:[%s1417 + $0x88] sm:$0xff]
        %v1436 = vld [vmem:[%s1417 + $0x90] sm:$0xff]
        %v1437 = vld [vmem:[%s1417 + $0x98] sm:$0xff]
        %v1438 = vld [vmem:[%s1417 + $0xa0] sm:$0xff]
        %v1439 = vld [vmem:[%s1417 + $0xa8] sm:$0xff]
        %v1440 = vld [vmem:[%s1417 + $0xb0] sm:$0xff]
        %v1441 = vld [vmem:[%s1417 + $0xb8] sm:$0xff]
        %v1442 = vld [vmem:[%s1417 + $0xc0] sm:$0xff]
        %v1443 = vld [vmem:[%s1417 + $0xc8] sm:$0xff]
        %v1444 = vld [vmem:[%s1417 + $0xd0] sm:$0xff]
        %v1445 = vld [vmem:[%s1417 + $0xd8] sm:$0xff]
        %v1446 = vld [vmem:[%s1417 + $0xe0] sm:$0xff]
        %v1447 = vld [vmem:[%s1417 + $0xe8] sm:$0xff]
        %v1448 = vld [vmem:[%s1417 + $0xf0] sm:$0xff]
        %v1449 = vld [vmem:[%s1417 + $0xf8] sm:$0xff]
        %1450 = vmatprep.subr.mxu0 0.0
        %v1451 = vand.u32 %v1418, 4294901760
        %1452 = vmatpush1.msra.mxu0 %v1451
        %1453 = vmatprep.subr.mxu0 0.0
        %v1454 = vand.u32 %v1419, 4294901760
        %1455 = vmatpush1.msra.mxu0 %v1454
        %1456 = vmatprep.subr.mxu0 0.0
        %v1457 = vand.u32 %v1420, 4294901760
        %1458 = vmatpush1.msra.mxu0 %v1457
        %1459 = vmatprep.subr.mxu0 0.0
        %v1460 = vand.u32 %v1421, 4294901760
        %1461 = vmatpush1.msra.mxu0 %v1460
        %1462 = vmatprep.subr.mxu0 0.0
        %v1463 = vand.u32 %v1422, 4294901760
        %1464 = vmatpush1.msra.mxu0 %v1463
        %1465 = vmatprep.subr.mxu0 0.0
        %v1466 = vand.u32 %v1423, 4294901760
        %1467 = vmatpush1.msra.mxu0 %v1466
        %1468 = vmatprep.subr.mxu0 0.0
        %v1469 = vand.u32 %v1424, 4294901760
        %1470 = vmatpush1.msra.mxu0 %v1469
        %1471 = vmatprep.subr.mxu0 0.0
        %v1472 = vand.u32 %v1425, 4294901760
        %1473 = vmatpush1.msra.mxu0 %v1472
        %1474 = vmatprep.subr.mxu0 0.0
        %v1475 = vand.u32 %v1426, 4294901760
        %1476 = vmatpush1.msra.mxu0 %v1475
        %1477 = vmatprep.subr.mxu0 0.0
        %v1478 = vand.u32 %v1427, 4294901760
        %1479 = vmatpush1.msra.mxu0 %v1478
        %1480 = vmatprep.subr.mxu0 0.0
        %v1481 = vand.u32 %v1428, 4294901760
        %1482 = vmatpush1.msra.mxu0 %v1481
        %1483 = vmatprep.subr.mxu0 0.0
        %v1484 = vand.u32 %v1429, 4294901760
        %1485 = vmatpush1.msra.mxu0 %v1484
        %1486 = vmatprep.subr.mxu0 0.0
        %v1487 = vand.u32 %v1430, 4294901760
        %1488 = vmatpush1.msra.mxu0 %v1487
        %1489 = vmatprep.subr.mxu0 0.0
        %v1490 = vand.u32 %v1431, 4294901760
        %1491 = vmatpush1.msra.mxu0 %v1490
        %1492 = vmatprep.subr.mxu0 0.0
        %v1493 = vand.u32 %v1432, 4294901760
        %1494 = vmatpush1.msra.mxu0 %v1493
        %1495 = vmatprep.subr.mxu0 0.0
        %v1496 = vand.u32 %v1433, 4294901760
        %1497 = vmatpush1.msra.mxu0 %v1496
        %1498 = vmatprep.subr.mxu0 0.0
        %v1499 = vand.u32 %v1434, 4294901760
        %1500 = vmatpush1.msra.mxu0 %v1499
        %1501 = vmatprep.subr.mxu0 0.0
        %v1502 = vand.u32 %v1435, 4294901760
        %1503 = vmatpush1.msra.mxu0 %v1502
        %1504 = vmatprep.subr.mxu0 0.0
        %v1505 = vand.u32 %v1436, 4294901760
        %1506 = vmatpush1.msra.mxu0 %v1505
        %1507 = vmatprep.subr.mxu0 0.0
        %v1508 = vand.u32 %v1437, 4294901760
        %1509 = vmatpush1.msra.mxu0 %v1508
        %1510 = vmatprep.subr.mxu0 0.0
        %v1511 = vand.u32 %v1438, 4294901760
        %1512 = vmatpush1.msra.mxu0 %v1511
        %1513 = vmatprep.subr.mxu0 0.0
        %v1514 = vand.u32 %v1439, 4294901760
        %1515 = vmatpush1.msra.mxu0 %v1514
        %1516 = vmatprep.subr.mxu0 0.0
        %v1517 = vand.u32 %v1440, 4294901760
        %1518 = vmatpush1.msra.mxu0 %v1517
        %1519 = vmatprep.subr.mxu0 0.0
        %v1520 = vand.u32 %v1441, 4294901760
        %1521 = vmatpush1.msra.mxu0 %v1520
        %1522 = vmatprep.subr.mxu0 0.0
        %v1523 = vand.u32 %v1442, 4294901760
        %1524 = vmatpush1.msra.mxu0 %v1523
        %1525 = vmatprep.subr.mxu0 0.0
        %v1526 = vand.u32 %v1443, 4294901760
        %1527 = vmatpush1.msra.mxu0 %v1526
        %1528 = vmatprep.subr.mxu0 0.0
        %v1529 = vand.u32 %v1444, 4294901760
        %1530 = vmatpush1.msra.mxu0 %v1529
        %1531 = vmatprep.subr.mxu0 0.0
        %v1532 = vand.u32 %v1445, 4294901760
        %1533 = vmatpush1.msra.mxu0 %v1532
        %1534 = vmatprep.subr.mxu0 0.0
        %v1535 = vand.u32 %v1446, 4294901760
        %1536 = vmatpush1.msra.mxu0 %v1535
        %1537 = vmatprep.subr.mxu0 0.0
        %v1538 = vand.u32 %v1447, 4294901760
        %1539 = vmatpush1.msra.mxu0 %v1538
        %1540 = vmatprep.subr.mxu0 0.0
        %v1541 = vand.u32 %v1448, 4294901760
        %1542 = vmatpush1.msra.mxu0 %v1541
        %1543 = vmatprep.subr.mxu0 0.0
        %v1544 = vand.u32 %v1449, 4294901760
        %1545 = vmatpush1.msra.mxu0 %v1544
        %v1546 = vand.u32 %v1414, 4294901760
        %v1547 = vsub.f32 %v1414, %v1546
        %v1548 = vand.u32 %v1547, 4294901760
        %v1549 = vsub.f32 %v1547, %v1548
        %v1550 = vand.u32 %v1549, 4294901760
        %1551 = vmatprep.mubr.f32.mxu0 %v1550
        %v1552 = vand.u32 %v1413, 4294901760
        %v1553 = vsub.f32 %v1413, %v1552
        %v1554 = vand.u32 %v1553, 4294901760
        %v1555 = vsub.f32 %v1553, %v1554
        %v1556 = vand.u32 %v1555, 4294901760
        %1557 = vmatmul.mubr.f32.gmra.mrb[0].mxu0 %v1556
        %v1558 = vpop.f32.mrb[0].mxu0
        %v1559 = vadd.f32 0.0, %v1558
        %v1560 = vpop.f32.mrb[0].mxu0
        %v1561 = vand.u32 %v1416, 4294901760
        %v1562 = vsub.f32 %v1416, %v1561
        %v1563 = vand.u32 %v1562, 4294901760
        %v1564 = vsub.f32 %v1562, %v1563
        %v1565 = vand.u32 %v1564, 4294901760
        %1566 = vmatprep.mubr.f32.mxu0 %v1565
        %v1567 = vand.u32 %v1415, 4294901760
        %v1568 = vsub.f32 %v1415, %v1567
        %v1569 = vand.u32 %v1568, 4294901760
        %v1570 = vsub.f32 %v1568, %v1569
        %v1571 = vand.u32 %v1570, 4294901760
        %1572 = vmatmul.mubr.f32.gmra.mrb[0].mxu0 %v1571
        %v1573 = vpop.f32.mrb[0].mxu0
        %v1574 = vadd.f32 0.0, %v1573
        %v1575 = vpop.f32.mrb[0].mxu0
        %1576 = vdwg.mxu0
        %1577 = vmatprep.subr.mxu0 0.0
        %v1578 = vand.u32 %v1418, 4294901760
        %v1579 = vsub.f32 %v1418, %v1578
        %v1580 = vand.u32 %v1579, 4294901760
        %v1581 = vsub.f32 %v1579, %v1580
        %v1582 = vand.u32 %v1581, 4294901760
        %1583 = vmatpush1.msra.mxu0 %v1582
        %1584 = vmatprep.subr.mxu0 0.0
        %v1585 = vand.u32 %v1419, 4294901760
        %v1586 = vsub.f32 %v1419, %v1585
        %v1587 = vand.u32 %v1586, 4294901760
        %v1588 = vsub.f32 %v1586, %v1587
        %v1589 = vand.u32 %v1588, 4294901760
        %1590 = vmatpush1.msra.mxu0 %v1589
        %1591 = vmatprep.subr.mxu0 0.0
        %v1592 = vand.u32 %v1420, 4294901760
        %v1593 = vsub.f32 %v1420, %v1592
        %v1594 = vand.u32 %v1593, 4294901760
        %v1595 = vsub.f32 %v1593, %v1594
        %v1596 = vand.u32 %v1595, 4294901760
        %1597 = vmatpush1.msra.mxu0 %v1596
        %1598 = vmatprep.subr.mxu0 0.0
        %v1599 = vand.u32 %v1421, 4294901760
        %v1600 = vsub.f32 %v1421, %v1599
        %v1601 = vand.u32 %v1600, 4294901760
        %v1602 = vsub.f32 %v1600, %v1601
        %v1603 = vand.u32 %v1602, 4294901760
        %1604 = vmatpush1.msra.mxu0 %v1603
        %1605 = vmatprep.subr.mxu0 0.0
        %v1606 = vand.u32 %v1422, 4294901760
        %v1607 = vsub.f32 %v1422, %v1606
        %v1608 = vand.u32 %v1607, 4294901760
        %v1609 = vsub.f32 %v1607, %v1608
        %v1610 = vand.u32 %v1609, 4294901760
        %1611 = vmatpush1.msra.mxu0 %v1610
        %1612 = vmatprep.subr.mxu0 0.0
        %v1613 = vand.u32 %v1423, 4294901760
        %v1614 = vsub.f32 %v1423, %v1613
        %v1615 = vand.u32 %v1614, 4294901760
        %v1616 = vsub.f32 %v1614, %v1615
        %v1617 = vand.u32 %v1616, 4294901760
        %1618 = vmatpush1.msra.mxu0 %v1617
        %1619 = vmatprep.subr.mxu0 0.0
        %v1620 = vand.u32 %v1424, 4294901760
        %v1621 = vsub.f32 %v1424, %v1620
        %v1622 = vand.u32 %v1621, 4294901760
        %v1623 = vsub.f32 %v1621, %v1622
        %v1624 = vand.u32 %v1623, 4294901760
        %1625 = vmatpush1.msra.mxu0 %v1624
        %1626 = vmatprep.subr.mxu0 0.0
        %v1627 = vand.u32 %v1425, 4294901760
        %v1628 = vsub.f32 %v1425, %v1627
        %v1629 = vand.u32 %v1628, 4294901760
        %v1630 = vsub.f32 %v1628, %v1629
        %v1631 = vand.u32 %v1630, 4294901760
        %1632 = vmatpush1.msra.mxu0 %v1631
        %1633 = vmatprep.subr.mxu0 0.0
        %v1634 = vand.u32 %v1426, 4294901760
        %v1635 = vsub.f32 %v1426, %v1634
        %v1636 = vand.u32 %v1635, 4294901760
        %v1637 = vsub.f32 %v1635, %v1636
        %v1638 = vand.u32 %v1637, 4294901760
        %1639 = vmatpush1.msra.mxu0 %v1638
        %1640 = vmatprep.subr.mxu0 0.0
        %v1641 = vand.u32 %v1427, 4294901760
        %v1642 = vsub.f32 %v1427, %v1641
        %v1643 = vand.u32 %v1642, 4294901760
        %v1644 = vsub.f32 %v1642, %v1643
        %v1645 = vand.u32 %v1644, 4294901760
        %1646 = vmatpush1.msra.mxu0 %v1645
        %1647 = vmatprep.subr.mxu0 0.0
        %v1648 = vand.u32 %v1428, 4294901760
        %v1649 = vsub.f32 %v1428, %v1648
        %v1650 = vand.u32 %v1649, 4294901760
        %v1651 = vsub.f32 %v1649, %v1650
        %v1652 = vand.u32 %v1651, 4294901760
        %1653 = vmatpush1.msra.mxu0 %v1652
        %1654 = vmatprep.subr.mxu0 0.0
        %v1655 = vand.u32 %v1429, 4294901760
        %v1656 = vsub.f32 %v1429, %v1655
        %v1657 = vand.u32 %v1656, 4294901760
        %v1658 = vsub.f32 %v1656, %v1657
        %v1659 = vand.u32 %v1658, 4294901760
        %1660 = vmatpush1.msra.mxu0 %v1659
        %1661 = vmatprep.subr.mxu0 0.0
        %v1662 = vand.u32 %v1430, 4294901760
        %v1663 = vsub.f32 %v1430, %v1662
        %v1664 = vand.u32 %v1663, 4294901760
        %v1665 = vsub.f32 %v1663, %v1664
        %v1666 = vand.u32 %v1665, 4294901760
        %1667 = vmatpush1.msra.mxu0 %v1666
        %1668 = vmatprep.subr.mxu0 0.0
        %v1669 = vand.u32 %v1431, 4294901760
        %v1670 = vsub.f32 %v1431, %v1669
        %v1671 = vand.u32 %v1670, 4294901760
        %v1672 = vsub.f32 %v1670, %v1671
        %v1673 = vand.u32 %v1672, 4294901760
        %1674 = vmatpush1.msra.mxu0 %v1673
        %1675 = vmatprep.subr.mxu0 0.0
        %v1676 = vand.u32 %v1432, 4294901760
        %v1677 = vsub.f32 %v1432, %v1676
        %v1678 = vand.u32 %v1677, 4294901760
        %v1679 = vsub.f32 %v1677, %v1678
        %v1680 = vand.u32 %v1679, 4294901760
        %1681 = vmatpush1.msra.mxu0 %v1680
        %1682 = vmatprep.subr.mxu0 0.0
        %v1683 = vand.u32 %v1433, 4294901760
        %v1684 = vsub.f32 %v1433, %v1683
        %v1685 = vand.u32 %v1684, 4294901760
        %v1686 = vsub.f32 %v1684, %v1685
        %v1687 = vand.u32 %v1686, 4294901760
        %1688 = vmatpush1.msra.mxu0 %v1687
        %1689 = vmatprep.subr.mxu0 0.0
        %v1690 = vand.u32 %v1434, 4294901760
        %v1691 = vsub.f32 %v1434, %v1690
        %v1692 = vand.u32 %v1691, 4294901760
        %v1693 = vsub.f32 %v1691, %v1692
        %v1694 = vand.u32 %v1693, 4294901760
        %1695 = vmatpush1.msra.mxu0 %v1694
        %1696 = vmatprep.subr.mxu0 0.0
        %v1697 = vand.u32 %v1435, 4294901760
        %v1698 = vsub.f32 %v1435, %v1697
        %v1699 = vand.u32 %v1698, 4294901760
        %v1700 = vsub.f32 %v1698, %v1699
        %v1701 = vand.u32 %v1700, 4294901760
        %1702 = vmatpush1.msra.mxu0 %v1701
        %1703 = vmatprep.subr.mxu0 0.0
        %v1704 = vand.u32 %v1436, 4294901760
        %v1705 = vsub.f32 %v1436, %v1704
        %v1706 = vand.u32 %v1705, 4294901760
        %v1707 = vsub.f32 %v1705, %v1706
        %v1708 = vand.u32 %v1707, 4294901760
        %1709 = vmatpush1.msra.mxu0 %v1708
        %1710 = vmatprep.subr.mxu0 0.0
        %v1711 = vand.u32 %v1437, 4294901760
        %v1712 = vsub.f32 %v1437, %v1711
        %v1713 = vand.u32 %v1712, 4294901760
        %v1714 = vsub.f32 %v1712, %v1713
        %v1715 = vand.u32 %v1714, 4294901760
        %1716 = vmatpush1.msra.mxu0 %v1715
        %1717 = vmatprep.subr.mxu0 0.0
        %v1718 = vand.u32 %v1438, 4294901760
        %v1719 = vsub.f32 %v1438, %v1718
        %v1720 = vand.u32 %v1719, 4294901760
        %v1721 = vsub.f32 %v1719, %v1720
        %v1722 = vand.u32 %v1721, 4294901760
        %1723 = vmatpush1.msra.mxu0 %v1722
        %1724 = vmatprep.subr.mxu0 0.0
        %v1725 = vand.u32 %v1439, 4294901760
        %v1726 = vsub.f32 %v1439, %v1725
        %v1727 = vand.u32 %v1726, 4294901760
        %v1728 = vsub.f32 %v1726, %v1727
        %v1729 = vand.u32 %v1728, 4294901760
        %1730 = vmatpush1.msra.mxu0 %v1729
        %1731 = vmatprep.subr.mxu0 0.0
        %v1732 = vand.u32 %v1440, 4294901760
        %v1733 = vsub.f32 %v1440, %v1732
        %v1734 = vand.u32 %v1733, 4294901760
        %v1735 = vsub.f32 %v1733, %v1734
        %v1736 = vand.u32 %v1735, 4294901760
        %1737 = vmatpush1.msra.mxu0 %v1736
        %1738 = vmatprep.subr.mxu0 0.0
        %v1739 = vand.u32 %v1441, 4294901760
        %v1740 = vsub.f32 %v1441, %v1739
        %v1741 = vand.u32 %v1740, 4294901760
        %v1742 = vsub.f32 %v1740, %v1741
        %v1743 = vand.u32 %v1742, 4294901760
        %1744 = vmatpush1.msra.mxu0 %v1743
        %1745 = vmatprep.subr.mxu0 0.0
        %v1746 = vand.u32 %v1442, 4294901760
        %v1747 = vsub.f32 %v1442, %v1746
        %v1748 = vand.u32 %v1747, 4294901760
        %v1749 = vsub.f32 %v1747, %v1748
        %v1750 = vand.u32 %v1749, 4294901760
        %1751 = vmatpush1.msra.mxu0 %v1750
        %1752 = vmatprep.subr.mxu0 0.0
        %v1753 = vand.u32 %v1443, 4294901760
        %v1754 = vsub.f32 %v1443, %v1753
        %v1755 = vand.u32 %v1754, 4294901760
        %v1756 = vsub.f32 %v1754, %v1755
        %v1757 = vand.u32 %v1756, 4294901760
        %1758 = vmatpush1.msra.mxu0 %v1757
        %1759 = vmatprep.subr.mxu0 0.0
        %v1760 = vand.u32 %v1444, 4294901760
        %v1761 = vsub.f32 %v1444, %v1760
        %v1762 = vand.u32 %v1761, 4294901760
        %v1763 = vsub.f32 %v1761, %v1762
        %v1764 = vand.u32 %v1763, 4294901760
        %1765 = vmatpush1.msra.mxu0 %v1764
        %1766 = vmatprep.subr.mxu0 0.0
        %v1767 = vand.u32 %v1445, 4294901760
        %v1768 = vsub.f32 %v1445, %v1767
        %v1769 = vand.u32 %v1768, 4294901760
        %v1770 = vsub.f32 %v1768, %v1769
        %v1771 = vand.u32 %v1770, 4294901760
        %1772 = vmatpush1.msra.mxu0 %v1771
        %1773 = vmatprep.subr.mxu0 0.0
        %v1774 = vand.u32 %v1446, 4294901760
        %v1775 = vsub.f32 %v1446, %v1774
        %v1776 = vand.u32 %v1775, 4294901760
        %v1777 = vsub.f32 %v1775, %v1776
        %v1778 = vand.u32 %v1777, 4294901760
        %1779 = vmatpush1.msra.mxu0 %v1778
        %1780 = vmatprep.subr.mxu0 0.0
        %v1781 = vand.u32 %v1447, 4294901760
        %v1782 = vsub.f32 %v1447, %v1781
        %v1783 = vand.u32 %v1782, 4294901760
        %v1784 = vsub.f32 %v1782, %v1783
        %v1785 = vand.u32 %v1784, 4294901760
        %1786 = vmatpush1.msra.mxu0 %v1785
        %1787 = vmatprep.subr.mxu0 0.0
        %v1788 = vand.u32 %v1448, 4294901760
        %v1789 = vsub.f32 %v1448, %v1788
        %v1790 = vand.u32 %v1789, 4294901760
        %v1791 = vsub.f32 %v1789, %v1790
        %v1792 = vand.u32 %v1791, 4294901760
        %1793 = vmatpush1.msra.mxu0 %v1792
        %1794 = vmatprep.subr.mxu0 0.0
        %v1795 = vand.u32 %v1449, 4294901760
        %v1796 = vsub.f32 %v1449, %v1795
        %v1797 = vand.u32 %v1796, 4294901760
        %v1798 = vsub.f32 %v1796, %v1797
        %v1799 = vand.u32 %v1798, 4294901760
        %1800 = vmatpush1.msra.mxu0 %v1799
        %v1801 = vand.u32 %v1414, 4294901760
        %1802 = vmatprep.mubr.f32.mxu0 %v1801
        %v1803 = vand.u32 %v1413, 4294901760
        %1804 = vmatmul.mubr.f32.gmra.mrb[0].mxu0 %v1803
        %v1805 = vpop.f32.mrb[0].mxu0
        %v1806 = vadd.f32 %v1559, %v1805
        %v1807 = vpop.f32.mrb[0].mxu0
        %v1808 = vand.u32 %v1416, 4294901760
        %1809 = vmatprep.mubr.f32.mxu0 %v1808
        %v1810 = vand.u32 %v1415, 4294901760
        %1811 = vmatmul.mubr.f32.gmra.mrb[0].mxu0 %v1810
        %v1812 = vpop.f32.mrb[0].mxu0
        %v1813 = vadd.f32 %v1574, %v1812
        %v1814 = vpop.f32.mrb[0].mxu0
        %1815 = vdwg.mxu0
        %1816 = vmatprep.subr.mxu0 0.0
        %v1817 = vand.u32 %v1418, 4294901760
        %v1818 = vsub.f32 %v1418, %v1817
        %1819 = vmatpush1.msra.mxu0 %v1818
        %1820 = vmatprep.subr.mxu0 0.0
        %v1821 = vand.u32 %v1419, 4294901760
        %v1822 = vsub.f32 %v1419, %v1821
        %1823 = vmatpush1.msra.mxu0 %v1822
        %1824 = vmatprep.subr.mxu0 0.0
        %v1825 = vand.u32 %v1420, 4294901760
        %v1826 = vsub.f32 %v1420, %v1825
        %1827 = vmatpush1.msra.mxu0 %v1826
        %1828 = vmatprep.subr.mxu0 0.0
        %v1829 = vand.u32 %v1421, 4294901760
        %v1830 = vsub.f32 %v1421, %v1829
        %1831 = vmatpush1.msra.mxu0 %v1830
        %1832 = vmatprep.subr.mxu0 0.0
        %v1833 = vand.u32 %v1422, 4294901760
        %v1834 = vsub.f32 %v1422, %v1833
        %1835 = vmatpush1.msra.mxu0 %v1834
        %1836 = vmatprep.subr.mxu0 0.0
        %v1837 = vand.u32 %v1423, 4294901760
        %v1838 = vsub.f32 %v1423, %v1837
        %1839 = vmatpush1.msra.mxu0 %v1838
        %1840 = vmatprep.subr.mxu0 0.0
        %v1841 = vand.u32 %v1424, 4294901760
        %v1842 = vsub.f32 %v1424, %v1841
        %1843 = vmatpush1.msra.mxu0 %v1842
        %1844 = vmatprep.subr.mxu0 0.0
        %v1845 = vand.u32 %v1425, 4294901760
        %v1846 = vsub.f32 %v1425, %v1845
        %1847 = vmatpush1.msra.mxu0 %v1846
        %1848 = vmatprep.subr.mxu0 0.0
        %v1849 = vand.u32 %v1426, 4294901760
        %v1850 = vsub.f32 %v1426, %v1849
        %1851 = vmatpush1.msra.mxu0 %v1850
        %1852 = vmatprep.subr.mxu0 0.0
        %v1853 = vand.u32 %v1427, 4294901760
        %v1854 = vsub.f32 %v1427, %v1853
        %1855 = vmatpush1.msra.mxu0 %v1854
        %1856 = vmatprep.subr.mxu0 0.0
        %v1857 = vand.u32 %v1428, 4294901760
        %v1858 = vsub.f32 %v1428, %v1857
        %1859 = vmatpush1.msra.mxu0 %v1858
        %1860 = vmatprep.subr.mxu0 0.0
        %v1861 = vand.u32 %v1429, 4294901760
        %v1862 = vsub.f32 %v1429, %v1861
        %1863 = vmatpush1.msra.mxu0 %v1862
        %1864 = vmatprep.subr.mxu0 0.0
        %v1865 = vand.u32 %v1430, 4294901760
        %v1866 = vsub.f32 %v1430, %v1865
        %1867 = vmatpush1.msra.mxu0 %v1866
        %1868 = vmatprep.subr.mxu0 0.0
        %v1869 = vand.u32 %v1431, 4294901760
        %v1870 = vsub.f32 %v1431, %v1869
        %1871 = vmatpush1.msra.mxu0 %v1870
        %1872 = vmatprep.subr.mxu0 0.0
        %v1873 = vand.u32 %v1432, 4294901760
        %v1874 = vsub.f32 %v1432, %v1873
        %1875 = vmatpush1.msra.mxu0 %v1874
        %1876 = vmatprep.subr.mxu0 0.0
        %v1877 = vand.u32 %v1433, 4294901760
        %v1878 = vsub.f32 %v1433, %v1877
        %1879 = vmatpush1.msra.mxu0 %v1878
        %1880 = vmatprep.subr.mxu0 0.0
        %v1881 = vand.u32 %v1434, 4294901760
        %v1882 = vsub.f32 %v1434, %v1881
        %1883 = vmatpush1.msra.mxu0 %v1882
        %1884 = vmatprep.subr.mxu0 0.0
        %v1885 = vand.u32 %v1435, 4294901760
        %v1886 = vsub.f32 %v1435, %v1885
        %1887 = vmatpush1.msra.mxu0 %v1886
        %1888 = vmatprep.subr.mxu0 0.0
        %v1889 = vand.u32 %v1436, 4294901760
        %v1890 = vsub.f32 %v1436, %v1889
        %1891 = vmatpush1.msra.mxu0 %v1890
        %1892 = vmatprep.subr.mxu0 0.0
        %v1893 = vand.u32 %v1437, 4294901760
        %v1894 = vsub.f32 %v1437, %v1893
        %1895 = vmatpush1.msra.mxu0 %v1894
        %1896 = vmatprep.subr.mxu0 0.0
        %v1897 = vand.u32 %v1438, 4294901760
        %v1898 = vsub.f32 %v1438, %v1897
        %1899 = vmatpush1.msra.mxu0 %v1898
        %1900 = vmatprep.subr.mxu0 0.0
        %v1901 = vand.u32 %v1439, 4294901760
        %v1902 = vsub.f32 %v1439, %v1901
        %1903 = vmatpush1.msra.mxu0 %v1902
        %1904 = vmatprep.subr.mxu0 0.0
        %v1905 = vand.u32 %v1440, 4294901760
        %v1906 = vsub.f32 %v1440, %v1905
        %1907 = vmatpush1.msra.mxu0 %v1906
        %1908 = vmatprep.subr.mxu0 0.0
        %v1909 = vand.u32 %v1441, 4294901760
        %v1910 = vsub.f32 %v1441, %v1909
        %1911 = vmatpush1.msra.mxu0 %v1910
        %1912 = vmatprep.subr.mxu0 0.0
        %v1913 = vand.u32 %v1442, 4294901760
        %v1914 = vsub.f32 %v1442, %v1913
        %1915 = vmatpush1.msra.mxu0 %v1914
        %1916 = vmatprep.subr.mxu0 0.0
        %v1917 = vand.u32 %v1443, 4294901760
        %v1918 = vsub.f32 %v1443, %v1917
        %1919 = vmatpush1.msra.mxu0 %v1918
        %1920 = vmatprep.subr.mxu0 0.0
        %v1921 = vand.u32 %v1444, 4294901760
        %v1922 = vsub.f32 %v1444, %v1921
        %1923 = vmatpush1.msra.mxu0 %v1922
        %1924 = vmatprep.subr.mxu0 0.0
        %v1925 = vand.u32 %v1445, 4294901760
        %v1926 = vsub.f32 %v1445, %v1925
        %1927 = vmatpush1.msra.mxu0 %v1926
        %1928 = vmatprep.subr.mxu0 0.0
        %v1929 = vand.u32 %v1446, 4294901760
        %v1930 = vsub.f32 %v1446, %v1929
        %1931 = vmatpush1.msra.mxu0 %v1930
        %1932 = vmatprep.subr.mxu0 0.0
        %v1933 = vand.u32 %v1447, 4294901760
        %v1934 = vsub.f32 %v1447, %v1933
        %1935 = vmatpush1.msra.mxu0 %v1934
        %1936 = vmatprep.subr.mxu0 0.0
        %v1937 = vand.u32 %v1448, 4294901760
        %v1938 = vsub.f32 %v1448, %v1937
        %1939 = vmatpush1.msra.mxu0 %v1938
        %1940 = vmatprep.subr.mxu0 0.0
        %v1941 = vand.u32 %v1449, 4294901760
        %v1942 = vsub.f32 %v1449, %v1941
        %1943 = vmatpush1.msra.mxu0 %v1942
        %v1944 = vand.u32 %v1414, 4294901760
        %v1945 = vsub.f32 %v1414, %v1944
        %1946 = vmatprep.mubr.f32.mxu0 %v1945
        %v1947 = vand.u32 %v1413, 4294901760
        %v1948 = vsub.f32 %v1413, %v1947
        %1949 = vmatmul.mubr.f32.gmra.mrb[0].mxu0 %v1948
        %v1950 = vpop.f32.mrb[0].mxu0
        %v1951 = vadd.f32 %v1806, %v1950
        %v1952 = vpop.f32.mrb[0].mxu0
        %v1953 = vand.u32 %v1416, 4294901760
        %v1954 = vsub.f32 %v1416, %v1953
        %1955 = vmatprep.mubr.f32.mxu0 %v1954
        %v1956 = vand.u32 %v1415, 4294901760
        %v1957 = vsub.f32 %v1415, %v1956
        %1958 = vmatmul.mubr.f32.gmra.mrb[0].mxu0 %v1957
        %v1959 = vpop.f32.mrb[0].mxu0
        %v1960 = vadd.f32 %v1813, %v1959
        %v1961 = vpop.f32.mrb[0].mxu0
        %1962 = vdwg.mxu0
        %1963 = vmatprep.subr.mxu0 0.0
        %v1964 = vand.u32 %v1418, 4294901760
        %1965 = vmatpush1.msra.mxu0 %v1964
        %1966 = vmatprep.subr.mxu0 0.0
        %v1967 = vand.u32 %v1419, 4294901760
        %1968 = vmatpush1.msra.mxu0 %v1967
        %1969 = vmatprep.subr.mxu0 0.0
        %v1970 = vand.u32 %v1420, 4294901760
        %1971 = vmatpush1.msra.mxu0 %v1970
        %1972 = vmatprep.subr.mxu0 0.0
        %v1973 = vand.u32 %v1421, 4294901760
        %1974 = vmatpush1.msra.mxu0 %v1973
        %1975 = vmatprep.subr.mxu0 0.0
        %v1976 = vand.u32 %v1422, 4294901760
        %1977 = vmatpush1.msra.mxu0 %v1976
        %1978 = vmatprep.subr.mxu0 0.0
        %v1979 = vand.u32 %v1423, 4294901760
        %1980 = vmatpush1.msra.mxu0 %v1979
        %1981 = vmatprep.subr.mxu0 0.0
        %v1982 = vand.u32 %v1424, 4294901760
        %1983 = vmatpush1.msra.mxu0 %v1982
        %1984 = vmatprep.subr.mxu0 0.0
        %v1985 = vand.u32 %v1425, 4294901760
        %1986 = vmatpush1.msra.mxu0 %v1985
        %1987 = vmatprep.subr.mxu0 0.0
        %v1988 = vand.u32 %v1426, 4294901760
        %1989 = vmatpush1.msra.mxu0 %v1988
        %1990 = vmatprep.subr.mxu0 0.0
        %v1991 = vand.u32 %v1427, 4294901760
        %1992 = vmatpush1.msra.mxu0 %v1991
        %1993 = vmatprep.subr.mxu0 0.0
        %v1994 = vand.u32 %v1428, 4294901760
        %1995 = vmatpush1.msra.mxu0 %v1994
        %1996 = vmatprep.subr.mxu0 0.0
        %v1997 = vand.u32 %v1429, 4294901760
        %1998 = vmatpush1.msra.mxu0 %v1997
        %1999 = vmatprep.subr.mxu0 0.0
        %v2000 = vand.u32 %v1430, 4294901760
        %2001 = vmatpush1.msra.mxu0 %v2000
        %2002 = vmatprep.subr.mxu0 0.0
        %v2003 = vand.u32 %v1431, 4294901760
        %2004 = vmatpush1.msra.mxu0 %v2003
        %2005 = vmatprep.subr.mxu0 0.0
        %v2006 = vand.u32 %v1432, 4294901760
        %2007 = vmatpush1.msra.mxu0 %v2006
        %2008 = vmatprep.subr.mxu0 0.0
        %v2009 = vand.u32 %v1433, 4294901760
        %2010 = vmatpush1.msra.mxu0 %v2009
        %2011 = vmatprep.subr.mxu0 0.0
        %v2012 = vand.u32 %v1434, 4294901760
        %2013 = vmatpush1.msra.mxu0 %v2012
        %2014 = vmatprep.subr.mxu0 0.0
        %v2015 = vand.u32 %v1435, 4294901760
        %2016 = vmatpush1.msra.mxu0 %v2015
        %2017 = vmatprep.subr.mxu0 0.0
        %v2018 = vand.u32 %v1436, 4294901760
        %2019 = vmatpush1.msra.mxu0 %v2018
        %2020 = vmatprep.subr.mxu0 0.0
        %v2021 = vand.u32 %v1437, 4294901760
        %2022 = vmatpush1.msra.mxu0 %v2021
        %2023 = vmatprep.subr.mxu0 0.0
        %v2024 = vand.u32 %v1438, 4294901760
        %2025 = vmatpush1.msra.mxu0 %v2024
        %2026 = vmatprep.subr.mxu0 0.0
        %v2027 = vand.u32 %v1439, 4294901760
        %2028 = vmatpush1.msra.mxu0 %v2027
        %2029 = vmatprep.subr.mxu0 0.0
        %v2030 = vand.u32 %v1440, 4294901760
        %2031 = vmatpush1.msra.mxu0 %v2030
        %2032 = vmatprep.subr.mxu0 0.0
        %v2033 = vand.u32 %v1441, 4294901760
        %2034 = vmatpush1.msra.mxu0 %v2033
        %2035 = vmatprep.subr.mxu0 0.0
        %v2036 = vand.u32 %v1442, 4294901760
        %2037 = vmatpush1.msra.mxu0 %v2036
        %2038 = vmatprep.subr.mxu0 0.0
        %v2039 = vand.u32 %v1443, 4294901760
        %2040 = vmatpush1.msra.mxu0 %v2039
        %2041 = vmatprep.subr.mxu0 0.0
        %v2042 = vand.u32 %v1444, 4294901760
        %2043 = vmatpush1.msra.mxu0 %v2042
        %2044 = vmatprep.subr.mxu0 0.0
        %v2045 = vand.u32 %v1445, 4294901760
        %2046 = vmatpush1.msra.mxu0 %v2045
        %2047 = vmatprep.subr.mxu0 0.0
        %v2048 = vand.u32 %v1446, 4294901760
        %2049 = vmatpush1.msra.mxu0 %v2048
        %2050 = vmatprep.subr.mxu0 0.0
        %v2051 = vand.u32 %v1447, 4294901760
        %2052 = vmatpush1.msra.mxu0 %v2051
        %2053 = vmatprep.subr.mxu0 0.0
        %v2054 = vand.u32 %v1448, 4294901760
        %2055 = vmatpush1.msra.mxu0 %v2054
        %2056 = vmatprep.subr.mxu0 0.0
        %v2057 = vand.u32 %v1449, 4294901760
        %2058 = vmatpush1.msra.mxu0 %v2057
        %v2059 = vand.u32 %v1414, 4294901760
        %v2060 = vsub.f32 %v1414, %v2059
        %v2061 = vand.u32 %v2060, 4294901760
        %2062 = vmatprep.mubr.f32.mxu0 %v2061
        %v2063 = vand.u32 %v1413, 4294901760
        %v2064 = vsub.f32 %v1413, %v2063
        %v2065 = vand.u32 %v2064, 4294901760
        %2066 = vmatmul.mubr.f32.gmra.mrb[0].mxu0 %v2065
        %v2067 = vpop.f32.mrb[0].mxu0
        %v2068 = vadd.f32 %v1951, %v2067
        %v2069 = vpop.f32.mrb[0].mxu0
        %v2070 = vand.u32 %v1416, 4294901760
        %v2071 = vsub.f32 %v1416, %v2070
        %v2072 = vand.u32 %v2071, 4294901760
        %2073 = vmatprep.mubr.f32.mxu0 %v2072
        %v2074 = vand.u32 %v1415, 4294901760
        %v2075 = vsub.f32 %v1415, %v2074
        %v2076 = vand.u32 %v2075, 4294901760
        %2077 = vmatmul.mubr.f32.gmra.mrb[0].mxu0 %v2076
        %v2078 = vpop.f32.mrb[0].mxu0
        %v2079 = vadd.f32 %v1960, %v2078
        %v2080 = vpop.f32.mrb[0].mxu0
        %2081 = vdwg.mxu0
        %2082 = vmatprep.subr.mxu0 0.0
        %v2083 = vand.u32 %v1418, 4294901760
        %v2084 = vsub.f32 %v1418, %v2083
        %v2085 = vand.u32 %v2084, 4294901760
        %2086 = vmatpush1.msra.mxu0 %v2085
        %2087 = vmatprep.subr.mxu0 0.0
        %v2088 = vand.u32 %v1419, 4294901760
        %v2089 = vsub.f32 %v1419, %v2088
        %v2090 = vand.u32 %v2089, 4294901760
        %2091 = vmatpush1.msra.mxu0 %v2090
        %2092 = vmatprep.subr.mxu0 0.0
        %v2093 = vand.u32 %v1420, 4294901760
        %v2094 = vsub.f32 %v1420, %v2093
        %v2095 = vand.u32 %v2094, 4294901760
        %2096 = vmatpush1.msra.mxu0 %v2095
        %2097 = vmatprep.subr.mxu0 0.0
        %v2098 = vand.u32 %v1421, 4294901760
        %v2099 = vsub.f32 %v1421, %v2098
        %v2100 = vand.u32 %v2099, 4294901760
        %2101 = vmatpush1.msra.mxu0 %v2100
        %2102 = vmatprep.subr.mxu0 0.0
        %v2103 = vand.u32 %v1422, 4294901760
        %v2104 = vsub.f32 %v1422, %v2103
        %v2105 = vand.u32 %v2104, 4294901760
        %2106 = vmatpush1.msra.mxu0 %v2105
        %2107 = vmatprep.subr.mxu0 0.0
        %v2108 = vand.u32 %v1423, 4294901760
        %v2109 = vsub.f32 %v1423, %v2108
        %v2110 = vand.u32 %v2109, 4294901760
        %2111 = vmatpush1.msra.mxu0 %v2110
        %2112 = vmatprep.subr.mxu0 0.0
        %v2113 = vand.u32 %v1424, 4294901760
        %v2114 = vsub.f32 %v1424, %v2113
        %v2115 = vand.u32 %v2114, 4294901760
        %2116 = vmatpush1.msra.mxu0 %v2115
        %2117 = vmatprep.subr.mxu0 0.0
        %v2118 = vand.u32 %v1425, 4294901760
        %v2119 = vsub.f32 %v1425, %v2118
        %v2120 = vand.u32 %v2119, 4294901760
        %2121 = vmatpush1.msra.mxu0 %v2120
        %2122 = vmatprep.subr.mxu0 0.0
        %v2123 = vand.u32 %v1426, 4294901760
        %v2124 = vsub.f32 %v1426, %v2123
        %v2125 = vand.u32 %v2124, 4294901760
        %2126 = vmatpush1.msra.mxu0 %v2125
        %2127 = vmatprep.subr.mxu0 0.0
        %v2128 = vand.u32 %v1427, 4294901760
        %v2129 = vsub.f32 %v1427, %v2128
        %v2130 = vand.u32 %v2129, 4294901760
        %2131 = vmatpush1.msra.mxu0 %v2130
        %2132 = vmatprep.subr.mxu0 0.0
        %v2133 = vand.u32 %v1428, 4294901760
        %v2134 = vsub.f32 %v1428, %v2133
        %v2135 = vand.u32 %v2134, 4294901760
        %2136 = vmatpush1.msra.mxu0 %v2135
        %2137 = vmatprep.subr.mxu0 0.0
        %v2138 = vand.u32 %v1429, 4294901760
        %v2139 = vsub.f32 %v1429, %v2138
        %v2140 = vand.u32 %v2139, 4294901760
        %2141 = vmatpush1.msra.mxu0 %v2140
        %2142 = vmatprep.subr.mxu0 0.0
        %v2143 = vand.u32 %v1430, 4294901760
        %v2144 = vsub.f32 %v1430, %v2143
        %v2145 = vand.u32 %v2144, 4294901760
        %2146 = vmatpush1.msra.mxu0 %v2145
        %2147 = vmatprep.subr.mxu0 0.0
        %v2148 = vand.u32 %v1431, 4294901760
        %v2149 = vsub.f32 %v1431, %v2148
        %v2150 = vand.u32 %v2149, 4294901760
        %2151 = vmatpush1.msra.mxu0 %v2150
        %2152 = vmatprep.subr.mxu0 0.0
        %v2153 = vand.u32 %v1432, 4294901760
        %v2154 = vsub.f32 %v1432, %v2153
        %v2155 = vand.u32 %v2154, 4294901760
        %2156 = vmatpush1.msra.mxu0 %v2155
        %2157 = vmatprep.subr.mxu0 0.0
        %v2158 = vand.u32 %v1433, 4294901760
        %v2159 = vsub.f32 %v1433, %v2158
        %v2160 = vand.u32 %v2159, 4294901760
        %2161 = vmatpush1.msra.mxu0 %v2160
        %2162 = vmatprep.subr.mxu0 0.0
        %v2163 = vand.u32 %v1434, 4294901760
        %v2164 = vsub.f32 %v1434, %v2163
        %v2165 = vand.u32 %v2164, 4294901760
        %2166 = vmatpush1.msra.mxu0 %v2165
        %2167 = vmatprep.subr.mxu0 0.0
        %v2168 = vand.u32 %v1435, 4294901760
        %v2169 = vsub.f32 %v1435, %v2168
        %v2170 = vand.u32 %v2169, 4294901760
        %2171 = vmatpush1.msra.mxu0 %v2170
        %2172 = vmatprep.subr.mxu0 0.0
        %v2173 = vand.u32 %v1436, 4294901760
        %v2174 = vsub.f32 %v1436, %v2173
        %v2175 = vand.u32 %v2174, 4294901760
        %2176 = vmatpush1.msra.mxu0 %v2175
        %2177 = vmatprep.subr.mxu0 0.0
        %v2178 = vand.u32 %v1437, 4294901760
        %v2179 = vsub.f32 %v1437, %v2178
        %v2180 = vand.u32 %v2179, 4294901760
        %2181 = vmatpush1.msra.mxu0 %v2180
        %2182 = vmatprep.subr.mxu0 0.0
        %v2183 = vand.u32 %v1438, 4294901760
        %v2184 = vsub.f32 %v1438, %v2183
        %v2185 = vand.u32 %v2184, 4294901760
        %2186 = vmatpush1.msra.mxu0 %v2185
        %2187 = vmatprep.subr.mxu0 0.0
        %v2188 = vand.u32 %v1439, 4294901760
        %v2189 = vsub.f32 %v1439, %v2188
        %v2190 = vand.u32 %v2189, 4294901760
        %2191 = vmatpush1.msra.mxu0 %v2190
        %2192 = vmatprep.subr.mxu0 0.0
        %v2193 = vand.u32 %v1440, 4294901760
        %v2194 = vsub.f32 %v1440, %v2193
        %v2195 = vand.u32 %v2194, 4294901760
        %2196 = vmatpush1.msra.mxu0 %v2195
        %2197 = vmatprep.subr.mxu0 0.0
        %v2198 = vand.u32 %v1441, 4294901760
        %v2199 = vsub.f32 %v1441, %v2198
        %v2200 = vand.u32 %v2199, 4294901760
        %2201 = vmatpush1.msra.mxu0 %v2200
        %2202 = vmatprep.subr.mxu0 0.0
        %v2203 = vand.u32 %v1442, 4294901760
        %v2204 = vsub.f32 %v1442, %v2203
        %v2205 = vand.u32 %v2204, 4294901760
        %2206 = vmatpush1.msra.mxu0 %v2205
        %2207 = vmatprep.subr.mxu0 0.0
        %v2208 = vand.u32 %v1443, 4294901760
        %v2209 = vsub.f32 %v1443, %v2208
        %v2210 = vand.u32 %v2209, 4294901760
        %2211 = vmatpush1.msra.mxu0 %v2210
        %2212 = vmatprep.subr.mxu0 0.0
        %v2213 = vand.u32 %v1444, 4294901760
        %v2214 = vsub.f32 %v1444, %v2213
        %v2215 = vand.u32 %v2214, 4294901760
        %2216 = vmatpush1.msra.mxu0 %v2215
        %2217 = vmatprep.subr.mxu0 0.0
        %v2218 = vand.u32 %v1445, 4294901760
        %v2219 = vsub.f32 %v1445, %v2218
        %v2220 = vand.u32 %v2219, 4294901760
        %2221 = vmatpush1.msra.mxu0 %v2220
        %2222 = vmatprep.subr.mxu0 0.0
        %v2223 = vand.u32 %v1446, 4294901760
        %v2224 = vsub.f32 %v1446, %v2223
        %v2225 = vand.u32 %v2224, 4294901760
        %2226 = vmatpush1.msra.mxu0 %v2225
        %2227 = vmatprep.subr.mxu0 0.0
        %v2228 = vand.u32 %v1447, 4294901760
        %v2229 = vsub.f32 %v1447, %v2228
        %v2230 = vand.u32 %v2229, 4294901760
        %2231 = vmatpush1.msra.mxu0 %v2230
        %2232 = vmatprep.subr.mxu0 0.0
        %v2233 = vand.u32 %v1448, 4294901760
        %v2234 = vsub.f32 %v1448, %v2233
        %v2235 = vand.u32 %v2234, 4294901760
        %2236 = vmatpush1.msra.mxu0 %v2235
        %2237 = vmatprep.subr.mxu0 0.0
        %v2238 = vand.u32 %v1449, 4294901760
        %v2239 = vsub.f32 %v1449, %v2238
        %v2240 = vand.u32 %v2239, 4294901760
        %2241 = vmatpush1.msra.mxu0 %v2240
        %v2242 = vand.u32 %v1414, 4294901760
        %2243 = vmatprep.mubr.f32.mxu0 %v2242
        %v2244 = vand.u32 %v1413, 4294901760
        %2245 = vmatmul.mubr.f32.gmra.mrb[0].mxu0 %v2244
        %v2246 = vpop.f32.mrb[0].mxu0
        %v2247 = vadd.f32 %v2068, %v2246
        %v2248 = vpop.f32.mrb[0].mxu0
        %v2249 = vand.u32 %v1416, 4294901760
        %2250 = vmatprep.mubr.f32.mxu0 %v2249
        %v2251 = vand.u32 %v1415, 4294901760
        %2252 = vmatmul.mubr.f32.gmra.mrb[0].mxu0 %v2251
        %v2253 = vpop.f32.mrb[0].mxu0
        %v2254 = vadd.f32 %v2079, %v2253
        %v2255 = vpop.f32.mrb[0].mxu0
        %2256 = vdwg.mxu0
        %2257 = vmatprep.subr.mxu0 0.0
        %v2258 = vand.u32 %v1418, 4294901760
        %2259 = vmatpush1.msra.mxu0 %v2258
        %2260 = vmatprep.subr.mxu0 0.0
        %v2261 = vand.u32 %v1419, 4294901760
        %2262 = vmatpush1.msra.mxu0 %v2261
        %2263 = vmatprep.subr.mxu0 0.0
        %v2264 = vand.u32 %v1420, 4294901760
        %2265 = vmatpush1.msra.mxu0 %v2264
        %2266 = vmatprep.subr.mxu0 0.0
        %v2267 = vand.u32 %v1421, 4294901760
        %2268 = vmatpush1.msra.mxu0 %v2267
        %2269 = vmatprep.subr.mxu0 0.0
        %v2270 = vand.u32 %v1422, 4294901760
        %2271 = vmatpush1.msra.mxu0 %v2270
        %2272 = vmatprep.subr.mxu0 0.0
        %v2273 = vand.u32 %v1423, 4294901760
        %2274 = vmatpush1.msra.mxu0 %v2273
        %2275 = vmatprep.subr.mxu0 0.0
        %v2276 = vand.u32 %v1424, 4294901760
        %2277 = vmatpush1.msra.mxu0 %v2276
        %2278 = vmatprep.subr.mxu0 0.0
        %v2279 = vand.u32 %v1425, 4294901760
        %2280 = vmatpush1.msra.mxu0 %v2279
        %2281 = vmatprep.subr.mxu0 0.0
        %v2282 = vand.u32 %v1426, 4294901760
        %2283 = vmatpush1.msra.mxu0 %v2282
        %2284 = vmatprep.subr.mxu0 0.0
        %v2285 = vand.u32 %v1427, 4294901760
        %2286 = vmatpush1.msra.mxu0 %v2285
        %2287 = vmatprep.subr.mxu0 0.0
        %v2288 = vand.u32 %v1428, 4294901760
        %2289 = vmatpush1.msra.mxu0 %v2288
        %2290 = vmatprep.subr.mxu0 0.0
        %v2291 = vand.u32 %v1429, 4294901760
        %2292 = vmatpush1.msra.mxu0 %v2291
        %2293 = vmatprep.subr.mxu0 0.0
        %v2294 = vand.u32 %v1430, 4294901760
        %2295 = vmatpush1.msra.mxu0 %v2294
        %2296 = vmatprep.subr.mxu0 0.0
        %v2297 = vand.u32 %v1431, 4294901760
        %2298 = vmatpush1.msra.mxu0 %v2297
        %2299 = vmatprep.subr.mxu0 0.0
        %v2300 = vand.u32 %v1432, 4294901760
        %2301 = vmatpush1.msra.mxu0 %v2300
        %2302 = vmatprep.subr.mxu0 0.0
        %v2303 = vand.u32 %v1433, 4294901760
        %2304 = vmatpush1.msra.mxu0 %v2303
        %2305 = vmatprep.subr.mxu0 0.0
        %v2306 = vand.u32 %v1434, 4294901760
        %2307 = vmatpush1.msra.mxu0 %v2306
        %2308 = vmatprep.subr.mxu0 0.0
        %v2309 = vand.u32 %v1435, 4294901760
        %2310 = vmatpush1.msra.mxu0 %v2309
        %2311 = vmatprep.subr.mxu0 0.0
        %v2312 = vand.u32 %v1436, 4294901760
        %2313 = vmatpush1.msra.mxu0 %v2312
        %2314 = vmatprep.subr.mxu0 0.0
        %v2315 = vand.u32 %v1437, 4294901760
        %2316 = vmatpush1.msra.mxu0 %v2315
        %2317 = vmatprep.subr.mxu0 0.0
        %v2318 = vand.u32 %v1438, 4294901760
        %2319 = vmatpush1.msra.mxu0 %v2318
        %2320 = vmatprep.subr.mxu0 0.0
        %v2321 = vand.u32 %v1439, 4294901760
        %2322 = vmatpush1.msra.mxu0 %v2321
        %2323 = vmatprep.subr.mxu0 0.0
        %v2324 = vand.u32 %v1440, 4294901760
        %2325 = vmatpush1.msra.mxu0 %v2324
        %2326 = vmatprep.subr.mxu0 0.0
        %v2327 = vand.u32 %v1441, 4294901760
        %2328 = vmatpush1.msra.mxu0 %v2327
        %2329 = vmatprep.subr.mxu0 0.0
        %v2330 = vand.u32 %v1442, 4294901760
        %2331 = vmatpush1.msra.mxu0 %v2330
        %2332 = vmatprep.subr.mxu0 0.0
        %v2333 = vand.u32 %v1443, 4294901760
        %2334 = vmatpush1.msra.mxu0 %v2333
        %2335 = vmatprep.subr.mxu0 0.0
        %v2336 = vand.u32 %v1444, 4294901760
        %2337 = vmatpush1.msra.mxu0 %v2336
        %2338 = vmatprep.subr.mxu0 0.0
        %v2339 = vand.u32 %v1445, 4294901760
        %2340 = vmatpush1.msra.mxu0 %v2339
        %2341 = vmatprep.subr.mxu0 0.0
        %v2342 = vand.u32 %v1446, 4294901760
        %2343 = vmatpush1.msra.mxu0 %v2342
        %2344 = vmatprep.subr.mxu0 0.0
        %v2345 = vand.u32 %v1447, 4294901760
        %2346 = vmatpush1.msra.mxu0 %v2345
        %2347 = vmatprep.subr.mxu0 0.0
        %v2348 = vand.u32 %v1448, 4294901760
        %2349 = vmatpush1.msra.mxu0 %v2348
        %2350 = vmatprep.subr.mxu0 0.0
        %v2351 = vand.u32 %v1449, 4294901760
        %2352 = vmatpush1.msra.mxu0 %v2351
        %v2353 = vand.u32 %v1414, 4294901760
        %2354 = vmatprep.mubr.f32.mxu0 %v2353
        %v2355 = vand.u32 %v1413, 4294901760
        %2356 = vmatmul.mubr.f32.gmra.mrb[0].mxu0 %v2355
        %v2357 = vpop.f32.mrb[0].mxu0
        %v2358 = vadd.f32 %v2247, %v2357
        %v2359 = vpop.f32.mrb[0].mxu0
        %v2360 = vand.u32 %v1416, 4294901760
        %2361 = vmatprep.mubr.f32.mxu0 %v2360
        %v2362 = vand.u32 %v1415, 4294901760
        %2363 = vmatmul.mubr.f32.gmra.mrb[0].mxu0 %v2362
        %v2364 = vpop.f32.mrb[0].mxu0
        %v2365 = vadd.f32 %v2254, %v2364
        %v2366 = vpop.f32.mrb[0].mxu0
        %2367 = vdwg.mxu0
        %v2368 = vld [vmem:[#allocation3] sm:$0xff]
        %v2369 = vld [vmem:[#allocation3 + $0x8] sm:$0xff]
        %v2370 = vadd.f32 %v2368, %v2358
        %v2371 = vadd.f32 %v2369, %v2365
        %2372 = vst.msk [vmem:[#allocation3] sm:$0xff] %vm1380, %v2370
        %2373 = vst.msk [vmem:[#allocation3 + $0x8] sm:$0xff] %vm1380, %v2371
        %2374 = vst.msk [vmem:[#allocation2 + $0x7] sm:$0x1] %vm365, 0.0
        %2375 = vst.msk [vmem:[#allocation2 + $0x17] sm:$0x1] %vm365, 0.0
        %v2376 = vld [vmem:[%s368 + $0x1] sm:$0x7f]
        %vm2377 = vcmask 522240
        %2378 = vst.msk [vmem:[%s373] sm:$0x7f] %vm2377, %v2376
        %v2379 = vrot.slane %v361, 1
        %2381 = vst.msk [vmem:[#allocation2] sm:$0x7f] %vm2377, %v2379
        %2382 = vst.msk [vmem:[#allocation2 + $0x7] sm:$0x1] %vm380, 0.0
        %2383 = vst.msk [vmem:[#allocation2 + $0x17] sm:$0x1] %vm380, 0.0
        %v2384 = vld [vmem:[%s317 + $0x1] sm:$0x7f]
        %v2385 = vld [vmem:[%s317 + $0x11] sm:$0x7f]
        %2388 = vrot.lane.b32.xlu0 %v2384, 64
        %v2389 = vpop.permute.xlu0 %2388
        %2390 = vrot.lane.b32.xlu0 %v2385, 64
        %v2391 = vpop.permute.xlu0 %2390
        %vm2394 = vcmask 1047040
        %2395 = vst.msk [vmem:[#allocation2] sm:$0x7f] %vm2394, %v2389
        %2396 = vst.msk [vmem:[#allocation2 + $0x10] sm:$0x7f] %vm2394, %v2391
        %2397 = vst.msk [vmem:[#allocation2 + $0xf] sm:$0x1] %vm365, 0.0
        %2398 = vst.msk [vmem:[#allocation2 + $0x1f] sm:$0x1] %vm365, 0.0
        %v2399 = vld [vmem:[%s368 + $0x1] sm:$0x7f]
        %v2400 = vld [vmem:[%s368 + $0x11] sm:$0x7f]
        %2401 = vst.msk [vmem:[#allocation2 + $0x8] sm:$0x7f] %vm2377, %v2399
        %2402 = vst.msk [vmem:[#allocation2 + $0x18] sm:$0x7f] %vm2377, %v2400
        %2403 = vst.msk [vmem:[#allocation2 + $0xf] sm:$0x1] %vm380, 0.0
        %2404 = vst.msk [vmem:[#allocation2 + $0x1f] sm:$0x1] %vm380, 0.0
        %v2405 = vld [vmem:[%s412 + $0x1] sm:$0x7f]
        %2407 = vrot.lane.b32.xlu0 %v2405, 64
        %v2408 = vpop.permute.xlu0 %2407
        %2410 = vst.msk [vmem:[#allocation2 + $0x8] sm:$0x7f] %vm2394, %v2408
        %v2411 = vrot.slane %v364, 1
        %2412 = vrot.lane.b32.xlu0 %v2411, 64
        %v2413 = vpop.permute.xlu0 %2412
        %2415 = vst.msk [vmem:[%s373 + $0x8] sm:$0x7f] %vm2394, %v2413
        %v2416 = vld [vmem:[#allocation2] sm:$0xff]
        %v2417 = vld [vmem:[#allocation2 + $0x8] sm:$0xff]
        %v2418 = vld [vmem:[#allocation2 + $0x10] sm:$0xff]
        %v2419 = vld [vmem:[#allocation2 + $0x18] sm:$0xff]
        %s2420 = scalar_lea.vmem %s3, 512
        %v2421 = vld [vmem:[%s2420] sm:$0xff]
        %v2422 = vld [vmem:[%s2420 + $0x8] sm:$0xff]
        %v2423 = vld [vmem:[%s2420 + $0x10] sm:$0xff]
        %v2424 = vld [vmem:[%s2420 + $0x18] sm:$0xff]
        %v2425 = vld [vmem:[%s2420 + $0x20] sm:$0xff]
        %v2426 = vld [vmem:[%s2420 + $0x28] sm:$0xff]
        %v2427 = vld [vmem:[%s2420 + $0x30] sm:$0xff]
        %v2428 = vld [vmem:[%s2420 + $0x38] sm:$0xff]
        %v2429 = vld [vmem:[%s2420 + $0x40] sm:$0xff]
        %v2430 = vld [vmem:[%s2420 + $0x48] sm:$0xff]
        %v2431 = vld [vmem:[%s2420 + $0x50] sm:$0xff]
        %v2432 = vld [vmem:[%s2420 + $0x58] sm:$0xff]
        %v2433 = vld [vmem:[%s2420 + $0x60] sm:$0xff]
        %v2434 = vld [vmem:[%s2420 + $0x68] sm:$0xff]
        %v2435 = vld [vmem:[%s2420 + $0x70] sm:$0xff]
        %v2436 = vld [vmem:[%s2420 + $0x78] sm:$0xff]
        %v2437 = vld [vmem:[%s2420 + $0x80] sm:$0xff]
        %v2438 = vld [vmem:[%s2420 + $0x88] sm:$0xff]
        %v2439 = vld [vmem:[%s2420 + $0x90] sm:$0xff]
        %v2440 = vld [vmem:[%s2420 + $0x98] sm:$0xff]
        %v2441 = vld [vmem:[%s2420 + $0xa0] sm:$0xff]
        %v2442 = vld [vmem:[%s2420 + $0xa8] sm:$0xff]
        %v2443 = vld [vmem:[%s2420 + $0xb0] sm:$0xff]
        %v2444 = vld [vmem:[%s2420 + $0xb8] sm:$0xff]
        %v2445 = vld [vmem:[%s2420 + $0xc0] sm:$0xff]
        %v2446 = vld [vmem:[%s2420 + $0xc8] sm:$0xff]
        %v2447 = vld [vmem:[%s2420 + $0xd0] sm:$0xff]
        %v2448 = vld [vmem:[%s2420 + $0xd8] sm:$0xff]
        %v2449 = vld [vmem:[%s2420 + $0xe0] sm:$0xff]
        %v2450 = vld [vmem:[%s2420 + $0xe8] sm:$0xff]
        %v2451 = vld [vmem:[%s2420 + $0xf0] sm:$0xff]
        %v2452 = vld [vmem:[%s2420 + $0xf8] sm:$0xff]
        %2453 = vmatprep.subr.mxu0 0.0
        %v2454 = vand.u32 %v2421, 4294901760
        %2455 = vmatpush1.msra.mxu0 %v2454
        %2456 = vmatprep.subr.mxu0 0.0
        %v2457 = vand.u32 %v2422, 4294901760
        %2458 = vmatpush1.msra.mxu0 %v2457
        %2459 = vmatprep.subr.mxu0 0.0
        %v2460 = vand.u32 %v2423, 4294901760
        %2461 = vmatpush1.msra.mxu0 %v2460
        %2462 = vmatprep.subr.mxu0 0.0
        %v2463 = vand.u32 %v2424, 4294901760
        %2464 = vmatpush1.msra.mxu0 %v2463
        %2465 = vmatprep.subr.mxu0 0.0
        %v2466 = vand.u32 %v2425, 4294901760
        %2467 = vmatpush1.msra.mxu0 %v2466
        %2468 = vmatprep.subr.mxu0 0.0
        %v2469 = vand.u32 %v2426, 4294901760
        %2470 = vmatpush1.msra.mxu0 %v2469
        %2471 = vmatprep.subr.mxu0 0.0
        %v2472 = vand.u32 %v2427, 4294901760
        %2473 = vmatpush1.msra.mxu0 %v2472
        %2474 = vmatprep.subr.mxu0 0.0
        %v2475 = vand.u32 %v2428, 4294901760
        %2476 = vmatpush1.msra.mxu0 %v2475
        %2477 = vmatprep.subr.mxu0 0.0
        %v2478 = vand.u32 %v2429, 4294901760
        %2479 = vmatpush1.msra.mxu0 %v2478
        %2480 = vmatprep.subr.mxu0 0.0
        %v2481 = vand.u32 %v2430, 4294901760
        %2482 = vmatpush1.msra.mxu0 %v2481
        %2483 = vmatprep.subr.mxu0 0.0
        %v2484 = vand.u32 %v2431, 4294901760
        %2485 = vmatpush1.msra.mxu0 %v2484
        %2486 = vmatprep.subr.mxu0 0.0
        %v2487 = vand.u32 %v2432, 4294901760
        %2488 = vmatpush1.msra.mxu0 %v2487
        %2489 = vmatprep.subr.mxu0 0.0
        %v2490 = vand.u32 %v2433, 4294901760
        %2491 = vmatpush1.msra.mxu0 %v2490
        %2492 = vmatprep.subr.mxu0 0.0
        %v2493 = vand.u32 %v2434, 4294901760
        %2494 = vmatpush1.msra.mxu0 %v2493
        %2495 = vmatprep.subr.mxu0 0.0
        %v2496 = vand.u32 %v2435, 4294901760
        %2497 = vmatpush1.msra.mxu0 %v2496
        %2498 = vmatprep.subr.mxu0 0.0
        %v2499 = vand.u32 %v2436, 4294901760
        %2500 = vmatpush1.msra.mxu0 %v2499
        %2501 = vmatprep.subr.mxu0 0.0
        %v2502 = vand.u32 %v2437, 4294901760
        %2503 = vmatpush1.msra.mxu0 %v2502
        %2504 = vmatprep.subr.mxu0 0.0
        %v2505 = vand.u32 %v2438, 4294901760
        %2506 = vmatpush1.msra.mxu0 %v2505
        %2507 = vmatprep.subr.mxu0 0.0
        %v2508 = vand.u32 %v2439, 4294901760
        %2509 = vmatpush1.msra.mxu0 %v2508
        %2510 = vmatprep.subr.mxu0 0.0
        %v2511 = vand.u32 %v2440, 4294901760
        %2512 = vmatpush1.msra.mxu0 %v2511
        %2513 = vmatprep.subr.mxu0 0.0
        %v2514 = vand.u32 %v2441, 4294901760
        %2515 = vmatpush1.msra.mxu0 %v2514
        %2516 = vmatprep.subr.mxu0 0.0
        %v2517 = vand.u32 %v2442, 4294901760
        %2518 = vmatpush1.msra.mxu0 %v2517
        %2519 = vmatprep.subr.mxu0 0.0
        %v2520 = vand.u32 %v2443, 4294901760
        %2521 = vmatpush1.msra.mxu0 %v2520
        %2522 = vmatprep.subr.mxu0 0.0
        %v2523 = vand.u32 %v2444, 4294901760
        %2524 = vmatpush1.msra.mxu0 %v2523
        %2525 = vmatprep.subr.mxu0 0.0
        %v2526 = vand.u32 %v2445, 4294901760
        %2527 = vmatpush1.msra.mxu0 %v2526
        %2528 = vmatprep.subr.mxu0 0.0
        %v2529 = vand.u32 %v2446, 4294901760
        %2530 = vmatpush1.msra.mxu0 %v2529
        %2531 = vmatprep.subr.mxu0 0.0
        %v2532 = vand.u32 %v2447, 4294901760
        %2533 = vmatpush1.msra.mxu0 %v2532
        %2534 = vmatprep.subr.mxu0 0.0
        %v2535 = vand.u32 %v2448, 4294901760
        %2536 = vmatpush1.msra.mxu0 %v2535
        %2537 = vmatprep.subr.mxu0 0.0
        %v2538 = vand.u32 %v2449, 4294901760
        %2539 = vmatpush1.msra.mxu0 %v2538
        %2540 = vmatprep.subr.mxu0 0.0
        %v2541 = vand.u32 %v2450, 4294901760
        %2542 = vmatpush1.msra.mxu0 %v2541
        %2543 = vmatprep.subr.mxu0 0.0
        %v2544 = vand.u32 %v2451, 4294901760
        %2545 = vmatpush1.msra.mxu0 %v2544
        %2546 = vmatprep.subr.mxu0 0.0
        %v2547 = vand.u32 %v2452, 4294901760
        %2548 = vmatpush1.msra.mxu0 %v2547
        %v2549 = vand.u32 %v2417, 4294901760
        %v2550 = vsub.f32 %v2417, %v2549
        %v2551 = vand.u32 %v2550, 4294901760
        %v2552 = vsub.f32 %v2550, %v2551
        %v2553 = vand.u32 %v2552, 4294901760
        %2554 = vmatprep.mubr.f32.mxu0 %v2553
        %v2555 = vand.u32 %v2416, 4294901760
        %v2556 = vsub.f32 %v2416, %v2555
        %v2557 = vand.u32 %v2556, 4294901760
        %v2558 = vsub.f32 %v2556, %v2557
        %v2559 = vand.u32 %v2558, 4294901760
        %2560 = vmatmul.mubr.f32.gmra.mrb[0].mxu0 %v2559
        %v2561 = vpop.f32.mrb[0].mxu0
        %v2562 = vadd.f32 0.0, %v2561
        %v2563 = vpop.f32.mrb[0].mxu0
        %v2564 = vand.u32 %v2419, 4294901760
        %v2565 = vsub.f32 %v2419, %v2564
        %v2566 = vand.u32 %v2565, 4294901760
        %v2567 = vsub.f32 %v2565, %v2566
        %v2568 = vand.u32 %v2567, 4294901760
        %2569 = vmatprep.mubr.f32.mxu0 %v2568
        %v2570 = vand.u32 %v2418, 4294901760
        %v2571 = vsub.f32 %v2418, %v2570
        %v2572 = vand.u32 %v2571, 4294901760
        %v2573 = vsub.f32 %v2571, %v2572
        %v2574 = vand.u32 %v2573, 4294901760
        %2575 = vmatmul.mubr.f32.gmra.mrb[0].mxu0 %v2574
        %v2576 = vpop.f32.mrb[0].mxu0
        %v2577 = vadd.f32 0.0, %v2576
        %v2578 = vpop.f32.mrb[0].mxu0
        %2579 = vdwg.mxu0
        %2580 = vmatprep.subr.mxu0 0.0
        %v2581 = vand.u32 %v2421, 4294901760
        %v2582 = vsub.f32 %v2421, %v2581
        %v2583 = vand.u32 %v2582, 4294901760
        %v2584 = vsub.f32 %v2582, %v2583
        %v2585 = vand.u32 %v2584, 4294901760
        %2586 = vmatpush1.msra.mxu0 %v2585
        %2587 = vmatprep.subr.mxu0 0.0
        %v2588 = vand.u32 %v2422, 4294901760
        %v2589 = vsub.f32 %v2422, %v2588
        %v2590 = vand.u32 %v2589, 4294901760
        %v2591 = vsub.f32 %v2589, %v2590
        %v2592 = vand.u32 %v2591, 4294901760
        %2593 = vmatpush1.msra.mxu0 %v2592
        %2594 = vmatprep.subr.mxu0 0.0
        %v2595 = vand.u32 %v2423, 4294901760
        %v2596 = vsub.f32 %v2423, %v2595
        %v2597 = vand.u32 %v2596, 4294901760
        %v2598 = vsub.f32 %v2596, %v2597
        %v2599 = vand.u32 %v2598, 4294901760
        %2600 = vmatpush1.msra.mxu0 %v2599
        %2601 = vmatprep.subr.mxu0 0.0
        %v2602 = vand.u32 %v2424, 4294901760
        %v2603 = vsub.f32 %v2424, %v2602
        %v2604 = vand.u32 %v2603, 4294901760
        %v2605 = vsub.f32 %v2603, %v2604
        %v2606 = vand.u32 %v2605, 4294901760
        %2607 = vmatpush1.msra.mxu0 %v2606
        %2608 = vmatprep.subr.mxu0 0.0
        %v2609 = vand.u32 %v2425, 4294901760
        %v2610 = vsub.f32 %v2425, %v2609
        %v2611 = vand.u32 %v2610, 4294901760
        %v2612 = vsub.f32 %v2610, %v2611
        %v2613 = vand.u32 %v2612, 4294901760
        %2614 = vmatpush1.msra.mxu0 %v2613
        %2615 = vmatprep.subr.mxu0 0.0
        %v2616 = vand.u32 %v2426, 4294901760
        %v2617 = vsub.f32 %v2426, %v2616
        %v2618 = vand.u32 %v2617, 4294901760
        %v2619 = vsub.f32 %v2617, %v2618
        %v2620 = vand.u32 %v2619, 4294901760
        %2621 = vmatpush1.msra.mxu0 %v2620
        %2622 = vmatprep.subr.mxu0 0.0
        %v2623 = vand.u32 %v2427, 4294901760
        %v2624 = vsub.f32 %v2427, %v2623
        %v2625 = vand.u32 %v2624, 4294901760
        %v2626 = vsub.f32 %v2624, %v2625
        %v2627 = vand.u32 %v2626, 4294901760
        %2628 = vmatpush1.msra.mxu0 %v2627
        %2629 = vmatprep.subr.mxu0 0.0
        %v2630 = vand.u32 %v2428, 4294901760
        %v2631 = vsub.f32 %v2428, %v2630
        %v2632 = vand.u32 %v2631, 4294901760
        %v2633 = vsub.f32 %v2631, %v2632
        %v2634 = vand.u32 %v2633, 4294901760
        %2635 = vmatpush1.msra.mxu0 %v2634
        %2636 = vmatprep.subr.mxu0 0.0
        %v2637 = vand.u32 %v2429, 4294901760
        %v2638 = vsub.f32 %v2429, %v2637
        %v2639 = vand.u32 %v2638, 4294901760
        %v2640 = vsub.f32 %v2638, %v2639
        %v2641 = vand.u32 %v2640, 4294901760
        %2642 = vmatpush1.msra.mxu0 %v2641
        %2643 = vmatprep.subr.mxu0 0.0
        %v2644 = vand.u32 %v2430, 4294901760
        %v2645 = vsub.f32 %v2430, %v2644
        %v2646 = vand.u32 %v2645, 4294901760
        %v2647 = vsub.f32 %v2645, %v2646
        %v2648 = vand.u32 %v2647, 4294901760
        %2649 = vmatpush1.msra.mxu0 %v2648
        %2650 = vmatprep.subr.mxu0 0.0
        %v2651 = vand.u32 %v2431, 4294901760
        %v2652 = vsub.f32 %v2431, %v2651
        %v2653 = vand.u32 %v2652, 4294901760
        %v2654 = vsub.f32 %v2652, %v2653
        %v2655 = vand.u32 %v2654, 4294901760
        %2656 = vmatpush1.msra.mxu0 %v2655
        %2657 = vmatprep.subr.mxu0 0.0
        %v2658 = vand.u32 %v2432, 4294901760
        %v2659 = vsub.f32 %v2432, %v2658
        %v2660 = vand.u32 %v2659, 4294901760
        %v2661 = vsub.f32 %v2659, %v2660
        %v2662 = vand.u32 %v2661, 4294901760
        %2663 = vmatpush1.msra.mxu0 %v2662
        %2664 = vmatprep.subr.mxu0 0.0
        %v2665 = vand.u32 %v2433, 4294901760
        %v2666 = vsub.f32 %v2433, %v2665
        %v2667 = vand.u32 %v2666, 4294901760
        %v2668 = vsub.f32 %v2666, %v2667
        %v2669 = vand.u32 %v2668, 4294901760
        %2670 = vmatpush1.msra.mxu0 %v2669
        %2671 = vmatprep.subr.mxu0 0.0
        %v2672 = vand.u32 %v2434, 4294901760
        %v2673 = vsub.f32 %v2434, %v2672
        %v2674 = vand.u32 %v2673, 4294901760
        %v2675 = vsub.f32 %v2673, %v2674
        %v2676 = vand.u32 %v2675, 4294901760
        %2677 = vmatpush1.msra.mxu0 %v2676
        %2678 = vmatprep.subr.mxu0 0.0
        %v2679 = vand.u32 %v2435, 4294901760
        %v2680 = vsub.f32 %v2435, %v2679
        %v2681 = vand.u32 %v2680, 4294901760
        %v2682 = vsub.f32 %v2680, %v2681
        %v2683 = vand.u32 %v2682, 4294901760
        %2684 = vmatpush1.msra.mxu0 %v2683
        %2685 = vmatprep.subr.mxu0 0.0
        %v2686 = vand.u32 %v2436, 4294901760
        %v2687 = vsub.f32 %v2436, %v2686
        %v2688 = vand.u32 %v2687, 4294901760
        %v2689 = vsub.f32 %v2687, %v2688
        %v2690 = vand.u32 %v2689, 4294901760
        %2691 = vmatpush1.msra.mxu0 %v2690
        %2692 = vmatprep.subr.mxu0 0.0
        %v2693 = vand.u32 %v2437, 4294901760
        %v2694 = vsub.f32 %v2437, %v2693
        %v2695 = vand.u32 %v2694, 4294901760
        %v2696 = vsub.f32 %v2694, %v2695
        %v2697 = vand.u32 %v2696, 4294901760
        %2698 = vmatpush1.msra.mxu0 %v2697
        %2699 = vmatprep.subr.mxu0 0.0
        %v2700 = vand.u32 %v2438, 4294901760
        %v2701 = vsub.f32 %v2438, %v2700
        %v2702 = vand.u32 %v2701, 4294901760
        %v2703 = vsub.f32 %v2701, %v2702
        %v2704 = vand.u32 %v2703, 4294901760
        %2705 = vmatpush1.msra.mxu0 %v2704
        %2706 = vmatprep.subr.mxu0 0.0
        %v2707 = vand.u32 %v2439, 4294901760
        %v2708 = vsub.f32 %v2439, %v2707
        %v2709 = vand.u32 %v2708, 4294901760
        %v2710 = vsub.f32 %v2708, %v2709
        %v2711 = vand.u32 %v2710, 4294901760
        %2712 = vmatpush1.msra.mxu0 %v2711
        %2713 = vmatprep.subr.mxu0 0.0
        %v2714 = vand.u32 %v2440, 4294901760
        %v2715 = vsub.f32 %v2440, %v2714
        %v2716 = vand.u32 %v2715, 4294901760
        %v2717 = vsub.f32 %v2715, %v2716
        %v2718 = vand.u32 %v2717, 4294901760
        %2719 = vmatpush1.msra.mxu0 %v2718
        %2720 = vmatprep.subr.mxu0 0.0
        %v2721 = vand.u32 %v2441, 4294901760
        %v2722 = vsub.f32 %v2441, %v2721
        %v2723 = vand.u32 %v2722, 4294901760
        %v2724 = vsub.f32 %v2722, %v2723
        %v2725 = vand.u32 %v2724, 4294901760
        %2726 = vmatpush1.msra.mxu0 %v2725
        %2727 = vmatprep.subr.mxu0 0.0
        %v2728 = vand.u32 %v2442, 4294901760
        %v2729 = vsub.f32 %v2442, %v2728
        %v2730 = vand.u32 %v2729, 4294901760
        %v2731 = vsub.f32 %v2729, %v2730
        %v2732 = vand.u32 %v2731, 4294901760
        %2733 = vmatpush1.msra.mxu0 %v2732
        %2734 = vmatprep.subr.mxu0 0.0
        %v2735 = vand.u32 %v2443, 4294901760
        %v2736 = vsub.f32 %v2443, %v2735
        %v2737 = vand.u32 %v2736, 4294901760
        %v2738 = vsub.f32 %v2736, %v2737
        %v2739 = vand.u32 %v2738, 4294901760
        %2740 = vmatpush1.msra.mxu0 %v2739
        %2741 = vmatprep.subr.mxu0 0.0
        %v2742 = vand.u32 %v2444, 4294901760
        %v2743 = vsub.f32 %v2444, %v2742
        %v2744 = vand.u32 %v2743, 4294901760
        %v2745 = vsub.f32 %v2743, %v2744
        %v2746 = vand.u32 %v2745, 4294901760
        %2747 = vmatpush1.msra.mxu0 %v2746
        %2748 = vmatprep.subr.mxu0 0.0
        %v2749 = vand.u32 %v2445, 4294901760
        %v2750 = vsub.f32 %v2445, %v2749
        %v2751 = vand.u32 %v2750, 4294901760
        %v2752 = vsub.f32 %v2750, %v2751
        %v2753 = vand.u32 %v2752, 4294901760
        %2754 = vmatpush1.msra.mxu0 %v2753
        %2755 = vmatprep.subr.mxu0 0.0
        %v2756 = vand.u32 %v2446, 4294901760
        %v2757 = vsub.f32 %v2446, %v2756
        %v2758 = vand.u32 %v2757, 4294901760
        %v2759 = vsub.f32 %v2757, %v2758
        %v2760 = vand.u32 %v2759, 4294901760
        %2761 = vmatpush1.msra.mxu0 %v2760
        %2762 = vmatprep.subr.mxu0 0.0
        %v2763 = vand.u32 %v2447, 4294901760
        %v2764 = vsub.f32 %v2447, %v2763
        %v2765 = vand.u32 %v2764, 4294901760
        %v2766 = vsub.f32 %v2764, %v2765
        %v2767 = vand.u32 %v2766, 4294901760
        %2768 = vmatpush1.msra.mxu0 %v2767
        %2769 = vmatprep.subr.mxu0 0.0
        %v2770 = vand.u32 %v2448, 4294901760
        %v2771 = vsub.f32 %v2448, %v2770
        %v2772 = vand.u32 %v2771, 4294901760
        %v2773 = vsub.f32 %v2771, %v2772
        %v2774 = vand.u32 %v2773, 4294901760
        %2775 = vmatpush1.msra.mxu0 %v2774
        %2776 = vmatprep.subr.mxu0 0.0
        %v2777 = vand.u32 %v2449, 4294901760
        %v2778 = vsub.f32 %v2449, %v2777
        %v2779 = vand.u32 %v2778, 4294901760
        %v2780 = vsub.f32 %v2778, %v2779
        %v2781 = vand.u32 %v2780, 4294901760
        %2782 = vmatpush1.msra.mxu0 %v2781
        %2783 = vmatprep.subr.mxu0 0.0
        %v2784 = vand.u32 %v2450, 4294901760
        %v2785 = vsub.f32 %v2450, %v2784
        %v2786 = vand.u32 %v2785, 4294901760
        %v2787 = vsub.f32 %v2785, %v2786
        %v2788 = vand.u32 %v2787, 4294901760
        %2789 = vmatpush1.msra.mxu0 %v2788
        %2790 = vmatprep.subr.mxu0 0.0
        %v2791 = vand.u32 %v2451, 4294901760
        %v2792 = vsub.f32 %v2451, %v2791
        %v2793 = vand.u32 %v2792, 4294901760
        %v2794 = vsub.f32 %v2792, %v2793
        %v2795 = vand.u32 %v2794, 4294901760
        %2796 = vmatpush1.msra.mxu0 %v2795
        %2797 = vmatprep.subr.mxu0 0.0
        %v2798 = vand.u32 %v2452, 4294901760
        %v2799 = vsub.f32 %v2452, %v2798
        %v2800 = vand.u32 %v2799, 4294901760
        %v2801 = vsub.f32 %v2799, %v2800
        %v2802 = vand.u32 %v2801, 4294901760
        %2803 = vmatpush1.msra.mxu0 %v2802
        %v2804 = vand.u32 %v2417, 4294901760
        %2805 = vmatprep.mubr.f32.mxu0 %v2804
        %v2806 = vand.u32 %v2416, 4294901760
        %2807 = vmatmul.mubr.f32.gmra.mrb[0].mxu0 %v2806
        %v2808 = vpop.f32.mrb[0].mxu0
        %v2809 = vadd.f32 %v2562, %v2808
        %v2810 = vpop.f32.mrb[0].mxu0
        %v2811 = vand.u32 %v2419, 4294901760
        %2812 = vmatprep.mubr.f32.mxu0 %v2811
        %v2813 = vand.u32 %v2418, 4294901760
        %2814 = vmatmul.mubr.f32.gmra.mrb[0].mxu0 %v2813
        %v2815 = vpop.f32.mrb[0].mxu0
        %v2816 = vadd.f32 %v2577, %v2815
        %v2817 = vpop.f32.mrb[0].mxu0
        %2818 = vdwg.mxu0
        %2819 = vmatprep.subr.mxu0 0.0
        %v2820 = vand.u32 %v2421, 4294901760
        %v2821 = vsub.f32 %v2421, %v2820
        %2822 = vmatpush1.msra.mxu0 %v2821
        %2823 = vmatprep.subr.mxu0 0.0
        %v2824 = vand.u32 %v2422, 4294901760
        %v2825 = vsub.f32 %v2422, %v2824
        %2826 = vmatpush1.msra.mxu0 %v2825
        %2827 = vmatprep.subr.mxu0 0.0
        %v2828 = vand.u32 %v2423, 4294901760
        %v2829 = vsub.f32 %v2423, %v2828
        %2830 = vmatpush1.msra.mxu0 %v2829
        %2831 = vmatprep.subr.mxu0 0.0
        %v2832 = vand.u32 %v2424, 4294901760
        %v2833 = vsub.f32 %v2424, %v2832
        %2834 = vmatpush1.msra.mxu0 %v2833
        %2835 = vmatprep.subr.mxu0 0.0
        %v2836 = vand.u32 %v2425, 4294901760
        %v2837 = vsub.f32 %v2425, %v2836
        %2838 = vmatpush1.msra.mxu0 %v2837
        %2839 = vmatprep.subr.mxu0 0.0
        %v2840 = vand.u32 %v2426, 4294901760
        %v2841 = vsub.f32 %v2426, %v2840
        %2842 = vmatpush1.msra.mxu0 %v2841
        %2843 = vmatprep.subr.mxu0 0.0
        %v2844 = vand.u32 %v2427, 4294901760
        %v2845 = vsub.f32 %v2427, %v2844
        %2846 = vmatpush1.msra.mxu0 %v2845
        %2847 = vmatprep.subr.mxu0 0.0
        %v2848 = vand.u32 %v2428, 4294901760
        %v2849 = vsub.f32 %v2428, %v2848
        %2850 = vmatpush1.msra.mxu0 %v2849
        %2851 = vmatprep.subr.mxu0 0.0
        %v2852 = vand.u32 %v2429, 4294901760
        %v2853 = vsub.f32 %v2429, %v2852
        %2854 = vmatpush1.msra.mxu0 %v2853
        %2855 = vmatprep.subr.mxu0 0.0
        %v2856 = vand.u32 %v2430, 4294901760
        %v2857 = vsub.f32 %v2430, %v2856
        %2858 = vmatpush1.msra.mxu0 %v2857
        %2859 = vmatprep.subr.mxu0 0.0
        %v2860 = vand.u32 %v2431, 4294901760
        %v2861 = vsub.f32 %v2431, %v2860
        %2862 = vmatpush1.msra.mxu0 %v2861
        %2863 = vmatprep.subr.mxu0 0.0
        %v2864 = vand.u32 %v2432, 4294901760
        %v2865 = vsub.f32 %v2432, %v2864
        %2866 = vmatpush1.msra.mxu0 %v2865
        %2867 = vmatprep.subr.mxu0 0.0
        %v2868 = vand.u32 %v2433, 4294901760
        %v2869 = vsub.f32 %v2433, %v2868
        %2870 = vmatpush1.msra.mxu0 %v2869
        %2871 = vmatprep.subr.mxu0 0.0
        %v2872 = vand.u32 %v2434, 4294901760
        %v2873 = vsub.f32 %v2434, %v2872
        %2874 = vmatpush1.msra.mxu0 %v2873
        %2875 = vmatprep.subr.mxu0 0.0
        %v2876 = vand.u32 %v2435, 4294901760
        %v2877 = vsub.f32 %v2435, %v2876
        %2878 = vmatpush1.msra.mxu0 %v2877
        %2879 = vmatprep.subr.mxu0 0.0
        %v2880 = vand.u32 %v2436, 4294901760
        %v2881 = vsub.f32 %v2436, %v2880
        %2882 = vmatpush1.msra.mxu0 %v2881
        %2883 = vmatprep.subr.mxu0 0.0
        %v2884 = vand.u32 %v2437, 4294901760
        %v2885 = vsub.f32 %v2437, %v2884
        %2886 = vmatpush1.msra.mxu0 %v2885
        %2887 = vmatprep.subr.mxu0 0.0
        %v2888 = vand.u32 %v2438, 4294901760
        %v2889 = vsub.f32 %v2438, %v2888
        %2890 = vmatpush1.msra.mxu0 %v2889
        %2891 = vmatprep.subr.mxu0 0.0
        %v2892 = vand.u32 %v2439, 4294901760
        %v2893 = vsub.f32 %v2439, %v2892
        %2894 = vmatpush1.msra.mxu0 %v2893
        %2895 = vmatprep.subr.mxu0 0.0
        %v2896 = vand.u32 %v2440, 4294901760
        %v2897 = vsub.f32 %v2440, %v2896
        %2898 = vmatpush1.msra.mxu0 %v2897
        %2899 = vmatprep.subr.mxu0 0.0
        %v2900 = vand.u32 %v2441, 4294901760
        %v2901 = vsub.f32 %v2441, %v2900
        %2902 = vmatpush1.msra.mxu0 %v2901
        %2903 = vmatprep.subr.mxu0 0.0
        %v2904 = vand.u32 %v2442, 4294901760
        %v2905 = vsub.f32 %v2442, %v2904
        %2906 = vmatpush1.msra.mxu0 %v2905
        %2907 = vmatprep.subr.mxu0 0.0
        %v2908 = vand.u32 %v2443, 4294901760
        %v2909 = vsub.f32 %v2443, %v2908
        %2910 = vmatpush1.msra.mxu0 %v2909
        %2911 = vmatprep.subr.mxu0 0.0
        %v2912 = vand.u32 %v2444, 4294901760
        %v2913 = vsub.f32 %v2444, %v2912
        %2914 = vmatpush1.msra.mxu0 %v2913
        %2915 = vmatprep.subr.mxu0 0.0
        %v2916 = vand.u32 %v2445, 4294901760
        %v2917 = vsub.f32 %v2445, %v2916
        %2918 = vmatpush1.msra.mxu0 %v2917
        %2919 = vmatprep.subr.mxu0 0.0
        %v2920 = vand.u32 %v2446, 4294901760
        %v2921 = vsub.f32 %v2446, %v2920
        %2922 = vmatpush1.msra.mxu0 %v2921
        %2923 = vmatprep.subr.mxu0 0.0
        %v2924 = vand.u32 %v2447, 4294901760
        %v2925 = vsub.f32 %v2447, %v2924
        %2926 = vmatpush1.msra.mxu0 %v2925
        %2927 = vmatprep.subr.mxu0 0.0
        %v2928 = vand.u32 %v2448, 4294901760
        %v2929 = vsub.f32 %v2448, %v2928
        %2930 = vmatpush1.msra.mxu0 %v2929
        %2931 = vmatprep.subr.mxu0 0.0
        %v2932 = vand.u32 %v2449, 4294901760
        %v2933 = vsub.f32 %v2449, %v2932
        %2934 = vmatpush1.msra.mxu0 %v2933
        %2935 = vmatprep.subr.mxu0 0.0
        %v2936 = vand.u32 %v2450, 4294901760
        %v2937 = vsub.f32 %v2450, %v2936
        %2938 = vmatpush1.msra.mxu0 %v2937
        %2939 = vmatprep.subr.mxu0 0.0
        %v2940 = vand.u32 %v2451, 4294901760
        %v2941 = vsub.f32 %v2451, %v2940
        %2942 = vmatpush1.msra.mxu0 %v2941
        %2943 = vmatprep.subr.mxu0 0.0
        %v2944 = vand.u32 %v2452, 4294901760
        %v2945 = vsub.f32 %v2452, %v2944
        %2946 = vmatpush1.msra.mxu0 %v2945
        %v2947 = vand.u32 %v2417, 4294901760
        %v2948 = vsub.f32 %v2417, %v2947
        %2949 = vmatprep.mubr.f32.mxu0 %v2948
        %v2950 = vand.u32 %v2416, 4294901760
        %v2951 = vsub.f32 %v2416, %v2950
        %2952 = vmatmul.mubr.f32.gmra.mrb[0].mxu0 %v2951
        %v2953 = vpop.f32.mrb[0].mxu0
        %v2954 = vadd.f32 %v2809, %v2953
        %v2955 = vpop.f32.mrb[0].mxu0
        %v2956 = vand.u32 %v2419, 4294901760
        %v2957 = vsub.f32 %v2419, %v2956
        %2958 = vmatprep.mubr.f32.mxu0 %v2957
        %v2959 = vand.u32 %v2418, 4294901760
        %v2960 = vsub.f32 %v2418, %v2959
        %2961 = vmatmul.mubr.f32.gmra.mrb[0].mxu0 %v2960
        %v2962 = vpop.f32.mrb[0].mxu0
        %v2963 = vadd.f32 %v2816, %v2962
        %v2964 = vpop.f32.mrb[0].mxu0
        %2965 = vdwg.mxu0
        %2966 = vmatprep.subr.mxu0 0.0
        %v2967 = vand.u32 %v2421, 4294901760
        %2968 = vmatpush1.msra.mxu0 %v2967
        %2969 = vmatprep.subr.mxu0 0.0
        %v2970 = vand.u32 %v2422, 4294901760
        %2971 = vmatpush1.msra.mxu0 %v2970
        %2972 = vmatprep.subr.mxu0 0.0
        %v2973 = vand.u32 %v2423, 4294901760
        %2974 = vmatpush1.msra.mxu0 %v2973
        %2975 = vmatprep.subr.mxu0 0.0
        %v2976 = vand.u32 %v2424, 4294901760
        %2977 = vmatpush1.msra.mxu0 %v2976
        %2978 = vmatprep.subr.mxu0 0.0
        %v2979 = vand.u32 %v2425, 4294901760
        %2980 = vmatpush1.msra.mxu0 %v2979
        %2981 = vmatprep.subr.mxu0 0.0
        %v2982 = vand.u32 %v2426, 4294901760
        %2983 = vmatpush1.msra.mxu0 %v2982
        %2984 = vmatprep.subr.mxu0 0.0
        %v2985 = vand.u32 %v2427, 4294901760
        %2986 = vmatpush1.msra.mxu0 %v2985
        %2987 = vmatprep.subr.mxu0 0.0
        %v2988 = vand.u32 %v2428, 4294901760
        %2989 = vmatpush1.msra.mxu0 %v2988
        %2990 = vmatprep.subr.mxu0 0.0
        %v2991 = vand.u32 %v2429, 4294901760
        %2992 = vmatpush1.msra.mxu0 %v2991
        %2993 = vmatprep.subr.mxu0 0.0
        %v2994 = vand.u32 %v2430, 4294901760
        %2995 = vmatpush1.msra.mxu0 %v2994
        %2996 = vmatprep.subr.mxu0 0.0
        %v2997 = vand.u32 %v2431, 4294901760
        %2998 = vmatpush1.msra.mxu0 %v2997
        %2999 = vmatprep.subr.mxu0 0.0
        %v3000 = vand.u32 %v2432, 4294901760
        %3001 = vmatpush1.msra.mxu0 %v3000
        %3002 = vmatprep.subr.mxu0 0.0
        %v3003 = vand.u32 %v2433, 4294901760
        %3004 = vmatpush1.msra.mxu0 %v3003
        %3005 = vmatprep.subr.mxu0 0.0
        %v3006 = vand.u32 %v2434, 4294901760
        %3007 = vmatpush1.msra.mxu0 %v3006
        %3008 = vmatprep.subr.mxu0 0.0
        %v3009 = vand.u32 %v2435, 4294901760
        %3010 = vmatpush1.msra.mxu0 %v3009
        %3011 = vmatprep.subr.mxu0 0.0
        %v3012 = vand.u32 %v2436, 4294901760
        %3013 = vmatpush1.msra.mxu0 %v3012
        %3014 = vmatprep.subr.mxu0 0.0
        %v3015 = vand.u32 %v2437, 4294901760
        %3016 = vmatpush1.msra.mxu0 %v3015
        %3017 = vmatprep.subr.mxu0 0.0
        %v3018 = vand.u32 %v2438, 4294901760
        %3019 = vmatpush1.msra.mxu0 %v3018
        %3020 = vmatprep.subr.mxu0 0.0
        %v3021 = vand.u32 %v2439, 4294901760
        %3022 = vmatpush1.msra.mxu0 %v3021
        %3023 = vmatprep.subr.mxu0 0.0
        %v3024 = vand.u32 %v2440, 4294901760
        %3025 = vmatpush1.msra.mxu0 %v3024
        %3026 = vmatprep.subr.mxu0 0.0
        %v3027 = vand.u32 %v2441, 4294901760
        %3028 = vmatpush1.msra.mxu0 %v3027
        %3029 = vmatprep.subr.mxu0 0.0
        %v3030 = vand.u32 %v2442, 4294901760
        %3031 = vmatpush1.msra.mxu0 %v3030
        %3032 = vmatprep.subr.mxu0 0.0
        %v3033 = vand.u32 %v2443, 4294901760
        %3034 = vmatpush1.msra.mxu0 %v3033
        %3035 = vmatprep.subr.mxu0 0.0
        %v3036 = vand.u32 %v2444, 4294901760
        %3037 = vmatpush1.msra.mxu0 %v3036
        %3038 = vmatprep.subr.mxu0 0.0
        %v3039 = vand.u32 %v2445, 4294901760
        %3040 = vmatpush1.msra.mxu0 %v3039
        %3041 = vmatprep.subr.mxu0 0.0
        %v3042 = vand.u32 %v2446, 4294901760
        %3043 = vmatpush1.msra.mxu0 %v3042
        %3044 = vmatprep.subr.mxu0 0.0
        %v3045 = vand.u32 %v2447, 4294901760
        %3046 = vmatpush1.msra.mxu0 %v3045
        %3047 = vmatprep.subr.mxu0 0.0
        %v3048 = vand.u32 %v2448, 4294901760
        %3049 = vmatpush1.msra.mxu0 %v3048
        %3050 = vmatprep.subr.mxu0 0.0
        %v3051 = vand.u32 %v2449, 4294901760
        %3052 = vmatpush1.msra.mxu0 %v3051
        %3053 = vmatprep.subr.mxu0 0.0
        %v3054 = vand.u32 %v2450, 4294901760
        %3055 = vmatpush1.msra.mxu0 %v3054
        %3056 = vmatprep.subr.mxu0 0.0
        %v3057 = vand.u32 %v2451, 4294901760
        %3058 = vmatpush1.msra.mxu0 %v3057
        %3059 = vmatprep.subr.mxu0 0.0
        %v3060 = vand.u32 %v2452, 4294901760
        %3061 = vmatpush1.msra.mxu0 %v3060
        %v3062 = vand.u32 %v2417, 4294901760
        %v3063 = vsub.f32 %v2417, %v3062
        %v3064 = vand.u32 %v3063, 4294901760
        %3065 = vmatprep.mubr.f32.mxu0 %v3064
        %v3066 = vand.u32 %v2416, 4294901760
        %v3067 = vsub.f32 %v2416, %v3066
        %v3068 = vand.u32 %v3067, 4294901760
        %3069 = vmatmul.mubr.f32.gmra.mrb[0].mxu0 %v3068
        %v3070 = vpop.f32.mrb[0].mxu0
        %v3071 = vadd.f32 %v2954, %v3070
        %v3072 = vpop.f32.mrb[0].mxu0
        %v3073 = vand.u32 %v2419, 4294901760
        %v3074 = vsub.f32 %v2419, %v3073
        %v3075 = vand.u32 %v3074, 4294901760
        %3076 = vmatprep.mubr.f32.mxu0 %v3075
        %v3077 = vand.u32 %v2418, 4294901760
        %v3078 = vsub.f32 %v2418, %v3077
        %v3079 = vand.u32 %v3078, 4294901760
        %3080 = vmatmul.mubr.f32.gmra.mrb[0].mxu0 %v3079
        %v3081 = vpop.f32.mrb[0].mxu0
        %v3082 = vadd.f32 %v2963, %v3081
        %v3083 = vpop.f32.mrb[0].mxu0
        %3084 = vdwg.mxu0
        %3085 = vmatprep.subr.mxu0 0.0
        %v3086 = vand.u32 %v2421, 4294901760
        %v3087 = vsub.f32 %v2421, %v3086
        %v3088 = vand.u32 %v3087, 4294901760
        %3089 = vmatpush1.msra.mxu0 %v3088
        %3090 = vmatprep.subr.mxu0 0.0
        %v3091 = vand.u32 %v2422, 4294901760
        %v3092 = vsub.f32 %v2422, %v3091
        %v3093 = vand.u32 %v3092, 4294901760
        %3094 = vmatpush1.msra.mxu0 %v3093
        %3095 = vmatprep.subr.mxu0 0.0
        %v3096 = vand.u32 %v2423, 4294901760
        %v3097 = vsub.f32 %v2423, %v3096
        %v3098 = vand.u32 %v3097, 4294901760
        %3099 = vmatpush1.msra.mxu0 %v3098
        %3100 = vmatprep.subr.mxu0 0.0
        %v3101 = vand.u32 %v2424, 4294901760
        %v3102 = vsub.f32 %v2424, %v3101
        %v3103 = vand.u32 %v3102, 4294901760
        %3104 = vmatpush1.msra.mxu0 %v3103
        %3105 = vmatprep.subr.mxu0 0.0
        %v3106 = vand.u32 %v2425, 4294901760
        %v3107 = vsub.f32 %v2425, %v3106
        %v3108 = vand.u32 %v3107, 4294901760
        %3109 = vmatpush1.msra.mxu0 %v3108
        %3110 = vmatprep.subr.mxu0 0.0
        %v3111 = vand.u32 %v2426, 4294901760
        %v3112 = vsub.f32 %v2426, %v3111
        %v3113 = vand.u32 %v3112, 4294901760
        %3114 = vmatpush1.msra.mxu0 %v3113
        %3115 = vmatprep.subr.mxu0 0.0
        %v3116 = vand.u32 %v2427, 4294901760
        %v3117 = vsub.f32 %v2427, %v3116
        %v3118 = vand.u32 %v3117, 4294901760
        %3119 = vmatpush1.msra.mxu0 %v3118
        %3120 = vmatprep.subr.mxu0 0.0
        %v3121 = vand.u32 %v2428, 4294901760
        %v3122 = vsub.f32 %v2428, %v3121
        %v3123 = vand.u32 %v3122, 4294901760
        %3124 = vmatpush1.msra.mxu0 %v3123
        %3125 = vmatprep.subr.mxu0 0.0
        %v3126 = vand.u32 %v2429, 4294901760
        %v3127 = vsub.f32 %v2429, %v3126
        %v3128 = vand.u32 %v3127, 4294901760
        %3129 = vmatpush1.msra.mxu0 %v3128
        %3130 = vmatprep.subr.mxu0 0.0
        %v3131 = vand.u32 %v2430, 4294901760
        %v3132 = vsub.f32 %v2430, %v3131
        %v3133 = vand.u32 %v3132, 4294901760
        %3134 = vmatpush1.msra.mxu0 %v3133
        %3135 = vmatprep.subr.mxu0 0.0
        %v3136 = vand.u32 %v2431, 4294901760
        %v3137 = vsub.f32 %v2431, %v3136
        %v3138 = vand.u32 %v3137, 4294901760
        %3139 = vmatpush1.msra.mxu0 %v3138
        %3140 = vmatprep.subr.mxu0 0.0
        %v3141 = vand.u32 %v2432, 4294901760
        %v3142 = vsub.f32 %v2432, %v3141
        %v3143 = vand.u32 %v3142, 4294901760
        %3144 = vmatpush1.msra.mxu0 %v3143
        %3145 = vmatprep.subr.mxu0 0.0
        %v3146 = vand.u32 %v2433, 4294901760
        %v3147 = vsub.f32 %v2433, %v3146
        %v3148 = vand.u32 %v3147, 4294901760
        %3149 = vmatpush1.msra.mxu0 %v3148
        %3150 = vmatprep.subr.mxu0 0.0
        %v3151 = vand.u32 %v2434, 4294901760
        %v3152 = vsub.f32 %v2434, %v3151
        %v3153 = vand.u32 %v3152, 4294901760
        %3154 = vmatpush1.msra.mxu0 %v3153
        %3155 = vmatprep.subr.mxu0 0.0
        %v3156 = vand.u32 %v2435, 4294901760
        %v3157 = vsub.f32 %v2435, %v3156
        %v3158 = vand.u32 %v3157, 4294901760
        %3159 = vmatpush1.msra.mxu0 %v3158
        %3160 = vmatprep.subr.mxu0 0.0
        %v3161 = vand.u32 %v2436, 4294901760
        %v3162 = vsub.f32 %v2436, %v3161
        %v3163 = vand.u32 %v3162, 4294901760
        %3164 = vmatpush1.msra.mxu0 %v3163
        %3165 = vmatprep.subr.mxu0 0.0
        %v3166 = vand.u32 %v2437, 4294901760
        %v3167 = vsub.f32 %v2437, %v3166
        %v3168 = vand.u32 %v3167, 4294901760
        %3169 = vmatpush1.msra.mxu0 %v3168
        %3170 = vmatprep.subr.mxu0 0.0
        %v3171 = vand.u32 %v2438, 4294901760
        %v3172 = vsub.f32 %v2438, %v3171
        %v3173 = vand.u32 %v3172, 4294901760
        %3174 = vmatpush1.msra.mxu0 %v3173
        %3175 = vmatprep.subr.mxu0 0.0
        %v3176 = vand.u32 %v2439, 4294901760
        %v3177 = vsub.f32 %v2439, %v3176
        %v3178 = vand.u32 %v3177, 4294901760
        %3179 = vmatpush1.msra.mxu0 %v3178
        %3180 = vmatprep.subr.mxu0 0.0
        %v3181 = vand.u32 %v2440, 4294901760
        %v3182 = vsub.f32 %v2440, %v3181
        %v3183 = vand.u32 %v3182, 4294901760
        %3184 = vmatpush1.msra.mxu0 %v3183
        %3185 = vmatprep.subr.mxu0 0.0
        %v3186 = vand.u32 %v2441, 4294901760
        %v3187 = vsub.f32 %v2441, %v3186
        %v3188 = vand.u32 %v3187, 4294901760
        %3189 = vmatpush1.msra.mxu0 %v3188
        %3190 = vmatprep.subr.mxu0 0.0
        %v3191 = vand.u32 %v2442, 4294901760
        %v3192 = vsub.f32 %v2442, %v3191
        %v3193 = vand.u32 %v3192, 4294901760
        %3194 = vmatpush1.msra.mxu0 %v3193
        %3195 = vmatprep.subr.mxu0 0.0
        %v3196 = vand.u32 %v2443, 4294901760
        %v3197 = vsub.f32 %v2443, %v3196
        %v3198 = vand.u32 %v3197, 4294901760
        %3199 = vmatpush1.msra.mxu0 %v3198
        %3200 = vmatprep.subr.mxu0 0.0
        %v3201 = vand.u32 %v2444, 4294901760
        %v3202 = vsub.f32 %v2444, %v3201
        %v3203 = vand.u32 %v3202, 4294901760
        %3204 = vmatpush1.msra.mxu0 %v3203
        %3205 = vmatprep.subr.mxu0 0.0
        %v3206 = vand.u32 %v2445, 4294901760
        %v3207 = vsub.f32 %v2445, %v3206
        %v3208 = vand.u32 %v3207, 4294901760
        %3209 = vmatpush1.msra.mxu0 %v3208
        %3210 = vmatprep.subr.mxu0 0.0
        %v3211 = vand.u32 %v2446, 4294901760
        %v3212 = vsub.f32 %v2446, %v3211
        %v3213 = vand.u32 %v3212, 4294901760
        %3214 = vmatpush1.msra.mxu0 %v3213
        %3215 = vmatprep.subr.mxu0 0.0
        %v3216 = vand.u32 %v2447, 4294901760
        %v3217 = vsub.f32 %v2447, %v3216
        %v3218 = vand.u32 %v3217, 4294901760
        %3219 = vmatpush1.msra.mxu0 %v3218
        %3220 = vmatprep.subr.mxu0 0.0
        %v3221 = vand.u32 %v2448, 4294901760
        %v3222 = vsub.f32 %v2448, %v3221
        %v3223 = vand.u32 %v3222, 4294901760
        %3224 = vmatpush1.msra.mxu0 %v3223
        %3225 = vmatprep.subr.mxu0 0.0
        %v3226 = vand.u32 %v2449, 4294901760
        %v3227 = vsub.f32 %v2449, %v3226
        %v3228 = vand.u32 %v3227, 4294901760
        %3229 = vmatpush1.msra.mxu0 %v3228
        %3230 = vmatprep.subr.mxu0 0.0
        %v3231 = vand.u32 %v2450, 4294901760
        %v3232 = vsub.f32 %v2450, %v3231
        %v3233 = vand.u32 %v3232, 4294901760
        %3234 = vmatpush1.msra.mxu0 %v3233
        %3235 = vmatprep.subr.mxu0 0.0
        %v3236 = vand.u32 %v2451, 4294901760
        %v3237 = vsub.f32 %v2451, %v3236
        %v3238 = vand.u32 %v3237, 4294901760
        %3239 = vmatpush1.msra.mxu0 %v3238
        %3240 = vmatprep.subr.mxu0 0.0
        %v3241 = vand.u32 %v2452, 4294901760
        %v3242 = vsub.f32 %v2452, %v3241
        %v3243 = vand.u32 %v3242, 4294901760
        %3244 = vmatpush1.msra.mxu0 %v3243
        %v3245 = vand.u32 %v2417, 4294901760
        %3246 = vmatprep.mubr.f32.mxu0 %v3245
        %v3247 = vand.u32 %v2416, 4294901760
        %3248 = vmatmul.mubr.f32.gmra.mrb[0].mxu0 %v3247
        %v3249 = vpop.f32.mrb[0].mxu0
        %v3250 = vadd.f32 %v3071, %v3249
        %v3251 = vpop.f32.mrb[0].mxu0
        %v3252 = vand.u32 %v2419, 4294901760
        %3253 = vmatprep.mubr.f32.mxu0 %v3252
        %v3254 = vand.u32 %v2418, 4294901760
        %3255 = vmatmul.mubr.f32.gmra.mrb[0].mxu0 %v3254
        %v3256 = vpop.f32.mrb[0].mxu0
        %v3257 = vadd.f32 %v3082, %v3256
        %v3258 = vpop.f32.mrb[0].mxu0
        %3259 = vdwg.mxu0
        %3260 = vmatprep.subr.mxu0 0.0
        %v3261 = vand.u32 %v2421, 4294901760
        %3262 = vmatpush1.msra.mxu0 %v3261
        %3263 = vmatprep.subr.mxu0 0.0
        %v3264 = vand.u32 %v2422, 4294901760
        %3265 = vmatpush1.msra.mxu0 %v3264
        %3266 = vmatprep.subr.mxu0 0.0
        %v3267 = vand.u32 %v2423, 4294901760
        %3268 = vmatpush1.msra.mxu0 %v3267
        %3269 = vmatprep.subr.mxu0 0.0
        %v3270 = vand.u32 %v2424, 4294901760
        %3271 = vmatpush1.msra.mxu0 %v3270
        %3272 = vmatprep.subr.mxu0 0.0
        %v3273 = vand.u32 %v2425, 4294901760
        %3274 = vmatpush1.msra.mxu0 %v3273
        %3275 = vmatprep.subr.mxu0 0.0
        %v3276 = vand.u32 %v2426, 4294901760
        %3277 = vmatpush1.msra.mxu0 %v3276
        %3278 = vmatprep.subr.mxu0 0.0
        %v3279 = vand.u32 %v2427, 4294901760
        %3280 = vmatpush1.msra.mxu0 %v3279
        %3281 = vmatprep.subr.mxu0 0.0
        %v3282 = vand.u32 %v2428, 4294901760
        %3283 = vmatpush1.msra.mxu0 %v3282
        %3284 = vmatprep.subr.mxu0 0.0
        %v3285 = vand.u32 %v2429, 4294901760
        %3286 = vmatpush1.msra.mxu0 %v3285
        %3287 = vmatprep.subr.mxu0 0.0
        %v3288 = vand.u32 %v2430, 4294901760
        %3289 = vmatpush1.msra.mxu0 %v3288
        %3290 = vmatprep.subr.mxu0 0.0
        %v3291 = vand.u32 %v2431, 4294901760
        %3292 = vmatpush1.msra.mxu0 %v3291
        %3293 = vmatprep.subr.mxu0 0.0
        %v3294 = vand.u32 %v2432, 4294901760
        %3295 = vmatpush1.msra.mxu0 %v3294
        %3296 = vmatprep.subr.mxu0 0.0
        %v3297 = vand.u32 %v2433, 4294901760
        %3298 = vmatpush1.msra.mxu0 %v3297
        %3299 = vmatprep.subr.mxu0 0.0
        %v3300 = vand.u32 %v2434, 4294901760
        %3301 = vmatpush1.msra.mxu0 %v3300
        %3302 = vmatprep.subr.mxu0 0.0
        %v3303 = vand.u32 %v2435, 4294901760
        %3304 = vmatpush1.msra.mxu0 %v3303
        %3305 = vmatprep.subr.mxu0 0.0
        %v3306 = vand.u32 %v2436, 4294901760
        %3307 = vmatpush1.msra.mxu0 %v3306
        %3308 = vmatprep.subr.mxu0 0.0
        %v3309 = vand.u32 %v2437, 4294901760
        %3310 = vmatpush1.msra.mxu0 %v3309
        %3311 = vmatprep.subr.mxu0 0.0
        %v3312 = vand.u32 %v2438, 4294901760
        %3313 = vmatpush1.msra.mxu0 %v3312
        %3314 = vmatprep.subr.mxu0 0.0
        %v3315 = vand.u32 %v2439, 4294901760
        %3316 = vmatpush1.msra.mxu0 %v3315
        %3317 = vmatprep.subr.mxu0 0.0
        %v3318 = vand.u32 %v2440, 4294901760
        %3319 = vmatpush1.msra.mxu0 %v3318
        %3320 = vmatprep.subr.mxu0 0.0
        %v3321 = vand.u32 %v2441, 4294901760
        %3322 = vmatpush1.msra.mxu0 %v3321
        %3323 = vmatprep.subr.mxu0 0.0
        %v3324 = vand.u32 %v2442, 4294901760
        %3325 = vmatpush1.msra.mxu0 %v3324
        %3326 = vmatprep.subr.mxu0 0.0
        %v3327 = vand.u32 %v2443, 4294901760
        %3328 = vmatpush1.msra.mxu0 %v3327
        %3329 = vmatprep.subr.mxu0 0.0
        %v3330 = vand.u32 %v2444, 4294901760
        %3331 = vmatpush1.msra.mxu0 %v3330
        %3332 = vmatprep.subr.mxu0 0.0
        %v3333 = vand.u32 %v2445, 4294901760
        %3334 = vmatpush1.msra.mxu0 %v3333
        %3335 = vmatprep.subr.mxu0 0.0
        %v3336 = vand.u32 %v2446, 4294901760
        %3337 = vmatpush1.msra.mxu0 %v3336
        %3338 = vmatprep.subr.mxu0 0.0
        %v3339 = vand.u32 %v2447, 4294901760
        %3340 = vmatpush1.msra.mxu0 %v3339
        %3341 = vmatprep.subr.mxu0 0.0
        %v3342 = vand.u32 %v2448, 4294901760
        %3343 = vmatpush1.msra.mxu0 %v3342
        %3344 = vmatprep.subr.mxu0 0.0
        %v3345 = vand.u32 %v2449, 4294901760
        %3346 = vmatpush1.msra.mxu0 %v3345
        %3347 = vmatprep.subr.mxu0 0.0
        %v3348 = vand.u32 %v2450, 4294901760
        %3349 = vmatpush1.msra.mxu0 %v3348
        %3350 = vmatprep.subr.mxu0 0.0
        %v3351 = vand.u32 %v2451, 4294901760
        %3352 = vmatpush1.msra.mxu0 %v3351
        %3353 = vmatprep.subr.mxu0 0.0
        %v3354 = vand.u32 %v2452, 4294901760
        %3355 = vmatpush1.msra.mxu0 %v3354
        %v3356 = vand.u32 %v2417, 4294901760
        %3357 = vmatprep.mubr.f32.mxu0 %v3356
        %v3358 = vand.u32 %v2416, 4294901760
        %3359 = vmatmul.mubr.f32.gmra.mrb[0].mxu0 %v3358
        %v3360 = vpop.f32.mrb[0].mxu0
        %v3361 = vadd.f32 %v3250, %v3360
        %v3362 = vpop.f32.mrb[0].mxu0
        %v3363 = vand.u32 %v2419, 4294901760
        %3364 = vmatprep.mubr.f32.mxu0 %v3363
        %v3365 = vand.u32 %v2418, 4294901760
        %3366 = vmatmul.mubr.f32.gmra.mrb[0].mxu0 %v3365
        %v3367 = vpop.f32.mrb[0].mxu0
        %v3368 = vadd.f32 %v3257, %v3367
        %v3369 = vpop.f32.mrb[0].mxu0
        %3370 = vdwg.mxu0
        %v3371 = vld [vmem:[#allocation3] sm:$0xff]
        %v3372 = vld [vmem:[#allocation3 + $0x8] sm:$0xff]
        %v3373 = vadd.f32 %v3371, %v3361
        %v3374 = vadd.f32 %v3372, %v3368
        %3375 = vst.msk [vmem:[#allocation3] sm:$0xff] %vm1380, %v3373
        %3376 = vst.msk [vmem:[#allocation3 + $0x8] sm:$0xff] %vm1380, %v3374
        %v3377 = vld [vmem:[#allocation3] sm:$0xff]
        %v3378 = vld [vmem:[#allocation3 + $0x8] sm:$0xff]
        %3379 = vst.msk [vmem:[%s307] sm:$0xff] %vm1380, %v3377
        %3380 = vst.msk [vmem:[%s307 + $0x8] sm:$0xff] %vm1380, %v3378
        %s3381 = sand.u32 %s161, 1
        %s3382 = scalar_lea.sflag [#allocation5], %s3381
        %s3383 = sand.u32 %s161, 1
        %s3384 = smul.addr %s3383, 16
        %s3385 = scalar_lea.vmem [#allocation4], %s3384
        // Predicated region
        $region37: #{tpu_custom_call.1} parent=35 // pred_check
          %p3386 = pneg %p171
        $region38: #{tpu_custom_call.1} parent=35 // pred_check_branch
          %3388 = sbr.rel (%p3386) target = $region40
        $region39: #{tpu_custom_call.1} parent=35 // pred_region
          %s3389 = smul.u32 2, %s23
          %s3391 = ssub.s32 256, 256
          %3392 = vsyncadd %s3382, %s3391
          %s3393 = smul.addr %s22, 8
          %s3394 = sadd.s32 %s3389, %s3393
          %s3395 = smul.addr %s3394, 128
          %s3396 = scalar_lea.hbm %s4, %s3395
          %s3397 = sshll.u32 %s3385, 4
          %s3398 = int_to_ptr.vmem [resolvable:$true] %s3397
          %3403 = dma.vmem_to_hbm [thread:$0]  %s3398, 256, %s3396, %s3382, 128, 128, 8
        $region40: #{tpu_custom_call.1} parent=35 // pred_fallthru
          _
      $region36: #{tpu_custom_call.1} parent=5 // pred_fallthru
        _
      %p3404 = scmp.le.s32.totalorder 2, %s13
      // Predicated region
      $region41: #{tpu_custom_call.1} parent=5 // pred_check
        %p3405 = pneg %p3404
      $region42: #{tpu_custom_call.1} parent=5 // pred_check_branch
        %3407 = sbr.rel (%p3405) target = $region44
      $region43: #{tpu_custom_call.1} parent=5 // pred_region
        %s3408 = ssub.s32 %s13, 2
        // Predicated region
        $region45: #{tpu_custom_call.1} parent=43 // pred_check
          %p3409 = pneg %p177
        $region46: #{tpu_custom_call.1} parent=43 // pred_check_branch
          %3411 = sbr.rel (%p3409) target = $region48
        $region47: #{tpu_custom_call.1} parent=43 // pred_region
          %s3412 = sand.u32 %s162, 1
          %s3413 = scalar_lea.sflag [#allocation5], %s3412
          %s3414 = sand.u32 %s162, 1
          %s3415 = smul.addr %s3414, 16
          %s3416 = scalar_lea.vmem [#allocation4], %s3415
          %3417 = dma.done %s3413, 256
        $region48: #{tpu_custom_call.1} parent=43 // pred_fallthru
          _
      $region44: #{tpu_custom_call.1} parent=5 // pred_fallthru
        _
    $region6: #{tpu_custom_call.1} parent=1 // loop_footer
      %s17 = sadd.s32 1, %s13
    $region7: #{tpu_custom_call.1} parent=1 // loop_footer_branch
      %12 = sbr.rel target = $region3
    $region8: #{tpu_custom_call.1} parent=1 // loop_exit
      _
    %3418 = vsyncpa [#allocation5], 1
    %s3419 = scalar_lea.sflag [#allocation5], 1
    %3420 = vsyncpa %s3419, 1

</llo_original>
